<compile_context>
chip_gen: v6e
topology: v6e:2x2x1
jax: 0.10.0
libtpu: 0.0.40
codegen_flags: <defaults>
</compile_context>

<pallas_src>
import jax
import jax.numpy as jnp
import numpy as np
from jax.experimental import pallas as pl
from jax.experimental.pallas import tpu as pltpu


def _pe_freqs(pe_dim):
    """2**linspace(0, 8, pe_dim//2) computed in f32 (matches the torch module)."""
    ph = pe_dim // 2
    return np.exp2(np.linspace(0.0, 8.0, ph, dtype=np.float32)).astype(np.float32)


def make_kernel(n_mid, freqs, n_chunks, chunk, compute_dtype):
    """Fused PE + block-diagonal MLP kernel.

    Ref order:
      x_ref     : (1, G*3, tile_n)        G samples' coords stacked on sublanes
      w0_ref    : (1, G*H, 2*ph*G*3)      block-diag layer-0 weight (cols permuted), compute_dtype
      b0_ref    : (1, G*H, 1)             layer-0 bias column (f32)
      [wmid_ref : (1, n_mid, G*H, G*H)    stacked block-diag hidden weights, compute_dtype
       bmid_ref : (1, n_mid, G*H, 1)      stacked hidden biases (f32)]          (iff n_mid > 0)
      wlast_ref : (1, G*out, G*H)         block-diag output weight, compute_dtype
      blast_ref : (1, G*out, 1)           output bias (f32)
      o_ref     : (1, G*out, tile_n)      lane-dense output tile
    """
    ph = len(freqs)

    def kernel(x_ref, w0_ref, b0_ref, *rest):
        if n_mid > 0:
            wmid_ref, bmid_ref, wlast_ref, blast_ref, o_ref = rest
        else:
            wlast_ref, blast_ref, o_ref = rest

        w0 = w0_ref[0]
        b0 = b0_ref[0]
        wl = wlast_ref[0]
        bl = blast_ref[0]
        x_full = x_ref[0]                                    # (G*3, tile_n)

        outs = []
        # Two independent lane chunks -> two independent matmul chains that the
        # scheduler can interleave (hides MXU/EUP latency of the serial layer chain).
        for c in range(n_chunks):
            xs = x_full[:, c * chunk:(c + 1) * chunk].astype(jnp.float32)

            # Positional encoding on the VPU/EUP (no K=3 MXU matmul, no E matrix input).
            # Feature rows ordered (trig, freq) major / (sample, coord) minor — this
            # matches the column permutation of w0 built in the wrapper.
            cos_p, sin_p = [], []
            for j in range(ph):
                xw = xs * freqs[j]                           # freqs are baked-in constants
                cos_p.append(jnp.cos(xw))
                sin_p.append(jnp.sin(xw))
            feat = jnp.concatenate(cos_p + sin_p, axis=0)    # (2*ph*G*3, chunk) f32

            h = jnp.dot(w0, feat.astype(compute_dtype),
                        preferred_element_type=jnp.float32) + b0
            h = jnp.maximum(h, 0.0)
            for i in range(n_mid):
                h = jnp.dot(wmid_ref[0, i], h.astype(compute_dtype),
                            preferred_element_type=jnp.float32) + bmid_ref[0, i]
                h = jnp.maximum(h, 0.0)
            y = jnp.dot(wl, h.astype(compute_dtype),
                        preferred_element_type=jnp.float32) + bl
            outs.append(y)

        out = outs[0] if n_chunks == 1 else jnp.concatenate(outs, axis=1)
        o_ref[0] = out.astype(o_ref.dtype)                   # single unmasked lane-dense store

    return kernel


def _default_group(B, hidden_dim):
    """Batch-packing factor G: fill the MXU (128 on v2-v5, 256 on v6e/v7x) with H-wide blocks."""
    mxu = 256
    try:
        kind = jax.devices()[0].device_kind.lower()
        if any(v in kind for v in ("v2", "v3", "v4", "v5")):
            mxu = 128
    except Exception:
        pass
    target = max(1, mxu // max(hidden_dim, 1))
    g = 1
    for cand in range(1, min(B, target) + 1):
        if B % cand == 0:
            g = cand                                         # largest divisor of B <= target
    return g


def inr_nerf_forward(x, wbs, pe_dim=8, tile_n=1024, group_size=None,
                     matmul_dtype=jnp.bfloat16, interleave=2):
    """x: (B, *query_shape, 3); wbs: list of per-sample (B, D_in+1, D_out) weight+bias."""
    B = x.shape[0]
    query_shape = x.shape[1:-1]
    x3 = x.reshape(B, -1, 3)
    N = x3.shape[1]
    dtype = x.dtype

    num_layers = len(wbs)
    assert num_layers >= 2, "need at least layer 0 and the rgb_density layer"
    out_dim = wbs[-1].shape[-1]
    H = wbs[0].shape[-1]
    ph = pe_dim // 2
    n_mid = num_layers - 2
    freqs = tuple(float(v) for v in _pe_freqs(pe_dim))

    # ---- batch packing factor ----------------------------------------------------------
    G = group_size if group_size is not None else _default_group(B, H)
    assert B % G == 0
    Bg = B // G
    GH = G * H
    GO = G * out_dim
    F0 = 2 * ph * G * 3

    # ---- lane tile (multiple of 128); pad ragged N with zeros ---------------------------
    N_128 = ((N + 127) // 128) * 128
    tile_n = max(128, (min(tile_n, N_128) // 128) * 128)
    n_tiles = -(-N // tile_n)
    N_pad = n_tiles * tile_n
    n_chunks = interleave if (interleave > 1 and tile_n % (128 * interleave) == 0) else 1
    chunk = tile_n // n_chunks

    # ---- coordinates: (Bg, G*3, N_pad) — channels on sublanes, N on lanes ----------------
    xT = jnp.swapaxes(x3, 1, 2)
    if N_pad != N:
        xT = jnp.pad(xT, ((0, 0), (0, 0), (0, N_pad - N)))
    x_g = xT.reshape(Bg, G * 3, N_pad)

    # ---- restructure per-sample weights into block-diagonal, transposed form ------------
    eyeG = jnp.eye(G, dtype=jnp.float32)

    # Layer 0: module feature order is (trig, coord, freq); permute the transposed weight's
    # columns to (trig, freq, sample, coord) to match the kernel's in-VPU feature slab.
    W0 = wbs[0][:, :-1, :].astype(jnp.float32)               # (B, 2*3*ph, H)
    W0 = W0.reshape(B, 2, 3, ph, H)
    W0 = jnp.transpose(W0, (0, 4, 1, 3, 2))                  # (B, H, 2, ph, 3) = [o,t,j,c]
    W0 = W0.reshape(Bg, G, H, 2 * ph, 3)
    W0_blk = jnp.einsum("bgofc,gh->bgofhc", W0, eyeG)
    W0_blk = W0_blk.reshape(Bg, GH, F0).astype(matmul_dtype)
    b0_blk = wbs[0][:, -1, :].astype(jnp.float32).reshape(Bg, GH, 1)

    args = [x_g, W0_blk, b0_blk]
    in_specs = [
        pl.BlockSpec((1, G * 3, tile_n), lambda b, n: (b, 0, n)),
        pl.BlockSpec((1, GH, F0), lambda b, n: (b, 0, 0)),
        pl.BlockSpec((1, GH, 1), lambda b, n: (b, 0, 0)),
    ]

    def blockdiag(wb):
        Wt = jnp.swapaxes(wb[:, :-1, :], 1, 2).astype(jnp.float32)   # (B, D_out, H)
        d_out = Wt.shape[1]
        Wt = Wt.reshape(Bg, G, d_out, H)
        blk = jnp.einsum("bgoi,gh->bgohi", Wt, eyeG).reshape(Bg, G * d_out, GH)
        bias = wb[:, -1, :].astype(jnp.float32).reshape(Bg, G * d_out, 1)
        return blk, bias

    if n_mid > 0:
        mids = [blockdiag(wb) for wb in wbs[1:-1]]
        Wmid = jnp.stack([m[0] for m in mids], axis=1).astype(matmul_dtype)   # (Bg,n_mid,GH,GH)
        bmid = jnp.stack([m[1] for m in mids], axis=1)                        # (Bg,n_mid,GH,1)
        args += [Wmid, bmid]
        in_specs += [
            pl.BlockSpec((1, n_mid, GH, GH), lambda b, n: (b, 0, 0, 0)),
            pl.BlockSpec((1, n_mid, GH, 1), lambda b, n: (b, 0, 0, 0)),
        ]

    Wl_blk, bl_blk = blockdiag(wbs[-1])
    Wl_blk = Wl_blk.astype(matmul_dtype)
    args += [Wl_blk, bl_blk]
    in_specs += [
        pl.BlockSpec((1, GO, GH), lambda b, n: (b, 0, 0)),
        pl.BlockSpec((1, GO, 1), lambda b, n: (b, 0, 0)),
    ]

    out_spec = pl.BlockSpec((1, GO, tile_n), lambda b, n: (b, 0, n))

    # advisory cost estimate (counts the block-diag MACs actually pushed to the MXU)
    flops = 2 * Bg * N_pad * (GH * F0 + n_mid * GH * GH + GO * GH)
    transcendentals = Bg * N_pad * F0
    bytes_accessed = sum(int(a.size) * a.dtype.itemsize for a in args)
    bytes_accessed += Bg * GO * N_pad * jnp.dtype(dtype).itemsize

    out = pl.pallas_call(
        make_kernel(n_mid, freqs, n_chunks, chunk, matmul_dtype),
        out_shape=jax.ShapeDtypeStruct((Bg, GO, N_pad), dtype),
        grid_spec=pltpu.PrefetchScalarGridSpec(
            num_scalar_prefetch=0,
            # N-tile axis innermost so per-group weights stay VMEM-resident across N tiles;
            # both axes "parallel" for megacore / v7x dual-TC sharding (keep Bg*n_tiles >= 2
            # at real sizes so both TensorCores get work).
            grid=(Bg, n_tiles),
            in_specs=in_specs,
            out_specs=out_spec,
        ),
        compiler_params=pltpu.CompilerParams(
            dimension_semantics=("parallel", "parallel")),
        cost_estimate=pl.CostEstimate(
            flops=int(flops),
            transcendentals=int(transcendentals),
            bytes_accessed=int(bytes_accessed)),
    )(*args)

    out = out.reshape(Bg, G, out_dim, N_pad).reshape(B, out_dim, N_pad)[:, :, :N]
    out = jnp.swapaxes(out, 1, 2)                             # (B, N, out_dim)
    return out.reshape(B, *query_shape, out_dim)


def reference_forward(x, wbs, pe_dim=8):
    """Pure-JAX reference mirroring the PyTorch module (use_pe=True, no viewdirs)."""
    B = x.shape[0]
    query_shape = x.shape[1:-1]
    x3 = x.reshape(B, -1, 3)
    w = jnp.asarray(_pe_freqs(pe_dim))
    xw = (x3[..., None] * w).reshape(B, x3.shape[1], -1)
    h = jnp.concatenate([jnp.cos(xw), jnp.sin(xw)], axis=-1)
    for i, wb in enumerate(wbs):
        ones = jnp.ones(h.shape[:-1] + (1,), h.dtype)
        y = jnp.einsum("bnd,bde->bne", jnp.concatenate([h, ones], axis=-1), wb)
        h = jax.nn.relu(y) if i < len(wbs) - 1 else y
    return h.reshape(B, *query_shape, -1)


if __name__ == "__main__":
    # Small, forward-consistent shapes:
    #   batch=2, query_shape=(16,16) -> N=256 points, hidden=32, pe_dim=8, depth=6.
    B, Hq, Wq = 2, 16, 16
    hidden_dim = 32
    pe_dim = 8
    depth = 6

    key = jax.random.PRNGKey(0)
    kx, kw = jax.random.split(key)
    x = jax.random.uniform(kx, (B, Hq, Wq, 3), dtype=jnp.float32)

    # Per-sample params matching InrNerf.param_shapes (plus batch dim):
    #   wb0: (B, 3*pe_dim+1, hidden), wb1..wb4: (B, hidden+1, hidden),
    #   rgb_density_fc: (B, hidden+1, 4)
    dims = [3 * pe_dim] + [hidden_dim] * (depth - 1) + [4]
    wbs = []
    for i in range(len(dims) - 1):
        kw, sub = jax.random.split(kw)
        d0, d1 = dims[i], dims[i + 1]
        wbs.append(
            jax.random.normal(sub, (B, d0 + 1, d1), dtype=jnp.float32)
            * ((d0 + 1) ** -0.5)
        )

    ref = reference_forward(x, wbs, pe_dim=pe_dim)

    # 1) Exactness: f32 matmul path must match the reference tightly.
    out_f32 = jax.block_until_ready(
        inr_nerf_forward(x, wbs, pe_dim=pe_dim, matmul_dtype=jnp.float32))
    assert out_f32.shape == (B, Hq, Wq, 4), out_f32.shape
    assert jnp.allclose(out_f32, ref, atol=1e-4, rtol=1e-4), \
        float(jnp.max(jnp.abs(out_f32 - ref)))

    # 2) Default perf path: bf16 MXU operands, f32 accumulation (looser tolerance).
    out = jax.block_until_ready(inr_nerf_forward(x, wbs, pe_dim=pe_dim))
    assert out.shape == (B, Hq, Wq, 4), out.shape
    assert jnp.allclose(out, ref, atol=5e-2, rtol=5e-2), \
        float(jnp.max(jnp.abs(out - ref)))

    # 3) Ragged N (prod(query_shape) not a multiple of 128) exercises the lane-padding path.
    x2 = jax.random.uniform(jax.random.PRNGKey(3), (B, 5, 7, 3), dtype=jnp.float32)
    ref2 = reference_forward(x2, wbs, pe_dim=pe_dim)
    out2 = jax.block_until_ready(
        inr_nerf_forward(x2, wbs, pe_dim=pe_dim, matmul_dtype=jnp.float32))
    assert out2.shape == (B, 5, 7, 4), out2.shape
    assert jnp.allclose(out2, ref2, atol=1e-4, rtol=1e-4), \
        float(jnp.max(jnp.abs(out2 - ref2)))

    # TODO(synk): use_viewdirs=True branch (viewdirs normalize + density/rgb heads) not
    # implemented; module default is use_viewdirs=False.
    print("KERNEL_OK")
</pallas_src>

<mosaic_0001>
module attributes {stable_mosaic.version = 11 : i64} {
  func.func @kernel(%arg0: i32, %arg1: i32, %arg2: memref<1x6x256xf32, #tpu.memory_space<vmem>>, %arg3: memref<1x64x48xf32, #tpu.memory_space<vmem>>, %arg4: memref<1x64x1xf32, #tpu.memory_space<vmem>>, %arg5: memref<1x4x64x64xf32, #tpu.memory_space<vmem>>, %arg6: memref<1x4x64x1xf32, #tpu.memory_space<vmem>>, %arg7: memref<1x8x64xf32, #tpu.memory_space<vmem>>, %arg8: memref<1x8x1xf32, #tpu.memory_space<vmem>>, %arg9: memref<1x8x256xf32, #tpu.memory_space<vmem>>) attributes {dimension_semantics = [#tpu.dimension_semantics<parallel>, #tpu.dimension_semantics<parallel>], iteration_bounds = array<i64: 1, 1>, scalar_prefetch = 0 : i64, scratch_operands = 0 : i64, tpu.core_type = #tpu.core_type<tc>, window_params = [{transform_indices = @transform_0, window_bounds = array<i64: 1, 6, 256>}, {transform_indices = @transform_1, window_bounds = array<i64: 1, 64, 48>}, {transform_indices = @transform_2, window_bounds = array<i64: 1, 64, 1>}, {transform_indices = @transform_3, window_bounds = array<i64: 1, 4, 64, 64>}, {transform_indices = @transform_4, window_bounds = array<i64: 1, 4, 64, 1>}, {transform_indices = @transform_5, window_bounds = array<i64: 1, 8, 64>}, {transform_indices = @transform_6, window_bounds = array<i64: 1, 8, 1>}, {transform_indices = @transform_7, window_bounds = array<i64: 1, 8, 256>}]} {
    %c0 = arith.constant 0 : index
    %c0_0 = arith.constant 0 : index
    %c0_1 = arith.constant 0 : index
    %0 = vector.load %arg3[%c0, %c0_0, %c0_1] : memref<1x64x48xf32, #tpu.memory_space<vmem>>, vector<1x64x48xf32>
    %1 = vector.shape_cast %0 : vector<1x64x48xf32> to vector<64x48xf32>
    %c0_2 = arith.constant 0 : index
    %c0_3 = arith.constant 0 : index
    %c0_4 = arith.constant 0 : index
    %2 = vector.load %arg4[%c0_2, %c0_3, %c0_4] : memref<1x64x1xf32, #tpu.memory_space<vmem>>, vector<1x64x1xf32>
    %3 = vector.shape_cast %2 : vector<1x64x1xf32> to vector<64x1xf32>
    %c0_5 = arith.constant 0 : index
    %c0_6 = arith.constant 0 : index
    %c0_7 = arith.constant 0 : index
    %4 = vector.load %arg7[%c0_5, %c0_6, %c0_7] : memref<1x8x64xf32, #tpu.memory_space<vmem>>, vector<1x8x64xf32>
    %5 = vector.shape_cast %4 : vector<1x8x64xf32> to vector<8x64xf32>
    %c0_8 = arith.constant 0 : index
    %c0_9 = arith.constant 0 : index
    %c0_10 = arith.constant 0 : index
    %6 = vector.load %arg8[%c0_8, %c0_9, %c0_10] : memref<1x8x1xf32, #tpu.memory_space<vmem>>, vector<1x8x1xf32>
    %7 = vector.shape_cast %6 : vector<1x8x1xf32> to vector<8x1xf32>
    %c0_11 = arith.constant 0 : index
    %c0_12 = arith.constant 0 : index
    %c0_13 = arith.constant 0 : index
    %8 = vector.load %arg2[%c0_11, %c0_12, %c0_13] : memref<1x6x256xf32, #tpu.memory_space<vmem>>, vector<1x6x256xf32>
    %9 = vector.shape_cast %8 : vector<1x6x256xf32> to vector<6x256xf32>
    %10 = vector.extract_strided_slice %9 {offsets = [0, 0], sizes = [6, 128], strides = [1, 1]} : vector<6x256xf32> to vector<6x128xf32>
    %cst = arith.constant 1.000000e+00 : f32
    %11 = vector.broadcast %cst : f32 to vector<6x128xf32>
    %12 = arith.mulf %10, %11 : vector<6x128xf32>
    %13 = math.cos %12 : vector<6x128xf32>
    %14 = math.sin %12 : vector<6x128xf32>
    %cst_14 = arith.constant 6.3496046 : f32
    %15 = vector.broadcast %cst_14 : f32 to vector<6x128xf32>
    %16 = arith.mulf %10, %15 : vector<6x128xf32>
    %17 = math.cos %16 : vector<6x128xf32>
    %18 = math.sin %16 : vector<6x128xf32>
    %cst_15 = arith.constant 40.3174782 : f32
    %19 = vector.broadcast %cst_15 : f32 to vector<6x128xf32>
    %20 = arith.mulf %10, %19 : vector<6x128xf32>
    %21 = math.cos %20 : vector<6x128xf32>
    %22 = math.sin %20 : vector<6x128xf32>
    %cst_16 = arith.constant 2.560000e+02 : f32
    %23 = vector.broadcast %cst_16 : f32 to vector<6x128xf32>
    %24 = arith.mulf %10, %23 : vector<6x128xf32>
    %25 = math.cos %24 : vector<6x128xf32>
    %26 = math.sin %24 : vector<6x128xf32>
    %27 = tpu.concatenate %13, %17, %21, %25, %14, %18, %22, %26 in 0 : vector<6x128xf32>, vector<6x128xf32>, vector<6x128xf32>, vector<6x128xf32>, vector<6x128xf32>, vector<6x128xf32>, vector<6x128xf32>, vector<6x128xf32> -> vector<48x128xf32>
    %cst_17 = arith.constant dense<0.000000e+00> : vector<64x128xf32>
    %28 = tpu.matmul %1, %27, %cst_17 {dimension_numbers = #tpu.dot_dimension_numbers<[1], [0], [0], [1], [0, 0, 1, 1], [], []>} : vector<64x48xf32>, vector<48x128xf32>, vector<64x128xf32> -> vector<64x128xf32>
    %29 = vector.broadcast %3 : vector<64x1xf32> to vector<64x128xf32>
    %30 = arith.addf %28, %29 : vector<64x128xf32>
    %cst_18 = arith.constant 0.000000e+00 : f32
    %31 = vector.broadcast %cst_18 : f32 to vector<64x128xf32>
    %32 = arith.maximumf %30, %31 : vector<64x128xf32>
    %c0_19 = arith.constant 0 : index
    %c0_20 = arith.constant 0 : index
    %c0_21 = arith.constant 0 : index
    %c0_22 = arith.constant 0 : index
    %33 = vector.load %arg5[%c0_19, %c0_20, %c0_21, %c0_22] : memref<1x4x64x64xf32, #tpu.memory_space<vmem>>, vector<1x1x64x64xf32>
    %34 = vector.shape_cast %33 : vector<1x1x64x64xf32> to vector<64x64xf32>
    %cst_23 = arith.constant dense<0.000000e+00> : vector<64x128xf32>
    %35 = tpu.matmul %34, %32, %cst_23 {dimension_numbers = #tpu.dot_dimension_numbers<[1], [0], [0], [1], [0, 0, 1, 1], [], []>} : vector<64x64xf32>, vector<64x128xf32>, vector<64x128xf32> -> vector<64x128xf32>
    %c0_24 = arith.constant 0 : index
    %c0_25 = arith.constant 0 : index
    %c0_26 = arith.constant 0 : index
    %c0_27 = arith.constant 0 : index
    %36 = vector.load %arg6[%c0_24, %c0_25, %c0_26, %c0_27] : memref<1x4x64x1xf32, #tpu.memory_space<vmem>>, vector<1x1x64x1xf32>
    %37 = vector.shape_cast %36 : vector<1x1x64x1xf32> to vector<64x1xf32>
    %38 = vector.broadcast %37 : vector<64x1xf32> to vector<64x128xf32>
    %39 = arith.addf %35, %38 : vector<64x128xf32>
    %cst_28 = arith.constant 0.000000e+00 : f32
    %40 = vector.broadcast %cst_28 : f32 to vector<64x128xf32>
    %41 = arith.maximumf %39, %40 : vector<64x128xf32>
    %c0_29 = arith.constant 0 : index
    %c1 = arith.constant 1 : index
    %c0_30 = arith.constant 0 : index
    %c0_31 = arith.constant 0 : index
    %42 = vector.load %arg5[%c0_29, %c1, %c0_30, %c0_31] : memref<1x4x64x64xf32, #tpu.memory_space<vmem>>, vector<1x1x64x64xf32>
    %43 = vector.shape_cast %42 : vector<1x1x64x64xf32> to vector<64x64xf32>
    %cst_32 = arith.constant dense<0.000000e+00> : vector<64x128xf32>
    %44 = tpu.matmul %43, %41, %cst_32 {dimension_numbers = #tpu.dot_dimension_numbers<[1], [0], [0], [1], [0, 0, 1, 1], [], []>} : vector<64x64xf32>, vector<64x128xf32>, vector<64x128xf32> -> vector<64x128xf32>
    %c0_33 = arith.constant 0 : index
    %c1_34 = arith.constant 1 : index
    %c0_35 = arith.constant 0 : index
    %c0_36 = arith.constant 0 : index
    %45 = vector.load %arg6[%c0_33, %c1_34, %c0_35, %c0_36] : memref<1x4x64x1xf32, #tpu.memory_space<vmem>>, vector<1x1x64x1xf32>
    %46 = vector.shape_cast %45 : vector<1x1x64x1xf32> to vector<64x1xf32>
    %47 = vector.broadcast %46 : vector<64x1xf32> to vector<64x128xf32>
    %48 = arith.addf %44, %47 : vector<64x128xf32>
    %cst_37 = arith.constant 0.000000e+00 : f32
    %49 = vector.broadcast %cst_37 : f32 to vector<64x128xf32>
    %50 = arith.maximumf %48, %49 : vector<64x128xf32>
    %c0_38 = arith.constant 0 : index
    %c2 = arith.constant 2 : index
    %c0_39 = arith.constant 0 : index
    %c0_40 = arith.constant 0 : index
    %51 = vector.load %arg5[%c0_38, %c2, %c0_39, %c0_40] : memref<1x4x64x64xf32, #tpu.memory_space<vmem>>, vector<1x1x64x64xf32>
    %52 = vector.shape_cast %51 : vector<1x1x64x64xf32> to vector<64x64xf32>
    %cst_41 = arith.constant dense<0.000000e+00> : vector<64x128xf32>
    %53 = tpu.matmul %52, %50, %cst_41 {dimension_numbers = #tpu.dot_dimension_numbers<[1], [0], [0], [1], [0, 0, 1, 1], [], []>} : vector<64x64xf32>, vector<64x128xf32>, vector<64x128xf32> -> vector<64x128xf32>
    %c0_42 = arith.constant 0 : index
    %c2_43 = arith.constant 2 : index
    %c0_44 = arith.constant 0 : index
    %c0_45 = arith.constant 0 : index
    %54 = vector.load %arg6[%c0_42, %c2_43, %c0_44, %c0_45] : memref<1x4x64x1xf32, #tpu.memory_space<vmem>>, vector<1x1x64x1xf32>
    %55 = vector.shape_cast %54 : vector<1x1x64x1xf32> to vector<64x1xf32>
    %56 = vector.broadcast %55 : vector<64x1xf32> to vector<64x128xf32>
    %57 = arith.addf %53, %56 : vector<64x128xf32>
    %cst_46 = arith.constant 0.000000e+00 : f32
    %58 = vector.broadcast %cst_46 : f32 to vector<64x128xf32>
    %59 = arith.maximumf %57, %58 : vector<64x128xf32>
    %c0_47 = arith.constant 0 : index
    %c3 = arith.constant 3 : index
    %c0_48 = arith.constant 0 : index
    %c0_49 = arith.constant 0 : index
    %60 = vector.load %arg5[%c0_47, %c3, %c0_48, %c0_49] : memref<1x4x64x64xf32, #tpu.memory_space<vmem>>, vector<1x1x64x64xf32>
    %61 = vector.shape_cast %60 : vector<1x1x64x64xf32> to vector<64x64xf32>
    %cst_50 = arith.constant dense<0.000000e+00> : vector<64x128xf32>
    %62 = tpu.matmul %61, %59, %cst_50 {dimension_numbers = #tpu.dot_dimension_numbers<[1], [0], [0], [1], [0, 0, 1, 1], [], []>} : vector<64x64xf32>, vector<64x128xf32>, vector<64x128xf32> -> vector<64x128xf32>
    %c0_51 = arith.constant 0 : index
    %c3_52 = arith.constant 3 : index
    %c0_53 = arith.constant 0 : index
    %c0_54 = arith.constant 0 : index
    %63 = vector.load %arg6[%c0_51, %c3_52, %c0_53, %c0_54] : memref<1x4x64x1xf32, #tpu.memory_space<vmem>>, vector<1x1x64x1xf32>
    %64 = vector.shape_cast %63 : vector<1x1x64x1xf32> to vector<64x1xf32>
    %65 = vector.broadcast %64 : vector<64x1xf32> to vector<64x128xf32>
    %66 = arith.addf %62, %65 : vector<64x128xf32>
    %cst_55 = arith.constant 0.000000e+00 : f32
    %67 = vector.broadcast %cst_55 : f32 to vector<64x128xf32>
    %68 = arith.maximumf %66, %67 : vector<64x128xf32>
    %cst_56 = arith.constant dense<0.000000e+00> : vector<8x128xf32>
    %69 = tpu.matmul %5, %68, %cst_56 {dimension_numbers = #tpu.dot_dimension_numbers<[1], [0], [0], [1], [0, 0, 1, 1], [], []>} : vector<8x64xf32>, vector<64x128xf32>, vector<8x128xf32> -> vector<8x128xf32>
    %70 = vector.broadcast %7 : vector<8x1xf32> to vector<8x128xf32>
    %71 = arith.addf %69, %70 : vector<8x128xf32>
    %72 = vector.extract_strided_slice %9 {offsets = [0, 128], sizes = [6, 128], strides = [1, 1]} : vector<6x256xf32> to vector<6x128xf32>
    %cst_57 = arith.constant 1.000000e+00 : f32
    %73 = vector.broadcast %cst_57 : f32 to vector<6x128xf32>
    %74 = arith.mulf %72, %73 : vector<6x128xf32>
    %75 = math.cos %74 : vector<6x128xf32>
    %76 = math.sin %74 : vector<6x128xf32>
    %cst_58 = arith.constant 6.3496046 : f32
    %77 = vector.broadcast %cst_58 : f32 to vector<6x128xf32>
    %78 = arith.mulf %72, %77 : vector<6x128xf32>
    %79 = math.cos %78 : vector<6x128xf32>
    %80 = math.sin %78 : vector<6x128xf32>
    %cst_59 = arith.constant 40.3174782 : f32
    %81 = vector.broadcast %cst_59 : f32 to vector<6x128xf32>
    %82 = arith.mulf %72, %81 : vector<6x128xf32>
    %83 = math.cos %82 : vector<6x128xf32>
    %84 = math.sin %82 : vector<6x128xf32>
    %cst_60 = arith.constant 2.560000e+02 : f32
    %85 = vector.broadcast %cst_60 : f32 to vector<6x128xf32>
    %86 = arith.mulf %72, %85 : vector<6x128xf32>
    %87 = math.cos %86 : vector<6x128xf32>
    %88 = math.sin %86 : vector<6x128xf32>
    %89 = tpu.concatenate %75, %79, %83, %87, %76, %80, %84, %88 in 0 : vector<6x128xf32>, vector<6x128xf32>, vector<6x128xf32>, vector<6x128xf32>, vector<6x128xf32>, vector<6x128xf32>, vector<6x128xf32>, vector<6x128xf32> -> vector<48x128xf32>
    %cst_61 = arith.constant dense<0.000000e+00> : vector<64x128xf32>
    %90 = tpu.matmul %1, %89, %cst_61 {dimension_numbers = #tpu.dot_dimension_numbers<[1], [0], [0], [1], [0, 0, 1, 1], [], []>} : vector<64x48xf32>, vector<48x128xf32>, vector<64x128xf32> -> vector<64x128xf32>
    %91 = vector.broadcast %3 : vector<64x1xf32> to vector<64x128xf32>
    %92 = arith.addf %90, %91 : vector<64x128xf32>
    %cst_62 = arith.constant 0.000000e+00 : f32
    %93 = vector.broadcast %cst_62 : f32 to vector<64x128xf32>
    %94 = arith.maximumf %92, %93 : vector<64x128xf32>
    %c0_63 = arith.constant 0 : index
    %c0_64 = arith.constant 0 : index
    %c0_65 = arith.constant 0 : index
    %c0_66 = arith.constant 0 : index
    %95 = vector.load %arg5[%c0_63, %c0_64, %c0_65, %c0_66] : memref<1x4x64x64xf32, #tpu.memory_space<vmem>>, vector<1x1x64x64xf32>
    %96 = vector.shape_cast %95 : vector<1x1x64x64xf32> to vector<64x64xf32>
    %cst_67 = arith.constant dense<0.000000e+00> : vector<64x128xf32>
    %97 = tpu.matmul %96, %94, %cst_67 {dimension_numbers = #tpu.dot_dimension_numbers<[1], [0], [0], [1], [0, 0, 1, 1], [], []>} : vector<64x64xf32>, vector<64x128xf32>, vector<64x128xf32> -> vector<64x128xf32>
    %c0_68 = arith.constant 0 : index
    %c0_69 = arith.constant 0 : index
    %c0_70 = arith.constant 0 : index
    %c0_71 = arith.constant 0 : index
    %98 = vector.load %arg6[%c0_68, %c0_69, %c0_70, %c0_71] : memref<1x4x64x1xf32, #tpu.memory_space<vmem>>, vector<1x1x64x1xf32>
    %99 = vector.shape_cast %98 : vector<1x1x64x1xf32> to vector<64x1xf32>
    %100 = vector.broadcast %99 : vector<64x1xf32> to vector<64x128xf32>
    %101 = arith.addf %97, %100 : vector<64x128xf32>
    %cst_72 = arith.constant 0.000000e+00 : f32
    %102 = vector.broadcast %cst_72 : f32 to vector<64x128xf32>
    %103 = arith.maximumf %101, %102 : vector<64x128xf32>
    %c0_73 = arith.constant 0 : index
    %c1_74 = arith.constant 1 : index
    %c0_75 = arith.constant 0 : index
    %c0_76 = arith.constant 0 : index
    %104 = vector.load %arg5[%c0_73, %c1_74, %c0_75, %c0_76] : memref<1x4x64x64xf32, #tpu.memory_space<vmem>>, vector<1x1x64x64xf32>
    %105 = vector.shape_cast %104 : vector<1x1x64x64xf32> to vector<64x64xf32>
    %cst_77 = arith.constant dense<0.000000e+00> : vector<64x128xf32>
    %106 = tpu.matmul %105, %103, %cst_77 {dimension_numbers = #tpu.dot_dimension_numbers<[1], [0], [0], [1], [0, 0, 1, 1], [], []>} : vector<64x64xf32>, vector<64x128xf32>, vector<64x128xf32> -> vector<64x128xf32>
    %c0_78 = arith.constant 0 : index
    %c1_79 = arith.constant 1 : index
    %c0_80 = arith.constant 0 : index
    %c0_81 = arith.constant 0 : index
    %107 = vector.load %arg6[%c0_78, %c1_79, %c0_80, %c0_81] : memref<1x4x64x1xf32, #tpu.memory_space<vmem>>, vector<1x1x64x1xf32>
    %108 = vector.shape_cast %107 : vector<1x1x64x1xf32> to vector<64x1xf32>
    %109 = vector.broadcast %108 : vector<64x1xf32> to vector<64x128xf32>
    %110 = arith.addf %106, %109 : vector<64x128xf32>
    %cst_82 = arith.constant 0.000000e+00 : f32
    %111 = vector.broadcast %cst_82 : f32 to vector<64x128xf32>
    %112 = arith.maximumf %110, %111 : vector<64x128xf32>
    %c0_83 = arith.constant 0 : index
    %c2_84 = arith.constant 2 : index
    %c0_85 = arith.constant 0 : index
    %c0_86 = arith.constant 0 : index
    %113 = vector.load %arg5[%c0_83, %c2_84, %c0_85, %c0_86] : memref<1x4x64x64xf32, #tpu.memory_space<vmem>>, vector<1x1x64x64xf32>
    %114 = vector.shape_cast %113 : vector<1x1x64x64xf32> to vector<64x64xf32>
    %cst_87 = arith.constant dense<0.000000e+00> : vector<64x128xf32>
    %115 = tpu.matmul %114, %112, %cst_87 {dimension_numbers = #tpu.dot_dimension_numbers<[1], [0], [0], [1], [0, 0, 1, 1], [], []>} : vector<64x64xf32>, vector<64x128xf32>, vector<64x128xf32> -> vector<64x128xf32>
    %c0_88 = arith.constant 0 : index
    %c2_89 = arith.constant 2 : index
    %c0_90 = arith.constant 0 : index
    %c0_91 = arith.constant 0 : index
    %116 = vector.load %arg6[%c0_88, %c2_89, %c0_90, %c0_91] : memref<1x4x64x1xf32, #tpu.memory_space<vmem>>, vector<1x1x64x1xf32>
    %117 = vector.shape_cast %116 : vector<1x1x64x1xf32> to vector<64x1xf32>
    %118 = vector.broadcast %117 : vector<64x1xf32> to vector<64x128xf32>
    %119 = arith.addf %115, %118 : vector<64x128xf32>
    %cst_92 = arith.constant 0.000000e+00 : f32
    %120 = vector.broadcast %cst_92 : f32 to vector<64x128xf32>
    %121 = arith.maximumf %119, %120 : vector<64x128xf32>
    %c0_93 = arith.constant 0 : index
    %c3_94 = arith.constant 3 : index
    %c0_95 = arith.constant 0 : index
    %c0_96 = arith.constant 0 : index
    %122 = vector.load %arg5[%c0_93, %c3_94, %c0_95, %c0_96] : memref<1x4x64x64xf32, #tpu.memory_space<vmem>>, vector<1x1x64x64xf32>
    %123 = vector.shape_cast %122 : vector<1x1x64x64xf32> to vector<64x64xf32>
    %cst_97 = arith.constant dense<0.000000e+00> : vector<64x128xf32>
    %124 = tpu.matmul %123, %121, %cst_97 {dimension_numbers = #tpu.dot_dimension_numbers<[1], [0], [0], [1], [0, 0, 1, 1], [], []>} : vector<64x64xf32>, vector<64x128xf32>, vector<64x128xf32> -> vector<64x128xf32>
    %c0_98 = arith.constant 0 : index
    %c3_99 = arith.constant 3 : index
    %c0_100 = arith.constant 0 : index
    %c0_101 = arith.constant 0 : index
    %125 = vector.load %arg6[%c0_98, %c3_99, %c0_100, %c0_101] : memref<1x4x64x1xf32, #tpu.memory_space<vmem>>, vector<1x1x64x1xf32>
    %126 = vector.shape_cast %125 : vector<1x1x64x1xf32> to vector<64x1xf32>
    %127 = vector.broadcast %126 : vector<64x1xf32> to vector<64x128xf32>
    %128 = arith.addf %124, %127 : vector<64x128xf32>
    %cst_102 = arith.constant 0.000000e+00 : f32
    %129 = vector.broadcast %cst_102 : f32 to vector<64x128xf32>
    %130 = arith.maximumf %128, %129 : vector<64x128xf32>
    %cst_103 = arith.constant dense<0.000000e+00> : vector<8x128xf32>
    %131 = tpu.matmul %5, %130, %cst_103 {dimension_numbers = #tpu.dot_dimension_numbers<[1], [0], [0], [1], [0, 0, 1, 1], [], []>} : vector<8x64xf32>, vector<64x128xf32>, vector<8x128xf32> -> vector<8x128xf32>
    %132 = vector.broadcast %7 : vector<8x1xf32> to vector<8x128xf32>
    %133 = arith.addf %131, %132 : vector<8x128xf32>
    %134 = tpu.concatenate %71, %133 in 1 : vector<8x128xf32>, vector<8x128xf32> -> vector<8x256xf32>
    %c0_104 = arith.constant 0 : index
    %c0_105 = arith.constant 0 : index
    %c0_106 = arith.constant 0 : index
    %135 = vector.load %arg9[%c0_104, %c0_105, %c0_106] : memref<1x8x256xf32, #tpu.memory_space<vmem>>, vector<1x8x256xf32>
    %136 = vector.shape_cast %135 : vector<1x8x256xf32> to vector<8x256xf32>
    %137 = vector.shape_cast %134 : vector<8x256xf32> to vector<1x8x256xf32>
    tpu.vector_store %arg9[%c0_104, %c0_105, %c0_106], %137 {strides = array<i32>} : memref<1x8x256xf32, #tpu.memory_space<vmem>>, vector<1x8x256xf32>,
    return
  }
  func.func @transform_0(%arg0: i32, %arg1: i32) -> (i32, i32, i32) {
    %c0_i32 = arith.constant 0 : i32
    %c0_i32_0 = arith.constant 0 : i32
    return %arg0, %c0_i32, %arg1 : i32, i32, i32
  }
  func.func @transform_1(%arg0: i32, %arg1: i32) -> (i32, i32, i32) {
    %c0_i32 = arith.constant 0 : i32
    %c0_i32_0 = arith.constant 0 : i32
    %c0_i32_1 = arith.constant 0 : i32
    return %arg0, %c0_i32, %c0_i32_0 : i32, i32, i32
  }
  func.func @transform_2(%arg0: i32, %arg1: i32) -> (i32, i32, i32) {
    %c0_i32 = arith.constant 0 : i32
    %c0_i32_0 = arith.constant 0 : i32
    %c0_i32_1 = arith.constant 0 : i32
    return %arg0, %c0_i32, %c0_i32_0 : i32, i32, i32
  }
  func.func @transform_3(%arg0: i32, %arg1: i32) -> (i32, i32, i32, i32) {
    %c0_i32 = arith.constant 0 : i32
    %c0_i32_0 = arith.constant 0 : i32
    %c0_i32_1 = arith.constant 0 : i32
    %c0_i32_2 = arith.constant 0 : i32
    return %arg0, %c0_i32, %c0_i32_0, %c0_i32_1 : i32, i32, i32, i32
  }
  func.func @transform_4(%arg0: i32, %arg1: i32) -> (i32, i32, i32, i32) {
    %c0_i32 = arith.constant 0 : i32
    %c0_i32_0 = arith.constant 0 : i32
    %c0_i32_1 = arith.constant 0 : i32
    %c0_i32_2 = arith.constant 0 : i32
    return %arg0, %c0_i32, %c0_i32_0, %c0_i32_1 : i32, i32, i32, i32
  }
  func.func @transform_5(%arg0: i32, %arg1: i32) -> (i32, i32, i32) {
    %c0_i32 = arith.constant 0 : i32
    %c0_i32_0 = arith.constant 0 : i32
    %c0_i32_1 = arith.constant 0 : i32
    return %arg0, %c0_i32, %c0_i32_0 : i32, i32, i32
  }
  func.func @transform_6(%arg0: i32, %arg1: i32) -> (i32, i32, i32) {
    %c0_i32 = arith.constant 0 : i32
    %c0_i32_0 = arith.constant 0 : i32
    %c0_i32_1 = arith.constant 0 : i32
    return %arg0, %c0_i32, %c0_i32_0 : i32, i32, i32
  }
  func.func @transform_7(%arg0: i32, %arg1: i32) -> (i32, i32, i32) {
    %c0_i32 = arith.constant 0 : i32
    %c0_i32_0 = arith.constant 0 : i32
    return %arg0, %c0_i32, %arg1 : i32, i32, i32
  }
}

</mosaic_0001>

<llo_original>
// kernel: tpu_custom_call.1
$region0: #{tpu_custom_call.1}
  #allocation0 [shape = 'u32[]', space=smem, size = 0x4, offset = 0x4, fixed_abs, tag = 'smem constant byte address 0x4 - core index']
  #allocation1 [shape = 'u32[144,128]{1,0:T(1,128)}', space=vmem, size = 0x12000, scoped, tag = 'internal scratch']
  %s0 = inlined_call_operand.vmem [shape: f32[1,6,256], index: 0, kind: input, shape index: {}]
  %s1 = inlined_call_operand.vmem [shape: f32[1,64,48], index: 1, kind: input, shape index: {}]
  %s2 = inlined_call_operand.vmem [shape: f32[1,64,1], index: 2, kind: input, shape index: {}]
  %s3 = inlined_call_operand.vmem [shape: f32[1,4,64,64], index: 3, kind: input, shape index: {}]
  %s4 = inlined_call_operand.vmem [shape: f32[1,4,64,1], index: 4, kind: input, shape index: {}]
  %s5 = inlined_call_operand.vmem [shape: f32[1,8,64], index: 5, kind: input, shape index: {}]
  %s6 = inlined_call_operand.vmem [shape: f32[1,8,1], index: 6, kind: input, shape index: {}]
  %s7 = inlined_call_operand.hbm [shape: f32[1,8,256], index: 7, kind: output, shape index: {}]
  %s8 = sld [smem:[#allocation0]]
  $region38: #{tpu_custom_call.1} parent=0
    _
  %s10 = ssub.s32 1, %s8
  %s11 = scalar_select 0, %s10, %s8
  $region1: #{tpu_custom_call.1} parent=0
    #allocation2 [shape = 'u8[8192]{0}', space=vmem, size = 0x2000, scoped, tag = 'output window, operand 0, single buffered']
    #allocation3 [shape = 's32[1]{0}', space=sflag, size = 0x4, scoped, tag = 'scoped memory for tpu_custom_call.1']
    %12 = vsyncpa [#allocation3], 0
    // Predicated region
    $region2: #{tpu_custom_call.1} parent=1 // pred_check
      _
    $region3: #{tpu_custom_call.1} parent=1 // pred_check_branch
      %14 = sbr.rel (0) target = $region5
    $region4: #{tpu_custom_call.1} parent=1 // pred_region
      _
    $region5: #{tpu_custom_call.1} parent=1 // pred_fallthru
      _
    // Predicated region
    $region6: #{tpu_custom_call.1} parent=1 // pred_check
      _
    $region7: #{tpu_custom_call.1} parent=1 // pred_check_branch
      %16 = sbr.rel (0) target = $region9
    $region8: #{tpu_custom_call.1} parent=1 // pred_region
      _
    $region9: #{tpu_custom_call.1} parent=1 // pred_fallthru
      _
    // Predicated region
    $region10: #{tpu_custom_call.1} parent=1 // pred_check
      _
    $region11: #{tpu_custom_call.1} parent=1 // pred_check_branch
      %18 = sbr.rel (0) target = $region13
    $region12: #{tpu_custom_call.1} parent=1 // pred_region
      _
    $region13: #{tpu_custom_call.1} parent=1 // pred_fallthru
      _
    // Predicated region
    $region14: #{tpu_custom_call.1} parent=1 // pred_check
      _
    $region15: #{tpu_custom_call.1} parent=1 // pred_check_branch
      %20 = sbr.rel (0) target = $region17
    $region16: #{tpu_custom_call.1} parent=1 // pred_region
      _
    $region17: #{tpu_custom_call.1} parent=1 // pred_fallthru
      _
    // Predicated region
    $region18: #{tpu_custom_call.1} parent=1 // pred_check
      _
    $region19: #{tpu_custom_call.1} parent=1 // pred_check_branch
      %22 = sbr.rel (0) target = $region21
    $region20: #{tpu_custom_call.1} parent=1 // pred_region
      _
    $region21: #{tpu_custom_call.1} parent=1 // pred_fallthru
      _
    // Predicated region
    $region22: #{tpu_custom_call.1} parent=1 // pred_check
      _
    $region23: #{tpu_custom_call.1} parent=1 // pred_check_branch
      %24 = sbr.rel (0) target = $region25
    $region24: #{tpu_custom_call.1} parent=1 // pred_region
      _
    $region25: #{tpu_custom_call.1} parent=1 // pred_fallthru
      _
    // Predicated region
    $region26: #{tpu_custom_call.1} parent=1 // pred_check
      _
    $region27: #{tpu_custom_call.1} parent=1 // pred_check_branch
      %26 = sbr.rel (0) target = $region29
    $region28: #{tpu_custom_call.1} parent=1 // pred_region
      _
    $region29: #{tpu_custom_call.1} parent=1 // pred_fallthru
      _
    %v27 = vld [vmem:[%s1] sm:$0xff]
    %v28 = vld [vmem:[%s1 + $0x8] sm:$0xff]
    %v29 = vld [vmem:[%s1 + $0x10] sm:$0xff]
    %v30 = vld [vmem:[%s1 + $0x18] sm:$0xff]
    %v31 = vld [vmem:[%s1 + $0x20] sm:$0xff]
    %v32 = vld [vmem:[%s1 + $0x28] sm:$0xff]
    %v33 = vld [vmem:[%s1 + $0x30] sm:$0xff]
    %v34 = vld [vmem:[%s1 + $0x38] sm:$0xff]
    %v35 = vld [vmem:[%s2] sm:$0xff]
    %v36 = vld [vmem:[%s2 + $0x8] sm:$0xff]
    %v37 = vld [vmem:[%s2 + $0x10] sm:$0xff]
    %v38 = vld [vmem:[%s2 + $0x18] sm:$0xff]
    %v39 = vld [vmem:[%s2 + $0x20] sm:$0xff]
    %v40 = vld [vmem:[%s2 + $0x28] sm:$0xff]
    %v41 = vld [vmem:[%s2 + $0x30] sm:$0xff]
    %v42 = vld [vmem:[%s2 + $0x38] sm:$0xff]
    %v43 = vld [vmem:[%s5] sm:$0xff]
    %v44 = vld [vmem:[%s6] sm:$0xff]
    %v45 = vld [vmem:[%s0] sm:$0x3f]
    %v46 = vld [vmem:[%s0 + $0x8] sm:$0x3f]
    %v47 = vand.u32 2147483647, %v45
    %vm48 = vcmp.le.f32.partialorder %v47, 0.7853982
    %vm49 = vcmp.lt.s32.totalorder %v45, 0
    %v50 = vand.u32 %v45, 2139095040
    %v51 = vshrl.u32 %v50, 23
    %v52 = vsub.s32 %v51, 127
    %v53 = vand.u32 2147483647, %v45
    %v54 = vand.u32 %v53, 8388607
    %v55 = vor.u32 %v54, 8388608
    %v56 = vsub.s32 0, %v55
    %v57 = vadd.s32 %v52, 1
    %vm58 = vcmp.gt.s32.totalorder %v57, 0
    %v59 = vsel %vm58, %v57, 0
    %v60 = vshrl.u32 %v59, 5
    %v61 = vand.u32 %v59, 31
    %v62 = vsub.s32 32, %v61
    %v63 = vshrl.u32 683565275, %v62
    %v64 = vshll.u32 683565275, %v61
    %v65 = vshrl.u32 2475754826, %v62
    %v66 = vor.u32 %v64, %v65
    %v67 = vshll.u32 2475754826, %v61
    %v68 = vshrl.u32 2131351028, %v62
    %v69 = vor.u32 %v67, %v68
    %v70 = vshll.u32 2131351028, %v61
    %v71 = vshrl.u32 2102212464, %v62
    %v72 = vor.u32 %v70, %v71
    %v73 = vshll.u32 2102212464, %v61
    %v74 = vshrl.u32 920167782, %v62
    %v75 = vor.u32 %v73, %v74
    %v76 = vshll.u32 920167782, %v61
    %v77 = vshrl.u32 1326507024, %v62
    %v78 = vor.u32 %v76, %v77
    %vm79 = vcmp.lt.s32.totalorder %v60, 1
    %vm80 = vcmp.lt.s32.totalorder %v60, 2
    %vm81 = vcmp.lt.s32.totalorder %v60, 3
    %vm82 = vcmp.lt.s32.totalorder %v60, 4
    %v83 = vsel %vm79, %v63, %v66
    %v84 = vsel %vm82, %v72, 2102212464
    %v85 = vsel %vm81, %v69, %v84
    %v86 = vsel %vm80, %v83, %v85
    %v87 = vsel %vm79, %v66, %v69
    %v88 = vsel %vm82, %v75, 920167782
    %v89 = vsel %vm81, %v72, %v88
    %v90 = vsel %vm80, %v87, %v89
    %v91 = vsel %vm79, %v69, %v72
    %v92 = vsel %vm82, %v78, 1326507024
    %v93 = vsel %vm81, %v75, %v92
    %v94 = vsel %vm80, %v91, %v93
    %v95 = vshll.u32 %v55, 8
    %v96 = vmul.u32.u64.compose %v95, %v94
    %v97 = vextract.low.u32 %v96
    %v98 = vextract.high.u32 %v96
    %v99 = vmul.u32.u64.compose %v95, %v90
    %v100 = vextract.low.u32 %v99
    %v101 = vextract.high.u32 %v99
    %v102 = vmul.u32 %v95, %v86
    %v103 = vadd.s32 %v98, %v100
    %vm104 = vc.u32 %v98, %v100
    %v105 = vadd.s32 %v101, 1
    %v106 = vsel %vm104, %v105, %v101
    %v107 = vadd.s32 %v102, %v106
    %v108 = vadd.s32 %v107, 536870912
    %v109 = vshrl.u32 %v108, 30
    %v110 = vshll.u32 %v109, 30
    %v111 = vsub.s32 %v107, %v110
    %vm112 = vcmp.lt.s32.totalorder %v111, 0
    %v113 = vsub.s32 0, %v111
    %v114 = vsel %vm112, %v113, %v111
    %v115 = vclz %v114
    %v116 = vsub.s32 %v115, 2
    %vm117 = vcmp.gt.s32.totalorder 0, %v116
    %v118 = vsel %vm117, 0, %v116
    %v119 = vsub.s32 32, %v118
    %v120 = vshll.u32 %v111, %v118
    %v121 = vshrl.u32 %v103, %v119
    %v122 = vor.u32 %v120, %v121
    %v123 = vsub.s32 4294967266, %v118
    %v124 = vadd.s32 %v123, 127
    %v125 = vshll.u32 %v124, 23
    %v126 = vor.u32 4788187, %v125
    %v127 = vand.u32 2147483647, %v126
    %v129 = vcvt.s32.f32 %v122
    %v130 = vmul.f32 %v129, %v127
    %v131 = vxor.u32 %v130, 2147483648
    %v132 = vsel %vm49, %v131, %v130
    %v133 = vsub.s32 4, %v109
    %v134 = vsel %vm49, %v133, %v109
    %v135 = vsel %vm48, %v45, %v132
    %v136 = vsel %vm48, 0, %v134
    %v137 = vcosq.f32.pop %v135
    %v138 = vsinq.f32.pop %v135
    %vm139 = vweird.f32 %v45
    %v140 = vand.u32 %v136, 3
    %vm141 = vcmp.lt.s32.totalorder %v140, 2
    %vm142 = vcmp.eq.s32.totalorder %v140, 0
    %v143 = vxor.u32 %v138, 2147483648
    %v144 = vsel %vm142, %v137, %v143
    %vm145 = vcmp.eq.s32.totalorder %v140, 2
    %v146 = vxor.u32 %v137, 2147483648
    %v147 = vsel %vm145, %v146, %v138
    %v148 = vsel %vm141, %v144, %v147
    %v149 = vsel %vm139, nan, %v148
    %v150 = vand.u32 2147483647, %v45
    %vm151 = vcmp.le.f32.partialorder %v150, 0.7853982
    %vm152 = vcmp.lt.s32.totalorder %v45, 0
    %v153 = vand.u32 %v45, 2139095040
    %v154 = vshrl.u32 %v153, 23
    %v155 = vsub.s32 %v154, 127
    %v156 = vand.u32 2147483647, %v45
    %v157 = vand.u32 %v156, 8388607
    %v158 = vor.u32 %v157, 8388608
    %v159 = vsub.s32 0, %v158
    %v160 = vadd.s32 %v155, 1
    %vm161 = vcmp.gt.s32.totalorder %v160, 0
    %v162 = vsel %vm161, %v160, 0
    %v163 = vshrl.u32 %v162, 5
    %v164 = vand.u32 %v162, 31
    %v165 = vsub.s32 32, %v164
    %v166 = vshrl.u32 683565275, %v165
    %v167 = vshll.u32 683565275, %v164
    %v168 = vshrl.u32 2475754826, %v165
    %v169 = vor.u32 %v167, %v168
    %v170 = vshll.u32 2475754826, %v164
    %v171 = vshrl.u32 2131351028, %v165
    %v172 = vor.u32 %v170, %v171
    %v173 = vshll.u32 2131351028, %v164
    %v174 = vshrl.u32 2102212464, %v165
    %v175 = vor.u32 %v173, %v174
    %v176 = vshll.u32 2102212464, %v164
    %v177 = vshrl.u32 920167782, %v165
    %v178 = vor.u32 %v176, %v177
    %v179 = vshll.u32 920167782, %v164
    %v180 = vshrl.u32 1326507024, %v165
    %v181 = vor.u32 %v179, %v180
    %vm182 = vcmp.lt.s32.totalorder %v163, 1
    %vm183 = vcmp.lt.s32.totalorder %v163, 2
    %vm184 = vcmp.lt.s32.totalorder %v163, 3
    %vm185 = vcmp.lt.s32.totalorder %v163, 4
    %v186 = vsel %vm182, %v166, %v169
    %v187 = vsel %vm185, %v175, 2102212464
    %v188 = vsel %vm184, %v172, %v187
    %v189 = vsel %vm183, %v186, %v188
    %v190 = vsel %vm182, %v169, %v172
    %v191 = vsel %vm185, %v178, 920167782
    %v192 = vsel %vm184, %v175, %v191
    %v193 = vsel %vm183, %v190, %v192
    %v194 = vsel %vm182, %v172, %v175
    %v195 = vsel %vm185, %v181, 1326507024
    %v196 = vsel %vm184, %v178, %v195
    %v197 = vsel %vm183, %v194, %v196
    %v198 = vshll.u32 %v158, 8
    %v199 = vmul.u32.u64.compose %v198, %v197
    %v200 = vextract.low.u32 %v199
    %v201 = vextract.high.u32 %v199
    %v202 = vmul.u32.u64.compose %v198, %v193
    %v203 = vextract.low.u32 %v202
    %v204 = vextract.high.u32 %v202
    %v205 = vmul.u32 %v198, %v189
    %v206 = vadd.s32 %v201, %v203
    %vm207 = vc.u32 %v201, %v203
    %v208 = vadd.s32 %v204, 1
    %v209 = vsel %vm207, %v208, %v204
    %v210 = vadd.s32 %v205, %v209
    %v211 = vadd.s32 %v210, 536870912
    %v212 = vshrl.u32 %v211, 30
    %v213 = vshll.u32 %v212, 30
    %v214 = vsub.s32 %v210, %v213
    %vm215 = vcmp.lt.s32.totalorder %v214, 0
    %v216 = vsub.s32 0, %v214
    %v217 = vsel %vm215, %v216, %v214
    %v218 = vclz %v217
    %v219 = vsub.s32 %v218, 2
    %vm220 = vcmp.gt.s32.totalorder 0, %v219
    %v221 = vsel %vm220, 0, %v219
    %v222 = vsub.s32 32, %v221
    %v223 = vshll.u32 %v214, %v221
    %v224 = vshrl.u32 %v206, %v222
    %v225 = vor.u32 %v223, %v224
    %v226 = vsub.s32 4294967266, %v221
    %v227 = vadd.s32 %v226, 127
    %v228 = vshll.u32 %v227, 23
    %v229 = vor.u32 4788187, %v228
    %v230 = vand.u32 2147483647, %v229
    %v232 = vcvt.s32.f32 %v225
    %v233 = vmul.f32 %v232, %v230
    %v234 = vxor.u32 %v233, 2147483648
    %v235 = vsel %vm152, %v234, %v233
    %v236 = vsub.s32 4, %v212
    %v237 = vsel %vm152, %v236, %v212
    %v238 = vsel %vm151, %v45, %v235
    %v239 = vsel %vm151, 0, %v237
    %v240 = vcosq.f32.pop %v238
    %v241 = vsinq.f32.pop %v238
    %vm242 = vweird.f32 %v45
    %v243 = vadd.s32 %v239, 3
    %v244 = vand.u32 %v243, 3
    %vm245 = vcmp.lt.s32.totalorder %v244, 2
    %vm246 = vcmp.eq.s32.totalorder %v244, 0
    %v247 = vxor.u32 %v241, 2147483648
    %v248 = vsel %vm246, %v240, %v247
    %vm249 = vcmp.eq.s32.totalorder %v244, 2
    %v250 = vxor.u32 %v240, 2147483648
    %v251 = vsel %vm249, %v250, %v241
    %v252 = vsel %vm245, %v248, %v251
    %v253 = vsel %vm242, nan, %v252
    %v254 = vmul.f32 %v45, 6.3496046
    %v255 = vand.u32 2147483647, %v254
    %vm256 = vcmp.le.f32.partialorder %v255, 0.7853982
    %vm257 = vcmp.lt.s32.totalorder %v254, 0
    %v258 = vand.u32 %v254, 2139095040
    %v259 = vshrl.u32 %v258, 23
    %v260 = vsub.s32 %v259, 127
    %v261 = vand.u32 2147483647, %v254
    %v262 = vand.u32 %v261, 8388607
    %v263 = vor.u32 %v262, 8388608
    %v264 = vsub.s32 0, %v263
    %v265 = vadd.s32 %v260, 1
    %vm266 = vcmp.gt.s32.totalorder %v265, 0
    %v267 = vsel %vm266, %v265, 0
    %v268 = vshrl.u32 %v267, 5
    %v269 = vand.u32 %v267, 31
    %v270 = vsub.s32 32, %v269
    %v271 = vshrl.u32 683565275, %v270
    %v272 = vshll.u32 683565275, %v269
    %v273 = vshrl.u32 2475754826, %v270
    %v274 = vor.u32 %v272, %v273
    %v275 = vshll.u32 2475754826, %v269
    %v276 = vshrl.u32 2131351028, %v270
    %v277 = vor.u32 %v275, %v276
    %v278 = vshll.u32 2131351028, %v269
    %v279 = vshrl.u32 2102212464, %v270
    %v280 = vor.u32 %v278, %v279
    %v281 = vshll.u32 2102212464, %v269
    %v282 = vshrl.u32 920167782, %v270
    %v283 = vor.u32 %v281, %v282
    %v284 = vshll.u32 920167782, %v269
    %v285 = vshrl.u32 1326507024, %v270
    %v286 = vor.u32 %v284, %v285
    %vm287 = vcmp.lt.s32.totalorder %v268, 1
    %vm288 = vcmp.lt.s32.totalorder %v268, 2
    %vm289 = vcmp.lt.s32.totalorder %v268, 3
    %vm290 = vcmp.lt.s32.totalorder %v268, 4
    %v291 = vsel %vm287, %v271, %v274
    %v292 = vsel %vm290, %v280, 2102212464
    %v293 = vsel %vm289, %v277, %v292
    %v294 = vsel %vm288, %v291, %v293
    %v295 = vsel %vm287, %v274, %v277
    %v296 = vsel %vm290, %v283, 920167782
    %v297 = vsel %vm289, %v280, %v296
    %v298 = vsel %vm288, %v295, %v297
    %v299 = vsel %vm287, %v277, %v280
    %v300 = vsel %vm290, %v286, 1326507024
    %v301 = vsel %vm289, %v283, %v300
    %v302 = vsel %vm288, %v299, %v301
    %v303 = vshll.u32 %v263, 8
    %v304 = vmul.u32.u64.compose %v303, %v302
    %v305 = vextract.low.u32 %v304
    %v306 = vextract.high.u32 %v304
    %v307 = vmul.u32.u64.compose %v303, %v298
    %v308 = vextract.low.u32 %v307
    %v309 = vextract.high.u32 %v307
    %v310 = vmul.u32 %v303, %v294
    %v311 = vadd.s32 %v306, %v308
    %vm312 = vc.u32 %v306, %v308
    %v313 = vadd.s32 %v309, 1
    %v314 = vsel %vm312, %v313, %v309
    %v315 = vadd.s32 %v310, %v314
    %v316 = vadd.s32 %v315, 536870912
    %v317 = vshrl.u32 %v316, 30
    %v318 = vshll.u32 %v317, 30
    %v319 = vsub.s32 %v315, %v318
    %vm320 = vcmp.lt.s32.totalorder %v319, 0
    %v321 = vsub.s32 0, %v319
    %v322 = vsel %vm320, %v321, %v319
    %v323 = vclz %v322
    %v324 = vsub.s32 %v323, 2
    %vm325 = vcmp.gt.s32.totalorder 0, %v324
    %v326 = vsel %vm325, 0, %v324
    %v327 = vsub.s32 32, %v326
    %v328 = vshll.u32 %v319, %v326
    %v329 = vshrl.u32 %v311, %v327
    %v330 = vor.u32 %v328, %v329
    %v331 = vsub.s32 4294967266, %v326
    %v332 = vadd.s32 %v331, 127
    %v333 = vshll.u32 %v332, 23
    %v334 = vor.u32 4788187, %v333
    %v335 = vand.u32 2147483647, %v334
    %v337 = vcvt.s32.f32 %v330
    %v338 = vmul.f32 %v337, %v335
    %v339 = vxor.u32 %v338, 2147483648
    %v340 = vsel %vm257, %v339, %v338
    %v341 = vsub.s32 4, %v317
    %v342 = vsel %vm257, %v341, %v317
    %v343 = vsel %vm256, %v254, %v340
    %v344 = vsel %vm256, 0, %v342
    %v345 = vcosq.f32.pop %v343
    %v346 = vsinq.f32.pop %v343
    %vm347 = vweird.f32 %v254
    %v348 = vand.u32 %v344, 3
    %vm349 = vcmp.lt.s32.totalorder %v348, 2
    %vm350 = vcmp.eq.s32.totalorder %v348, 0
    %v351 = vxor.u32 %v346, 2147483648
    %v352 = vsel %vm350, %v345, %v351
    %vm353 = vcmp.eq.s32.totalorder %v348, 2
    %v354 = vxor.u32 %v345, 2147483648
    %v355 = vsel %vm353, %v354, %v346
    %v356 = vsel %vm349, %v352, %v355
    %v357 = vsel %vm347, nan, %v356
    %v358 = vand.u32 2147483647, %v254
    %vm359 = vcmp.le.f32.partialorder %v358, 0.7853982
    %vm360 = vcmp.lt.s32.totalorder %v254, 0
    %v361 = vand.u32 %v254, 2139095040
    %v362 = vshrl.u32 %v361, 23
    %v363 = vsub.s32 %v362, 127
    %v364 = vand.u32 2147483647, %v254
    %v365 = vand.u32 %v364, 8388607
    %v366 = vor.u32 %v365, 8388608
    %v367 = vsub.s32 0, %v366
    %v368 = vadd.s32 %v363, 1
    %vm369 = vcmp.gt.s32.totalorder %v368, 0
    %v370 = vsel %vm369, %v368, 0
    %v371 = vshrl.u32 %v370, 5
    %v372 = vand.u32 %v370, 31
    %v373 = vsub.s32 32, %v372
    %v374 = vshrl.u32 683565275, %v373
    %v375 = vshll.u32 683565275, %v372
    %v376 = vshrl.u32 2475754826, %v373
    %v377 = vor.u32 %v375, %v376
    %v378 = vshll.u32 2475754826, %v372
    %v379 = vshrl.u32 2131351028, %v373
    %v380 = vor.u32 %v378, %v379
    %v381 = vshll.u32 2131351028, %v372
    %v382 = vshrl.u32 2102212464, %v373
    %v383 = vor.u32 %v381, %v382
    %v384 = vshll.u32 2102212464, %v372
    %v385 = vshrl.u32 920167782, %v373
    %v386 = vor.u32 %v384, %v385
    %v387 = vshll.u32 920167782, %v372
    %v388 = vshrl.u32 1326507024, %v373
    %v389 = vor.u32 %v387, %v388
    %vm390 = vcmp.lt.s32.totalorder %v371, 1
    %vm391 = vcmp.lt.s32.totalorder %v371, 2
    %vm392 = vcmp.lt.s32.totalorder %v371, 3
    %vm393 = vcmp.lt.s32.totalorder %v371, 4
    %v394 = vsel %vm390, %v374, %v377
    %v395 = vsel %vm393, %v383, 2102212464
    %v396 = vsel %vm392, %v380, %v395
    %v397 = vsel %vm391, %v394, %v396
    %v398 = vsel %vm390, %v377, %v380
    %v399 = vsel %vm393, %v386, 920167782
    %v400 = vsel %vm392, %v383, %v399
    %v401 = vsel %vm391, %v398, %v400
    %v402 = vsel %vm390, %v380, %v383
    %v403 = vsel %vm393, %v389, 1326507024
    %v404 = vsel %vm392, %v386, %v403
    %v405 = vsel %vm391, %v402, %v404
    %v406 = vshll.u32 %v366, 8
    %v407 = vmul.u32.u64.compose %v406, %v405
    %v408 = vextract.low.u32 %v407
    %v409 = vextract.high.u32 %v407
    %v410 = vmul.u32.u64.compose %v406, %v401
    %v411 = vextract.low.u32 %v410
    %v412 = vextract.high.u32 %v410
    %v413 = vmul.u32 %v406, %v397
    %v414 = vadd.s32 %v409, %v411
    %vm415 = vc.u32 %v409, %v411
    %v416 = vadd.s32 %v412, 1
    %v417 = vsel %vm415, %v416, %v412
    %v418 = vadd.s32 %v413, %v417
    %v419 = vadd.s32 %v418, 536870912
    %v420 = vshrl.u32 %v419, 30
    %v421 = vshll.u32 %v420, 30
    %v422 = vsub.s32 %v418, %v421
    %vm423 = vcmp.lt.s32.totalorder %v422, 0
    %v424 = vsub.s32 0, %v422
    %v425 = vsel %vm423, %v424, %v422
    %v426 = vclz %v425
    %v427 = vsub.s32 %v426, 2
    %vm428 = vcmp.gt.s32.totalorder 0, %v427
    %v429 = vsel %vm428, 0, %v427
    %v430 = vsub.s32 32, %v429
    %v431 = vshll.u32 %v422, %v429
    %v432 = vshrl.u32 %v414, %v430
    %v433 = vor.u32 %v431, %v432
    %v434 = vsub.s32 4294967266, %v429
    %v435 = vadd.s32 %v434, 127
    %v436 = vshll.u32 %v435, 23
    %v437 = vor.u32 4788187, %v436
    %v438 = vand.u32 2147483647, %v437
    %v440 = vcvt.s32.f32 %v433
    %v441 = vmul.f32 %v440, %v438
    %v442 = vxor.u32 %v441, 2147483648
    %v443 = vsel %vm360, %v442, %v441
    %v444 = vsub.s32 4, %v420
    %v445 = vsel %vm360, %v444, %v420
    %v446 = vsel %vm359, %v254, %v443
    %v447 = vsel %vm359, 0, %v445
    %v448 = vcosq.f32.pop %v446
    %v449 = vsinq.f32.pop %v446
    %vm450 = vweird.f32 %v254
    %v451 = vadd.s32 %v447, 3
    %v452 = vand.u32 %v451, 3
    %vm453 = vcmp.lt.s32.totalorder %v452, 2
    %vm454 = vcmp.eq.s32.totalorder %v452, 0
    %v455 = vxor.u32 %v449, 2147483648
    %v456 = vsel %vm454, %v448, %v455
    %vm457 = vcmp.eq.s32.totalorder %v452, 2
    %v458 = vxor.u32 %v448, 2147483648
    %v459 = vsel %vm457, %v458, %v449
    %v460 = vsel %vm453, %v456, %v459
    %v461 = vsel %vm450, nan, %v460
    %v462 = vmul.f32 %v45, 40.31748
    %v463 = vand.u32 2147483647, %v462
    %vm464 = vcmp.le.f32.partialorder %v463, 0.7853982
    %vm465 = vcmp.lt.s32.totalorder %v462, 0
    %v466 = vand.u32 %v462, 2139095040
    %v467 = vshrl.u32 %v466, 23
    %v468 = vsub.s32 %v467, 127
    %v469 = vand.u32 2147483647, %v462
    %v470 = vand.u32 %v469, 8388607
    %v471 = vor.u32 %v470, 8388608
    %v472 = vsub.s32 0, %v471
    %v473 = vadd.s32 %v468, 1
    %vm474 = vcmp.gt.s32.totalorder %v473, 0
    %v475 = vsel %vm474, %v473, 0
    %v476 = vshrl.u32 %v475, 5
    %v477 = vand.u32 %v475, 31
    %v478 = vsub.s32 32, %v477
    %v479 = vshrl.u32 683565275, %v478
    %v480 = vshll.u32 683565275, %v477
    %v481 = vshrl.u32 2475754826, %v478
    %v482 = vor.u32 %v480, %v481
    %v483 = vshll.u32 2475754826, %v477
    %v484 = vshrl.u32 2131351028, %v478
    %v485 = vor.u32 %v483, %v484
    %v486 = vshll.u32 2131351028, %v477
    %v487 = vshrl.u32 2102212464, %v478
    %v488 = vor.u32 %v486, %v487
    %v489 = vshll.u32 2102212464, %v477
    %v490 = vshrl.u32 920167782, %v478
    %v491 = vor.u32 %v489, %v490
    %v492 = vshll.u32 920167782, %v477
    %v493 = vshrl.u32 1326507024, %v478
    %v494 = vor.u32 %v492, %v493
    %vm495 = vcmp.lt.s32.totalorder %v476, 1
    %vm496 = vcmp.lt.s32.totalorder %v476, 2
    %vm497 = vcmp.lt.s32.totalorder %v476, 3
    %vm498 = vcmp.lt.s32.totalorder %v476, 4
    %v499 = vsel %vm495, %v479, %v482
    %v500 = vsel %vm498, %v488, 2102212464
    %v501 = vsel %vm497, %v485, %v500
    %v502 = vsel %vm496, %v499, %v501
    %v503 = vsel %vm495, %v482, %v485
    %v504 = vsel %vm498, %v491, 920167782
    %v505 = vsel %vm497, %v488, %v504
    %v506 = vsel %vm496, %v503, %v505
    %v507 = vsel %vm495, %v485, %v488
    %v508 = vsel %vm498, %v494, 1326507024
    %v509 = vsel %vm497, %v491, %v508
    %v510 = vsel %vm496, %v507, %v509
    %v511 = vshll.u32 %v471, 8
    %v512 = vmul.u32.u64.compose %v511, %v510
    %v513 = vextract.low.u32 %v512
    %v514 = vextract.high.u32 %v512
    %v515 = vmul.u32.u64.compose %v511, %v506
    %v516 = vextract.low.u32 %v515
    %v517 = vextract.high.u32 %v515
    %v518 = vmul.u32 %v511, %v502
    %v519 = vadd.s32 %v514, %v516
    %vm520 = vc.u32 %v514, %v516
    %v521 = vadd.s32 %v517, 1
    %v522 = vsel %vm520, %v521, %v517
    %v523 = vadd.s32 %v518, %v522
    %v524 = vadd.s32 %v523, 536870912
    %v525 = vshrl.u32 %v524, 30
    %v526 = vshll.u32 %v525, 30
    %v527 = vsub.s32 %v523, %v526
    %vm528 = vcmp.lt.s32.totalorder %v527, 0
    %v529 = vsub.s32 0, %v527
    %v530 = vsel %vm528, %v529, %v527
    %v531 = vclz %v530
    %v532 = vsub.s32 %v531, 2
    %vm533 = vcmp.gt.s32.totalorder 0, %v532
    %v534 = vsel %vm533, 0, %v532
    %v535 = vsub.s32 32, %v534
    %v536 = vshll.u32 %v527, %v534
    %v537 = vshrl.u32 %v519, %v535
    %v538 = vor.u32 %v536, %v537
    %v539 = vsub.s32 4294967266, %v534
    %v540 = vadd.s32 %v539, 127
    %v541 = vshll.u32 %v540, 23
    %v542 = vor.u32 4788187, %v541
    %v543 = vand.u32 2147483647, %v542
    %v545 = vcvt.s32.f32 %v538
    %v546 = vmul.f32 %v545, %v543
    %v547 = vxor.u32 %v546, 2147483648
    %v548 = vsel %vm465, %v547, %v546
    %v549 = vsub.s32 4, %v525
    %v550 = vsel %vm465, %v549, %v525
    %v551 = vsel %vm464, %v462, %v548
    %v552 = vsel %vm464, 0, %v550
    %v553 = vcosq.f32.pop %v551
    %v554 = vsinq.f32.pop %v551
    %vm555 = vweird.f32 %v462
    %v556 = vand.u32 %v552, 3
    %vm557 = vcmp.lt.s32.totalorder %v556, 2
    %vm558 = vcmp.eq.s32.totalorder %v556, 0
    %v559 = vxor.u32 %v554, 2147483648
    %v560 = vsel %vm558, %v553, %v559
    %vm561 = vcmp.eq.s32.totalorder %v556, 2
    %v562 = vxor.u32 %v553, 2147483648
    %v563 = vsel %vm561, %v562, %v554
    %v564 = vsel %vm557, %v560, %v563
    %v565 = vsel %vm555, nan, %v564
    %v566 = vand.u32 2147483647, %v462
    %vm567 = vcmp.le.f32.partialorder %v566, 0.7853982
    %vm568 = vcmp.lt.s32.totalorder %v462, 0
    %v569 = vand.u32 %v462, 2139095040
    %v570 = vshrl.u32 %v569, 23
    %v571 = vsub.s32 %v570, 127
    %v572 = vand.u32 2147483647, %v462
    %v573 = vand.u32 %v572, 8388607
    %v574 = vor.u32 %v573, 8388608
    %v575 = vsub.s32 0, %v574
    %v576 = vadd.s32 %v571, 1
    %vm577 = vcmp.gt.s32.totalorder %v576, 0
    %v578 = vsel %vm577, %v576, 0
    %v579 = vshrl.u32 %v578, 5
    %v580 = vand.u32 %v578, 31
    %v581 = vsub.s32 32, %v580
    %v582 = vshrl.u32 683565275, %v581
    %v583 = vshll.u32 683565275, %v580
    %v584 = vshrl.u32 2475754826, %v581
    %v585 = vor.u32 %v583, %v584
    %v586 = vshll.u32 2475754826, %v580
    %v587 = vshrl.u32 2131351028, %v581
    %v588 = vor.u32 %v586, %v587
    %v589 = vshll.u32 2131351028, %v580
    %v590 = vshrl.u32 2102212464, %v581
    %v591 = vor.u32 %v589, %v590
    %v592 = vshll.u32 2102212464, %v580
    %v593 = vshrl.u32 920167782, %v581
    %v594 = vor.u32 %v592, %v593
    %v595 = vshll.u32 920167782, %v580
    %v596 = vshrl.u32 1326507024, %v581
    %v597 = vor.u32 %v595, %v596
    %vm598 = vcmp.lt.s32.totalorder %v579, 1
    %vm599 = vcmp.lt.s32.totalorder %v579, 2
    %vm600 = vcmp.lt.s32.totalorder %v579, 3
    %vm601 = vcmp.lt.s32.totalorder %v579, 4
    %v602 = vsel %vm598, %v582, %v585
    %v603 = vsel %vm601, %v591, 2102212464
    %v604 = vsel %vm600, %v588, %v603
    %v605 = vsel %vm599, %v602, %v604
    %v606 = vsel %vm598, %v585, %v588
    %v607 = vsel %vm601, %v594, 920167782
    %v608 = vsel %vm600, %v591, %v607
    %v609 = vsel %vm599, %v606, %v608
    %v610 = vsel %vm598, %v588, %v591
    %v611 = vsel %vm601, %v597, 1326507024
    %v612 = vsel %vm600, %v594, %v611
    %v613 = vsel %vm599, %v610, %v612
    %v614 = vshll.u32 %v574, 8
    %v615 = vmul.u32.u64.compose %v614, %v613
    %v616 = vextract.low.u32 %v615
    %v617 = vextract.high.u32 %v615
    %v618 = vmul.u32.u64.compose %v614, %v609
    %v619 = vextract.low.u32 %v618
    %v620 = vextract.high.u32 %v618
    %v621 = vmul.u32 %v614, %v605
    %v622 = vadd.s32 %v617, %v619
    %vm623 = vc.u32 %v617, %v619
    %v624 = vadd.s32 %v620, 1
    %v625 = vsel %vm623, %v624, %v620
    %v626 = vadd.s32 %v621, %v625
    %v627 = vadd.s32 %v626, 536870912
    %v628 = vshrl.u32 %v627, 30
    %v629 = vshll.u32 %v628, 30
    %v630 = vsub.s32 %v626, %v629
    %vm631 = vcmp.lt.s32.totalorder %v630, 0
    %v632 = vsub.s32 0, %v630
    %v633 = vsel %vm631, %v632, %v630
    %v634 = vclz %v633
    %v635 = vsub.s32 %v634, 2
    %vm636 = vcmp.gt.s32.totalorder 0, %v635
    %v637 = vsel %vm636, 0, %v635
    %v638 = vsub.s32 32, %v637
    %v639 = vshll.u32 %v630, %v637
    %v640 = vshrl.u32 %v622, %v638
    %v641 = vor.u32 %v639, %v640
    %v642 = vsub.s32 4294967266, %v637
    %v643 = vadd.s32 %v642, 127
    %v644 = vshll.u32 %v643, 23
    %v645 = vor.u32 4788187, %v644
    %v646 = vand.u32 2147483647, %v645
    %v648 = vcvt.s32.f32 %v641
    %v649 = vmul.f32 %v648, %v646
    %v650 = vxor.u32 %v649, 2147483648
    %v651 = vsel %vm568, %v650, %v649
    %v652 = vsub.s32 4, %v628
    %v653 = vsel %vm568, %v652, %v628
    %v654 = vsel %vm567, %v462, %v651
    %v655 = vsel %vm567, 0, %v653
    %v656 = vcosq.f32.pop %v654
    %v657 = vsinq.f32.pop %v654
    %vm658 = vweird.f32 %v462
    %v659 = vadd.s32 %v655, 3
    %v660 = vand.u32 %v659, 3
    %vm661 = vcmp.lt.s32.totalorder %v660, 2
    %vm662 = vcmp.eq.s32.totalorder %v660, 0
    %v663 = vxor.u32 %v657, 2147483648
    %v664 = vsel %vm662, %v656, %v663
    %vm665 = vcmp.eq.s32.totalorder %v660, 2
    %v666 = vxor.u32 %v656, 2147483648
    %v667 = vsel %vm665, %v666, %v657
    %v668 = vsel %vm661, %v664, %v667
    %v669 = vsel %vm658, nan, %v668
    %v670 = vmul.f32 %v45, 256.0
    %v671 = vand.u32 2147483647, %v670
    %vm672 = vcmp.le.f32.partialorder %v671, 0.7853982
    %vm673 = vcmp.lt.s32.totalorder %v670, 0
    %v674 = vand.u32 %v670, 2139095040
    %v675 = vshrl.u32 %v674, 23
    %v676 = vsub.s32 %v675, 127
    %v677 = vand.u32 2147483647, %v670
    %v678 = vand.u32 %v677, 8388607
    %v679 = vor.u32 %v678, 8388608
    %v680 = vsub.s32 0, %v679
    %v681 = vadd.s32 %v676, 1
    %vm682 = vcmp.gt.s32.totalorder %v681, 0
    %v683 = vsel %vm682, %v681, 0
    %v684 = vshrl.u32 %v683, 5
    %v685 = vand.u32 %v683, 31
    %v686 = vsub.s32 32, %v685
    %v687 = vshrl.u32 683565275, %v686
    %v688 = vshll.u32 683565275, %v685
    %v689 = vshrl.u32 2475754826, %v686
    %v690 = vor.u32 %v688, %v689
    %v691 = vshll.u32 2475754826, %v685
    %v692 = vshrl.u32 2131351028, %v686
    %v693 = vor.u32 %v691, %v692
    %v694 = vshll.u32 2131351028, %v685
    %v695 = vshrl.u32 2102212464, %v686
    %v696 = vor.u32 %v694, %v695
    %v697 = vshll.u32 2102212464, %v685
    %v698 = vshrl.u32 920167782, %v686
    %v699 = vor.u32 %v697, %v698
    %v700 = vshll.u32 920167782, %v685
    %v701 = vshrl.u32 1326507024, %v686
    %v702 = vor.u32 %v700, %v701
    %vm703 = vcmp.lt.s32.totalorder %v684, 1
    %vm704 = vcmp.lt.s32.totalorder %v684, 2
    %vm705 = vcmp.lt.s32.totalorder %v684, 3
    %vm706 = vcmp.lt.s32.totalorder %v684, 4
    %v707 = vsel %vm703, %v687, %v690
    %v708 = vsel %vm706, %v696, 2102212464
    %v709 = vsel %vm705, %v693, %v708
    %v710 = vsel %vm704, %v707, %v709
    %v711 = vsel %vm703, %v690, %v693
    %v712 = vsel %vm706, %v699, 920167782
    %v713 = vsel %vm705, %v696, %v712
    %v714 = vsel %vm704, %v711, %v713
    %v715 = vsel %vm703, %v693, %v696
    %v716 = vsel %vm706, %v702, 1326507024
    %v717 = vsel %vm705, %v699, %v716
    %v718 = vsel %vm704, %v715, %v717
    %v719 = vshll.u32 %v679, 8
    %v720 = vmul.u32.u64.compose %v719, %v718
    %v721 = vextract.low.u32 %v720
    %v722 = vextract.high.u32 %v720
    %v723 = vmul.u32.u64.compose %v719, %v714
    %v724 = vextract.low.u32 %v723
    %v725 = vextract.high.u32 %v723
    %v726 = vmul.u32 %v719, %v710
    %v727 = vadd.s32 %v722, %v724
    %vm728 = vc.u32 %v722, %v724
    %v729 = vadd.s32 %v725, 1
    %v730 = vsel %vm728, %v729, %v725
    %v731 = vadd.s32 %v726, %v730
    %v732 = vadd.s32 %v731, 536870912
    %v733 = vshrl.u32 %v732, 30
    %v734 = vshll.u32 %v733, 30
    %v735 = vsub.s32 %v731, %v734
    %vm736 = vcmp.lt.s32.totalorder %v735, 0
    %v737 = vsub.s32 0, %v735
    %v738 = vsel %vm736, %v737, %v735
    %v739 = vclz %v738
    %v740 = vsub.s32 %v739, 2
    %vm741 = vcmp.gt.s32.totalorder 0, %v740
    %v742 = vsel %vm741, 0, %v740
    %v743 = vsub.s32 32, %v742
    %v744 = vshll.u32 %v735, %v742
    %v745 = vshrl.u32 %v727, %v743
    %v746 = vor.u32 %v744, %v745
    %v747 = vsub.s32 4294967266, %v742
    %v748 = vadd.s32 %v747, 127
    %v749 = vshll.u32 %v748, 23
    %v750 = vor.u32 4788187, %v749
    %v751 = vand.u32 2147483647, %v750
    %v753 = vcvt.s32.f32 %v746
    %v754 = vmul.f32 %v753, %v751
    %v755 = vxor.u32 %v754, 2147483648
    %v756 = vsel %vm673, %v755, %v754
    %v757 = vsub.s32 4, %v733
    %v758 = vsel %vm673, %v757, %v733
    %v759 = vsel %vm672, %v670, %v756
    %v760 = vsel %vm672, 0, %v758
    %v761 = vcosq.f32.pop %v759
    %v762 = vsinq.f32.pop %v759
    %vm763 = vweird.f32 %v670
    %v764 = vand.u32 %v760, 3
    %vm765 = vcmp.lt.s32.totalorder %v764, 2
    %vm766 = vcmp.eq.s32.totalorder %v764, 0
    %v767 = vxor.u32 %v762, 2147483648
    %v768 = vsel %vm766, %v761, %v767
    %vm769 = vcmp.eq.s32.totalorder %v764, 2
    %v770 = vxor.u32 %v761, 2147483648
    %v771 = vsel %vm769, %v770, %v762
    %v772 = vsel %vm765, %v768, %v771
    %v773 = vsel %vm763, nan, %v772
    %v774 = vand.u32 2147483647, %v670
    %vm775 = vcmp.le.f32.partialorder %v774, 0.7853982
    %vm776 = vcmp.lt.s32.totalorder %v670, 0
    %v777 = vand.u32 %v670, 2139095040
    %v778 = vshrl.u32 %v777, 23
    %v779 = vsub.s32 %v778, 127
    %v780 = vand.u32 2147483647, %v670
    %v781 = vand.u32 %v780, 8388607
    %v782 = vor.u32 %v781, 8388608
    %v783 = vsub.s32 0, %v782
    %v784 = vadd.s32 %v779, 1
    %vm785 = vcmp.gt.s32.totalorder %v784, 0
    %v786 = vsel %vm785, %v784, 0
    %v787 = vshrl.u32 %v786, 5
    %v788 = vand.u32 %v786, 31
    %v789 = vsub.s32 32, %v788
    %v790 = vshrl.u32 683565275, %v789
    %v791 = vshll.u32 683565275, %v788
    %v792 = vshrl.u32 2475754826, %v789
    %v793 = vor.u32 %v791, %v792
    %v794 = vshll.u32 2475754826, %v788
    %v795 = vshrl.u32 2131351028, %v789
    %v796 = vor.u32 %v794, %v795
    %v797 = vshll.u32 2131351028, %v788
    %v798 = vshrl.u32 2102212464, %v789
    %v799 = vor.u32 %v797, %v798
    %v800 = vshll.u32 2102212464, %v788
    %v801 = vshrl.u32 920167782, %v789
    %v802 = vor.u32 %v800, %v801
    %v803 = vshll.u32 920167782, %v788
    %v804 = vshrl.u32 1326507024, %v789
    %v805 = vor.u32 %v803, %v804
    %vm806 = vcmp.lt.s32.totalorder %v787, 1
    %vm807 = vcmp.lt.s32.totalorder %v787, 2
    %vm808 = vcmp.lt.s32.totalorder %v787, 3
    %vm809 = vcmp.lt.s32.totalorder %v787, 4
    %v810 = vsel %vm806, %v790, %v793
    %v811 = vsel %vm809, %v799, 2102212464
    %v812 = vsel %vm808, %v796, %v811
    %v813 = vsel %vm807, %v810, %v812
    %v814 = vsel %vm806, %v793, %v796
    %v815 = vsel %vm809, %v802, 920167782
    %v816 = vsel %vm808, %v799, %v815
    %v817 = vsel %vm807, %v814, %v816
    %v818 = vsel %vm806, %v796, %v799
    %v819 = vsel %vm809, %v805, 1326507024
    %v820 = vsel %vm808, %v802, %v819
    %v821 = vsel %vm807, %v818, %v820
    %v822 = vshll.u32 %v782, 8
    %v823 = vmul.u32.u64.compose %v822, %v821
    %v824 = vextract.low.u32 %v823
    %v825 = vextract.high.u32 %v823
    %v826 = vmul.u32.u64.compose %v822, %v817
    %v827 = vextract.low.u32 %v826
    %v828 = vextract.high.u32 %v826
    %v829 = vmul.u32 %v822, %v813
    %v830 = vadd.s32 %v825, %v827
    %vm831 = vc.u32 %v825, %v827
    %v832 = vadd.s32 %v828, 1
    %v833 = vsel %vm831, %v832, %v828
    %v834 = vadd.s32 %v829, %v833
    %v835 = vadd.s32 %v834, 536870912
    %v836 = vshrl.u32 %v835, 30
    %v837 = vshll.u32 %v836, 30
    %v838 = vsub.s32 %v834, %v837
    %vm839 = vcmp.lt.s32.totalorder %v838, 0
    %v840 = vsub.s32 0, %v838
    %v841 = vsel %vm839, %v840, %v838
    %v842 = vclz %v841
    %v843 = vsub.s32 %v842, 2
    %vm844 = vcmp.gt.s32.totalorder 0, %v843
    %v845 = vsel %vm844, 0, %v843
    %v846 = vsub.s32 32, %v845
    %v847 = vshll.u32 %v838, %v845
    %v848 = vshrl.u32 %v830, %v846
    %v849 = vor.u32 %v847, %v848
    %v850 = vsub.s32 4294967266, %v845
    %v851 = vadd.s32 %v850, 127
    %v852 = vshll.u32 %v851, 23
    %v853 = vor.u32 4788187, %v852
    %v854 = vand.u32 2147483647, %v853
    %v856 = vcvt.s32.f32 %v849
    %v857 = vmul.f32 %v856, %v854
    %v858 = vxor.u32 %v857, 2147483648
    %v859 = vsel %vm776, %v858, %v857
    %v860 = vsub.s32 4, %v836
    %v861 = vsel %vm776, %v860, %v836
    %v862 = vsel %vm775, %v670, %v859
    %v863 = vsel %vm775, 0, %v861
    %v864 = vcosq.f32.pop %v862
    %v865 = vsinq.f32.pop %v862
    %vm866 = vweird.f32 %v670
    %v867 = vadd.s32 %v863, 3
    %v868 = vand.u32 %v867, 3
    %vm869 = vcmp.lt.s32.totalorder %v868, 2
    %vm870 = vcmp.eq.s32.totalorder %v868, 0
    %v871 = vxor.u32 %v865, 2147483648
    %v872 = vsel %vm870, %v864, %v871
    %vm873 = vcmp.eq.s32.totalorder %v868, 2
    %v874 = vxor.u32 %v864, 2147483648
    %v875 = vsel %vm873, %v874, %v865
    %v876 = vsel %vm869, %v872, %v875
    %v877 = vsel %vm866, nan, %v876
    %v879 = vrot.slane %v357, 2
    %v882 = vrot.slane %v565, 4
    %v885 = vrot.slane %v773, 6
    %v888 = vrot.slane %v461, 2
    %v891 = vrot.slane %v669, 4
    %v894 = vrot.slane %v877, 6
    %vm896 = vcmask 1045504
    %v897 = vsel %vm896, %v149, %v879
    %vm898 = vcmask 1043456
    %v899 = vsel %vm898, %v879, %v882
    %vm900 = vcmask 1041408
    %v901 = vsel %vm900, %v882, %v885
    %v902 = vsel %vm896, %v253, %v888
    %v903 = vsel %vm898, %v888, %v891
    %v904 = vsel %vm900, %v891, %v894
    %906 = vset.pattern.permute.xlu0 0
    %907 = vperm.xlu0 %906, %v35
    %v908 = vpop.permute.xlu0 %907
    %911 = vset.pattern.permute.xlu0 0
    %912 = vperm.xlu0 %911, %v36
    %v913 = vpop.permute.xlu0 %912
    %916 = vset.pattern.permute.xlu0 0
    %917 = vperm.xlu0 %916, %v37
    %v918 = vpop.permute.xlu0 %917
    %921 = vset.pattern.permute.xlu0 0
    %922 = vperm.xlu0 %921, %v38
    %v923 = vpop.permute.xlu0 %922
    %926 = vset.pattern.permute.xlu0 0
    %927 = vperm.xlu0 %926, %v39
    %v928 = vpop.permute.xlu0 %927
    %931 = vset.pattern.permute.xlu0 0
    %932 = vperm.xlu0 %931, %v40
    %v933 = vpop.permute.xlu0 %932
    %936 = vset.pattern.permute.xlu0 0
    %937 = vperm.xlu0 %936, %v41
    %v938 = vpop.permute.xlu0 %937
    %941 = vset.pattern.permute.xlu0 0
    %942 = vperm.xlu0 %941, %v42
    %v943 = vpop.permute.xlu0 %942
    %vm945 = vcmask 392192
    %v947 = vsel %vm945, %v27, 0
    %v950 = vsel %vm945, %v28, 0
    %v953 = vsel %vm945, %v29, 0
    %v956 = vsel %vm945, %v30, 0
    %v959 = vsel %vm945, %v31, 0
    %v962 = vsel %vm945, %v32, 0
    %v965 = vsel %vm945, %v33, 0
    %v968 = vsel %vm945, %v34, 0
    %970 = vmatprep.subr.mxu0 0.0
    %971 = vmatpush1.msra.mxu0 0.0
    %972 = vmatprep.subr.mxu0 0.0
    %973 = vmatpush1.msra.mxu0 0.0
    %974 = vmatprep.subr.mxu0 0.0
    %975 = vmatpush1.msra.mxu0 0.0
    %976 = vmatprep.subr.mxu0 0.0
    %977 = vmatpush1.msra.mxu0 0.0
    %978 = vmatprep.subr.mxu0 0.0
    %979 = vmatpush1.msra.mxu0 0.0
    %980 = vmatprep.subr.mxu0 0.0
    %981 = vmatpush1.msra.mxu0 0.0
    %982 = vmatprep.subr.mxu0 0.0
    %983 = vmatpush1.msra.mxu0 0.0
    %984 = vmatprep.subr.mxu0 0.0
    %985 = vmatpush1.msra.mxu0 0.0
    %986 = vmatprep.subr.mxu0 0.0
    %987 = vmatpush1.msra.mxu0 0.0
    %988 = vmatprep.subr.mxu0 0.0
    %989 = vmatpush1.msra.mxu0 0.0
    %990 = vmatprep.subr.mxu0 0.0
    %991 = vmatpush1.msra.mxu0 %v904
    %992 = vmatprep.subr.mxu0 0.0
    %993 = vmatpush1.msra.mxu0 %v903
    %994 = vmatprep.subr.mxu0 0.0
    %995 = vmatpush1.msra.mxu0 %v902
    %996 = vmatprep.subr.mxu0 0.0
    %997 = vmatpush1.msra.mxu0 %v901
    %998 = vmatprep.subr.mxu0 0.0
    %999 = vmatpush1.msra.mxu0 %v899
    %1000 = vmatprep.subr.mxu0 0.0
    %1001 = vmatpush1.msra.mxu0 %v897
    %1002 = vmatprep.subr.mxu0 0.0
    %1003 = vmatpush2.msra.mxu0 0.0
    %1004 = vmatprep.subr.mxu0 0.0
    %1005 = vmatpush2.msra.mxu0 0.0
    %1006 = vmatprep.subr.mxu0 0.0
    %1007 = vmatpush2.msra.mxu0 0.0
    %1008 = vmatprep.subr.mxu0 0.0
    %1009 = vmatpush2.msra.mxu0 0.0
    %1010 = vmatprep.subr.mxu0 0.0
    %1011 = vmatpush2.msra.mxu0 0.0
    %1012 = vmatprep.subr.mxu0 0.0
    %1013 = vmatpush2.msra.mxu0 0.0
    %1014 = vmatprep.subr.mxu0 0.0
    %1015 = vmatpush2.msra.mxu0 0.0
    %1016 = vmatprep.subr.mxu0 0.0
    %1017 = vmatpush2.msra.mxu0 0.0
    %1018 = vmatprep.subr.mxu0 0.0
    %1019 = vmatpush2.msra.mxu0 0.0
    %1020 = vmatprep.subr.mxu0 0.0
    %1021 = vmatpush2.msra.mxu0 0.0
    %1022 = vmatprep.subr.mxu0 0.0
    %1023 = vmatpush2.msra.mxu0 0.0
    %1024 = vmatprep.subr.mxu0 0.0
    %1025 = vmatpush2.msra.mxu0 0.0
    %1026 = vmatprep.subr.mxu0 0.0
    %1027 = vmatpush2.msra.mxu0 0.0
    %1028 = vmatprep.subr.mxu0 0.0
    %1029 = vmatpush2.msra.mxu0 0.0
    %1030 = vmatprep.subr.mxu0 0.0
    %1031 = vmatpush2.msra.mxu0 0.0
    %1032 = vmatprep.subr.mxu0 0.0
    %1033 = vmatpush2.msra.mxu0 0.0
    %1034 = vmatprep.mubr.f32.mxu0 0.0
    %1035 = vmatmul.mubr.f32.gmra.mxu0 %v947
    %v1036 = vpop.f32.mrf.mxu0
    %v1037 = vadd.f32 %v908, %v1036
    %v1038 = vpop.f32.mrf.mxu0
    %1039 = vmatprep.mubr.f32.mxu0 0.0
    %1040 = vmatmul.mubr.f32.gmra.mxu0 %v950
    %v1041 = vpop.f32.mrf.mxu0
    %v1042 = vadd.f32 %v913, %v1041
    %v1043 = vpop.f32.mrf.mxu0
    %1044 = vmatprep.mubr.f32.mxu0 0.0
    %1045 = vmatmul.mubr.f32.gmra.mxu0 %v953
    %v1046 = vpop.f32.mrf.mxu0
    %v1047 = vadd.f32 %v918, %v1046
    %v1048 = vpop.f32.mrf.mxu0
    %1049 = vmatprep.mubr.f32.mxu0 0.0
    %1050 = vmatmul.mubr.f32.gmra.mxu0 %v956
    %v1051 = vpop.f32.mrf.mxu0
    %v1052 = vadd.f32 %v923, %v1051
    %v1053 = vpop.f32.mrf.mxu0
    %1054 = vmatprep.mubr.f32.mxu0 0.0
    %1055 = vmatmul.mubr.f32.gmra.mxu0 %v959
    %v1056 = vpop.f32.mrf.mxu0
    %v1057 = vadd.f32 %v928, %v1056
    %v1058 = vpop.f32.mrf.mxu0
    %1059 = vmatprep.mubr.f32.mxu0 0.0
    %1060 = vmatmul.mubr.f32.gmra.mxu0 %v962
    %v1061 = vpop.f32.mrf.mxu0
    %v1062 = vadd.f32 %v933, %v1061
    %v1063 = vpop.f32.mrf.mxu0
    %1064 = vmatprep.mubr.f32.mxu0 0.0
    %1065 = vmatmul.mubr.f32.gmra.mxu0 %v965
    %v1066 = vpop.f32.mrf.mxu0
    %v1067 = vadd.f32 %v938, %v1066
    %v1068 = vpop.f32.mrf.mxu0
    %1069 = vmatprep.mubr.f32.mxu0 0.0
    %1070 = vmatmul.mubr.f32.gmra.mxu0 %v968
    %v1071 = vpop.f32.mrf.mxu0
    %v1072 = vadd.f32 %v943, %v1071
    %v1073 = vpop.f32.mrf.mxu0
    %1074 = vdwg.mxu0
    %v1075 = vmax.f32 %v1037, 0.0
    %v1076 = vmax.f32 %v1042, 0.0
    %v1077 = vmax.f32 %v1047, 0.0
    %v1078 = vmax.f32 %v1052, 0.0
    %v1079 = vmax.f32 %v1057, 0.0
    %v1080 = vmax.f32 %v1062, 0.0
    %v1081 = vmax.f32 %v1067, 0.0
    %v1082 = vmax.f32 %v1072, 0.0
    %v1083 = vld [vmem:[%s3] sm:$0xff]
    %v1084 = vld [vmem:[%s3 + $0x8] sm:$0xff]
    %v1085 = vld [vmem:[%s3 + $0x10] sm:$0xff]
    %v1086 = vld [vmem:[%s3 + $0x18] sm:$0xff]
    %v1087 = vld [vmem:[%s3 + $0x20] sm:$0xff]
    %v1088 = vld [vmem:[%s3 + $0x28] sm:$0xff]
    %v1089 = vld [vmem:[%s3 + $0x30] sm:$0xff]
    %v1090 = vld [vmem:[%s3 + $0x38] sm:$0xff]
    %v1091 = vld [vmem:[%s4] sm:$0xff]
    %v1092 = vld [vmem:[%s4 + $0x8] sm:$0xff]
    %v1093 = vld [vmem:[%s4 + $0x10] sm:$0xff]
    %v1094 = vld [vmem:[%s4 + $0x18] sm:$0xff]
    %v1095 = vld [vmem:[%s4 + $0x20] sm:$0xff]
    %v1096 = vld [vmem:[%s4 + $0x28] sm:$0xff]
    %v1097 = vld [vmem:[%s4 + $0x30] sm:$0xff]
    %v1098 = vld [vmem:[%s4 + $0x38] sm:$0xff]
    %1100 = vset.pattern.permute.xlu0 0
    %1101 = vperm.xlu0 %1100, %v1091
    %v1102 = vpop.permute.xlu0 %1101
    %1105 = vset.pattern.permute.xlu0 0
    %1106 = vperm.xlu0 %1105, %v1092
    %v1107 = vpop.permute.xlu0 %1106
    %1110 = vset.pattern.permute.xlu0 0
    %1111 = vperm.xlu0 %1110, %v1093
    %v1112 = vpop.permute.xlu0 %1111
    %1115 = vset.pattern.permute.xlu0 0
    %1116 = vperm.xlu0 %1115, %v1094
    %v1117 = vpop.permute.xlu0 %1116
    %1120 = vset.pattern.permute.xlu0 0
    %1121 = vperm.xlu0 %1120, %v1095
    %v1122 = vpop.permute.xlu0 %1121
    %1125 = vset.pattern.permute.xlu0 0
    %1126 = vperm.xlu0 %1125, %v1096
    %v1127 = vpop.permute.xlu0 %1126
    %1130 = vset.pattern.permute.xlu0 0
    %1131 = vperm.xlu0 %1130, %v1097
    %v1132 = vpop.permute.xlu0 %1131
    %1135 = vset.pattern.permute.xlu0 0
    %1136 = vperm.xlu0 %1135, %v1098
    %v1137 = vpop.permute.xlu0 %1136
    %vm1139 = vcmask 523264
    %v1141 = vsel %vm1139, %v1083, 0
    %v1144 = vsel %vm1139, %v1084, 0
    %v1147 = vsel %vm1139, %v1085, 0
    %v1150 = vsel %vm1139, %v1086, 0
    %v1153 = vsel %vm1139, %v1087, 0
    %v1156 = vsel %vm1139, %v1088, 0
    %v1159 = vsel %vm1139, %v1089, 0
    %v1162 = vsel %vm1139, %v1090, 0
    %1164 = vmatprep.subr.mxu0 0.0
    %1165 = vmatpush1.msra.mxu0 0.0
    %1166 = vmatprep.subr.mxu0 0.0
    %1167 = vmatpush1.msra.mxu0 0.0
    %1168 = vmatprep.subr.mxu0 0.0
    %1169 = vmatpush1.msra.mxu0 0.0
    %1170 = vmatprep.subr.mxu0 0.0
    %1171 = vmatpush1.msra.mxu0 0.0
    %1172 = vmatprep.subr.mxu0 0.0
    %1173 = vmatpush1.msra.mxu0 0.0
    %1174 = vmatprep.subr.mxu0 0.0
    %1175 = vmatpush1.msra.mxu0 0.0
    %1176 = vmatprep.subr.mxu0 0.0
    %1177 = vmatpush1.msra.mxu0 0.0
    %1178 = vmatprep.subr.mxu0 0.0
    %1179 = vmatpush1.msra.mxu0 0.0
    %1180 = vmatprep.subr.mxu0 0.0
    %1181 = vmatpush1.msra.mxu0 %v1082
    %1182 = vmatprep.subr.mxu0 0.0
    %1183 = vmatpush1.msra.mxu0 %v1081
    %1184 = vmatprep.subr.mxu0 0.0
    %1185 = vmatpush1.msra.mxu0 %v1080
    %1186 = vmatprep.subr.mxu0 0.0
    %1187 = vmatpush1.msra.mxu0 %v1079
    %1188 = vmatprep.subr.mxu0 0.0
    %1189 = vmatpush1.msra.mxu0 %v1078
    %1190 = vmatprep.subr.mxu0 0.0
    %1191 = vmatpush1.msra.mxu0 %v1077
    %1192 = vmatprep.subr.mxu0 0.0
    %1193 = vmatpush1.msra.mxu0 %v1076
    %1194 = vmatprep.subr.mxu0 0.0
    %1195 = vmatpush1.msra.mxu0 %v1075
    %1196 = vmatprep.subr.mxu0 0.0
    %1197 = vmatpush2.msra.mxu0 0.0
    %1198 = vmatprep.subr.mxu0 0.0
    %1199 = vmatpush2.msra.mxu0 0.0
    %1200 = vmatprep.subr.mxu0 0.0
    %1201 = vmatpush2.msra.mxu0 0.0
    %1202 = vmatprep.subr.mxu0 0.0
    %1203 = vmatpush2.msra.mxu0 0.0
    %1204 = vmatprep.subr.mxu0 0.0
    %1205 = vmatpush2.msra.mxu0 0.0
    %1206 = vmatprep.subr.mxu0 0.0
    %1207 = vmatpush2.msra.mxu0 0.0
    %1208 = vmatprep.subr.mxu0 0.0
    %1209 = vmatpush2.msra.mxu0 0.0
    %1210 = vmatprep.subr.mxu0 0.0
    %1211 = vmatpush2.msra.mxu0 0.0
    %1212 = vmatprep.subr.mxu0 0.0
    %1213 = vmatpush2.msra.mxu0 0.0
    %1214 = vmatprep.subr.mxu0 0.0
    %1215 = vmatpush2.msra.mxu0 0.0
    %1216 = vmatprep.subr.mxu0 0.0
    %1217 = vmatpush2.msra.mxu0 0.0
    %1218 = vmatprep.subr.mxu0 0.0
    %1219 = vmatpush2.msra.mxu0 0.0
    %1220 = vmatprep.subr.mxu0 0.0
    %1221 = vmatpush2.msra.mxu0 0.0
    %1222 = vmatprep.subr.mxu0 0.0
    %1223 = vmatpush2.msra.mxu0 0.0
    %1224 = vmatprep.subr.mxu0 0.0
    %1225 = vmatpush2.msra.mxu0 0.0
    %1226 = vmatprep.subr.mxu0 0.0
    %1227 = vmatpush2.msra.mxu0 0.0
    %1228 = vmatprep.mubr.f32.mxu0 0.0
    %1229 = vmatmul.mubr.f32.gmra.mxu0 %v1141
    %v1230 = vpop.f32.mrf.mxu0
    %v1231 = vadd.f32 %v1102, %v1230
    %v1232 = vpop.f32.mrf.mxu0
    %1233 = vmatprep.mubr.f32.mxu0 0.0
    %1234 = vmatmul.mubr.f32.gmra.mxu0 %v1144
    %v1235 = vpop.f32.mrf.mxu0
    %v1236 = vadd.f32 %v1107, %v1235
    %v1237 = vpop.f32.mrf.mxu0
    %1238 = vmatprep.mubr.f32.mxu0 0.0
    %1239 = vmatmul.mubr.f32.gmra.mxu0 %v1147
    %v1240 = vpop.f32.mrf.mxu0
    %v1241 = vadd.f32 %v1112, %v1240
    %v1242 = vpop.f32.mrf.mxu0
    %1243 = vmatprep.mubr.f32.mxu0 0.0
    %1244 = vmatmul.mubr.f32.gmra.mxu0 %v1150
    %v1245 = vpop.f32.mrf.mxu0
    %v1246 = vadd.f32 %v1117, %v1245
    %v1247 = vpop.f32.mrf.mxu0
    %1248 = vmatprep.mubr.f32.mxu0 0.0
    %1249 = vmatmul.mubr.f32.gmra.mxu0 %v1153
    %v1250 = vpop.f32.mrf.mxu0
    %v1251 = vadd.f32 %v1122, %v1250
    %v1252 = vpop.f32.mrf.mxu0
    %1253 = vmatprep.mubr.f32.mxu0 0.0
    %1254 = vmatmul.mubr.f32.gmra.mxu0 %v1156
    %v1255 = vpop.f32.mrf.mxu0
    %v1256 = vadd.f32 %v1127, %v1255
    %v1257 = vpop.f32.mrf.mxu0
    %1258 = vmatprep.mubr.f32.mxu0 0.0
    %1259 = vmatmul.mubr.f32.gmra.mxu0 %v1159
    %v1260 = vpop.f32.mrf.mxu0
    %v1261 = vadd.f32 %v1132, %v1260
    %v1262 = vpop.f32.mrf.mxu0
    %1263 = vmatprep.mubr.f32.mxu0 0.0
    %1264 = vmatmul.mubr.f32.gmra.mxu0 %v1162
    %v1265 = vpop.f32.mrf.mxu0
    %v1266 = vadd.f32 %v1137, %v1265
    %v1267 = vpop.f32.mrf.mxu0
    %1268 = vdwg.mxu0
    %v1269 = vmax.f32 %v1231, 0.0
    %v1270 = vmax.f32 %v1236, 0.0
    %v1271 = vmax.f32 %v1241, 0.0
    %v1272 = vmax.f32 %v1246, 0.0
    %v1273 = vmax.f32 %v1251, 0.0
    %v1274 = vmax.f32 %v1256, 0.0
    %v1275 = vmax.f32 %v1261, 0.0
    %v1276 = vmax.f32 %v1266, 0.0
    %s1277 = scalar_lea.vmem %s3, 64
    %v1278 = vld [vmem:[%s1277] sm:$0xff]
    %v1279 = vld [vmem:[%s1277 + $0x8] sm:$0xff]
    %v1280 = vld [vmem:[%s1277 + $0x10] sm:$0xff]
    %v1281 = vld [vmem:[%s1277 + $0x18] sm:$0xff]
    %v1282 = vld [vmem:[%s1277 + $0x20] sm:$0xff]
    %v1283 = vld [vmem:[%s1277 + $0x28] sm:$0xff]
    %v1284 = vld [vmem:[%s1277 + $0x30] sm:$0xff]
    %v1285 = vld [vmem:[%s1277 + $0x38] sm:$0xff]
    %s1286 = scalar_lea.vmem %s4, 64
    %v1287 = vld [vmem:[%s1286] sm:$0xff]
    %v1288 = vld [vmem:[%s1286 + $0x8] sm:$0xff]
    %v1289 = vld [vmem:[%s1286 + $0x10] sm:$0xff]
    %v1290 = vld [vmem:[%s1286 + $0x18] sm:$0xff]
    %v1291 = vld [vmem:[%s1286 + $0x20] sm:$0xff]
    %v1292 = vld [vmem:[%s1286 + $0x28] sm:$0xff]
    %v1293 = vld [vmem:[%s1286 + $0x30] sm:$0xff]
    %v1294 = vld [vmem:[%s1286 + $0x38] sm:$0xff]
    %1296 = vset.pattern.permute.xlu0 0
    %1297 = vperm.xlu0 %1296, %v1287
    %v1298 = vpop.permute.xlu0 %1297
    %1301 = vset.pattern.permute.xlu0 0
    %1302 = vperm.xlu0 %1301, %v1288
    %v1303 = vpop.permute.xlu0 %1302
    %1306 = vset.pattern.permute.xlu0 0
    %1307 = vperm.xlu0 %1306, %v1289
    %v1308 = vpop.permute.xlu0 %1307
    %1311 = vset.pattern.permute.xlu0 0
    %1312 = vperm.xlu0 %1311, %v1290
    %v1313 = vpop.permute.xlu0 %1312
    %1316 = vset.pattern.permute.xlu0 0
    %1317 = vperm.xlu0 %1316, %v1291
    %v1318 = vpop.permute.xlu0 %1317
    %1321 = vset.pattern.permute.xlu0 0
    %1322 = vperm.xlu0 %1321, %v1292
    %v1323 = vpop.permute.xlu0 %1322
    %1326 = vset.pattern.permute.xlu0 0
    %1327 = vperm.xlu0 %1326, %v1293
    %v1328 = vpop.permute.xlu0 %1327
    %1331 = vset.pattern.permute.xlu0 0
    %1332 = vperm.xlu0 %1331, %v1294
    %v1333 = vpop.permute.xlu0 %1332
    %v1336 = vsel %vm1139, %v1278, 0
    %v1339 = vsel %vm1139, %v1279, 0
    %v1342 = vsel %vm1139, %v1280, 0
    %v1345 = vsel %vm1139, %v1281, 0
    %v1348 = vsel %vm1139, %v1282, 0
    %v1351 = vsel %vm1139, %v1283, 0
    %v1354 = vsel %vm1139, %v1284, 0
    %v1357 = vsel %vm1139, %v1285, 0
    %1359 = vmatprep.subr.mxu0 0.0
    %1360 = vmatpush1.msra.mxu0 0.0
    %1361 = vmatprep.subr.mxu0 0.0
    %1362 = vmatpush1.msra.mxu0 0.0
    %1363 = vmatprep.subr.mxu0 0.0
    %1364 = vmatpush1.msra.mxu0 0.0
    %1365 = vmatprep.subr.mxu0 0.0
    %1366 = vmatpush1.msra.mxu0 0.0
    %1367 = vmatprep.subr.mxu0 0.0
    %1368 = vmatpush1.msra.mxu0 0.0
    %1369 = vmatprep.subr.mxu0 0.0
    %1370 = vmatpush1.msra.mxu0 0.0
    %1371 = vmatprep.subr.mxu0 0.0
    %1372 = vmatpush1.msra.mxu0 0.0
    %1373 = vmatprep.subr.mxu0 0.0
    %1374 = vmatpush1.msra.mxu0 0.0
    %1375 = vmatprep.subr.mxu0 0.0
    %1376 = vmatpush1.msra.mxu0 %v1276
    %1377 = vmatprep.subr.mxu0 0.0
    %1378 = vmatpush1.msra.mxu0 %v1275
    %1379 = vmatprep.subr.mxu0 0.0
    %1380 = vmatpush1.msra.mxu0 %v1274
    %1381 = vmatprep.subr.mxu0 0.0
    %1382 = vmatpush1.msra.mxu0 %v1273
    %1383 = vmatprep.subr.mxu0 0.0
    %1384 = vmatpush1.msra.mxu0 %v1272
    %1385 = vmatprep.subr.mxu0 0.0
    %1386 = vmatpush1.msra.mxu0 %v1271
    %1387 = vmatprep.subr.mxu0 0.0
    %1388 = vmatpush1.msra.mxu0 %v1270
    %1389 = vmatprep.subr.mxu0 0.0
    %1390 = vmatpush1.msra.mxu0 %v1269
    %1391 = vmatprep.subr.mxu0 0.0
    %1392 = vmatpush2.msra.mxu0 0.0
    %1393 = vmatprep.subr.mxu0 0.0
    %1394 = vmatpush2.msra.mxu0 0.0
    %1395 = vmatprep.subr.mxu0 0.0
    %1396 = vmatpush2.msra.mxu0 0.0
    %1397 = vmatprep.subr.mxu0 0.0
    %1398 = vmatpush2.msra.mxu0 0.0
    %1399 = vmatprep.subr.mxu0 0.0
    %1400 = vmatpush2.msra.mxu0 0.0
    %1401 = vmatprep.subr.mxu0 0.0
    %1402 = vmatpush2.msra.mxu0 0.0
    %1403 = vmatprep.subr.mxu0 0.0
    %1404 = vmatpush2.msra.mxu0 0.0
    %1405 = vmatprep.subr.mxu0 0.0
    %1406 = vmatpush2.msra.mxu0 0.0
    %1407 = vmatprep.subr.mxu0 0.0
    %1408 = vmatpush2.msra.mxu0 0.0
    %1409 = vmatprep.subr.mxu0 0.0
    %1410 = vmatpush2.msra.mxu0 0.0
    %1411 = vmatprep.subr.mxu0 0.0
    %1412 = vmatpush2.msra.mxu0 0.0
    %1413 = vmatprep.subr.mxu0 0.0
    %1414 = vmatpush2.msra.mxu0 0.0
    %1415 = vmatprep.subr.mxu0 0.0
    %1416 = vmatpush2.msra.mxu0 0.0
    %1417 = vmatprep.subr.mxu0 0.0
    %1418 = vmatpush2.msra.mxu0 0.0
    %1419 = vmatprep.subr.mxu0 0.0
    %1420 = vmatpush2.msra.mxu0 0.0
    %1421 = vmatprep.subr.mxu0 0.0
    %1422 = vmatpush2.msra.mxu0 0.0
    %1423 = vmatprep.mubr.f32.mxu0 0.0
    %1424 = vmatmul.mubr.f32.gmra.mxu0 %v1336
    %v1425 = vpop.f32.mrf.mxu0
    %v1426 = vadd.f32 %v1298, %v1425
    %v1427 = vpop.f32.mrf.mxu0
    %1428 = vmatprep.mubr.f32.mxu0 0.0
    %1429 = vmatmul.mubr.f32.gmra.mxu0 %v1339
    %v1430 = vpop.f32.mrf.mxu0
    %v1431 = vadd.f32 %v1303, %v1430
    %v1432 = vpop.f32.mrf.mxu0
    %1433 = vmatprep.mubr.f32.mxu0 0.0
    %1434 = vmatmul.mubr.f32.gmra.mxu0 %v1342
    %v1435 = vpop.f32.mrf.mxu0
    %v1436 = vadd.f32 %v1308, %v1435
    %v1437 = vpop.f32.mrf.mxu0
    %1438 = vmatprep.mubr.f32.mxu0 0.0
    %1439 = vmatmul.mubr.f32.gmra.mxu0 %v1345
    %v1440 = vpop.f32.mrf.mxu0
    %v1441 = vadd.f32 %v1313, %v1440
    %v1442 = vpop.f32.mrf.mxu0
    %1443 = vmatprep.mubr.f32.mxu0 0.0
    %1444 = vmatmul.mubr.f32.gmra.mxu0 %v1348
    %v1445 = vpop.f32.mrf.mxu0
    %v1446 = vadd.f32 %v1318, %v1445
    %v1447 = vpop.f32.mrf.mxu0
    %1448 = vmatprep.mubr.f32.mxu0 0.0
    %1449 = vmatmul.mubr.f32.gmra.mxu0 %v1351
    %v1450 = vpop.f32.mrf.mxu0
    %v1451 = vadd.f32 %v1323, %v1450
    %v1452 = vpop.f32.mrf.mxu0
    %1453 = vmatprep.mubr.f32.mxu0 0.0
    %1454 = vmatmul.mubr.f32.gmra.mxu0 %v1354
    %v1455 = vpop.f32.mrf.mxu0
    %v1456 = vadd.f32 %v1328, %v1455
    %v1457 = vpop.f32.mrf.mxu0
    %1458 = vmatprep.mubr.f32.mxu0 0.0
    %1459 = vmatmul.mubr.f32.gmra.mxu0 %v1357
    %v1460 = vpop.f32.mrf.mxu0
    %v1461 = vadd.f32 %v1333, %v1460
    %v1462 = vpop.f32.mrf.mxu0
    %1463 = vdwg.mxu0
    %v1464 = vmax.f32 %v1426, 0.0
    %v1465 = vmax.f32 %v1431, 0.0
    %v1466 = vmax.f32 %v1436, 0.0
    %v1467 = vmax.f32 %v1441, 0.0
    %v1468 = vmax.f32 %v1446, 0.0
    %v1469 = vmax.f32 %v1451, 0.0
    %v1470 = vmax.f32 %v1456, 0.0
    %v1471 = vmax.f32 %v1461, 0.0
    %s1472 = scalar_lea.vmem %s3, 128
    %v1473 = vld [vmem:[%s1472] sm:$0xff]
    %v1474 = vld [vmem:[%s1472 + $0x8] sm:$0xff]
    %v1475 = vld [vmem:[%s1472 + $0x10] sm:$0xff]
    %v1476 = vld [vmem:[%s1472 + $0x18] sm:$0xff]
    %v1477 = vld [vmem:[%s1472 + $0x20] sm:$0xff]
    %v1478 = vld [vmem:[%s1472 + $0x28] sm:$0xff]
    %v1479 = vld [vmem:[%s1472 + $0x30] sm:$0xff]
    %v1480 = vld [vmem:[%s1472 + $0x38] sm:$0xff]
    %s1481 = scalar_lea.vmem %s4, 128
    %v1482 = vld [vmem:[%s1481] sm:$0xff]
    %v1483 = vld [vmem:[%s1481 + $0x8] sm:$0xff]
    %v1484 = vld [vmem:[%s1481 + $0x10] sm:$0xff]
    %v1485 = vld [vmem:[%s1481 + $0x18] sm:$0xff]
    %v1486 = vld [vmem:[%s1481 + $0x20] sm:$0xff]
    %v1487 = vld [vmem:[%s1481 + $0x28] sm:$0xff]
    %v1488 = vld [vmem:[%s1481 + $0x30] sm:$0xff]
    %v1489 = vld [vmem:[%s1481 + $0x38] sm:$0xff]
    %1491 = vset.pattern.permute.xlu0 0
    %1492 = vperm.xlu0 %1491, %v1482
    %v1493 = vpop.permute.xlu0 %1492
    %1496 = vset.pattern.permute.xlu0 0
    %1497 = vperm.xlu0 %1496, %v1483
    %v1498 = vpop.permute.xlu0 %1497
    %1501 = vset.pattern.permute.xlu0 0
    %1502 = vperm.xlu0 %1501, %v1484
    %v1503 = vpop.permute.xlu0 %1502
    %1506 = vset.pattern.permute.xlu0 0
    %1507 = vperm.xlu0 %1506, %v1485
    %v1508 = vpop.permute.xlu0 %1507
    %1511 = vset.pattern.permute.xlu0 0
    %1512 = vperm.xlu0 %1511, %v1486
    %v1513 = vpop.permute.xlu0 %1512
    %1516 = vset.pattern.permute.xlu0 0
    %1517 = vperm.xlu0 %1516, %v1487
    %v1518 = vpop.permute.xlu0 %1517
    %1521 = vset.pattern.permute.xlu0 0
    %1522 = vperm.xlu0 %1521, %v1488
    %v1523 = vpop.permute.xlu0 %1522
    %1526 = vset.pattern.permute.xlu0 0
    %1527 = vperm.xlu0 %1526, %v1489
    %v1528 = vpop.permute.xlu0 %1527
    %v1531 = vsel %vm1139, %v1473, 0
    %v1534 = vsel %vm1139, %v1474, 0
    %v1537 = vsel %vm1139, %v1475, 0
    %v1540 = vsel %vm1139, %v1476, 0
    %v1543 = vsel %vm1139, %v1477, 0
    %v1546 = vsel %vm1139, %v1478, 0
    %v1549 = vsel %vm1139, %v1479, 0
    %v1552 = vsel %vm1139, %v1480, 0
    %1554 = vmatprep.subr.mxu0 0.0
    %1555 = vmatpush1.msra.mxu0 0.0
    %1556 = vmatprep.subr.mxu0 0.0
    %1557 = vmatpush1.msra.mxu0 0.0
    %1558 = vmatprep.subr.mxu0 0.0
    %1559 = vmatpush1.msra.mxu0 0.0
    %1560 = vmatprep.subr.mxu0 0.0
    %1561 = vmatpush1.msra.mxu0 0.0
    %1562 = vmatprep.subr.mxu0 0.0
    %1563 = vmatpush1.msra.mxu0 0.0
    %1564 = vmatprep.subr.mxu0 0.0
    %1565 = vmatpush1.msra.mxu0 0.0
    %1566 = vmatprep.subr.mxu0 0.0
    %1567 = vmatpush1.msra.mxu0 0.0
    %1568 = vmatprep.subr.mxu0 0.0
    %1569 = vmatpush1.msra.mxu0 0.0
    %1570 = vmatprep.subr.mxu0 0.0
    %1571 = vmatpush1.msra.mxu0 %v1471
    %1572 = vmatprep.subr.mxu0 0.0
    %1573 = vmatpush1.msra.mxu0 %v1470
    %1574 = vmatprep.subr.mxu0 0.0
    %1575 = vmatpush1.msra.mxu0 %v1469
    %1576 = vmatprep.subr.mxu0 0.0
    %1577 = vmatpush1.msra.mxu0 %v1468
    %1578 = vmatprep.subr.mxu0 0.0
    %1579 = vmatpush1.msra.mxu0 %v1467
    %1580 = vmatprep.subr.mxu0 0.0
    %1581 = vmatpush1.msra.mxu0 %v1466
    %1582 = vmatprep.subr.mxu0 0.0
    %1583 = vmatpush1.msra.mxu0 %v1465
    %1584 = vmatprep.subr.mxu0 0.0
    %1585 = vmatpush1.msra.mxu0 %v1464
    %1586 = vmatprep.subr.mxu0 0.0
    %1587 = vmatpush2.msra.mxu0 0.0
    %1588 = vmatprep.subr.mxu0 0.0
    %1589 = vmatpush2.msra.mxu0 0.0
    %1590 = vmatprep.subr.mxu0 0.0
    %1591 = vmatpush2.msra.mxu0 0.0
    %1592 = vmatprep.subr.mxu0 0.0
    %1593 = vmatpush2.msra.mxu0 0.0
    %1594 = vmatprep.subr.mxu0 0.0
    %1595 = vmatpush2.msra.mxu0 0.0
    %1596 = vmatprep.subr.mxu0 0.0
    %1597 = vmatpush2.msra.mxu0 0.0
    %1598 = vmatprep.subr.mxu0 0.0
    %1599 = vmatpush2.msra.mxu0 0.0
    %1600 = vmatprep.subr.mxu0 0.0
    %1601 = vmatpush2.msra.mxu0 0.0
    %1602 = vmatprep.subr.mxu0 0.0
    %1603 = vmatpush2.msra.mxu0 0.0
    %1604 = vmatprep.subr.mxu0 0.0
    %1605 = vmatpush2.msra.mxu0 0.0
    %1606 = vmatprep.subr.mxu0 0.0
    %1607 = vmatpush2.msra.mxu0 0.0
    %1608 = vmatprep.subr.mxu0 0.0
    %1609 = vmatpush2.msra.mxu0 0.0
    %1610 = vmatprep.subr.mxu0 0.0
    %1611 = vmatpush2.msra.mxu0 0.0
    %1612 = vmatprep.subr.mxu0 0.0
    %1613 = vmatpush2.msra.mxu0 0.0
    %1614 = vmatprep.subr.mxu0 0.0
    %1615 = vmatpush2.msra.mxu0 0.0
    %1616 = vmatprep.subr.mxu0 0.0
    %1617 = vmatpush2.msra.mxu0 0.0
    %1618 = vmatprep.mubr.f32.mxu0 0.0
    %1619 = vmatmul.mubr.f32.gmra.mxu0 %v1531
    %v1620 = vpop.f32.mrf.mxu0
    %v1621 = vadd.f32 %v1493, %v1620
    %v1622 = vpop.f32.mrf.mxu0
    %1623 = vmatprep.mubr.f32.mxu0 0.0
    %1624 = vmatmul.mubr.f32.gmra.mxu0 %v1534
    %v1625 = vpop.f32.mrf.mxu0
    %v1626 = vadd.f32 %v1498, %v1625
    %v1627 = vpop.f32.mrf.mxu0
    %1628 = vmatprep.mubr.f32.mxu0 0.0
    %1629 = vmatmul.mubr.f32.gmra.mxu0 %v1537
    %v1630 = vpop.f32.mrf.mxu0
    %v1631 = vadd.f32 %v1503, %v1630
    %v1632 = vpop.f32.mrf.mxu0
    %1633 = vmatprep.mubr.f32.mxu0 0.0
    %1634 = vmatmul.mubr.f32.gmra.mxu0 %v1540
    %v1635 = vpop.f32.mrf.mxu0
    %v1636 = vadd.f32 %v1508, %v1635
    %v1637 = vpop.f32.mrf.mxu0
    %1638 = vmatprep.mubr.f32.mxu0 0.0
    %1639 = vmatmul.mubr.f32.gmra.mxu0 %v1543
    %v1640 = vpop.f32.mrf.mxu0
    %v1641 = vadd.f32 %v1513, %v1640
    %v1642 = vpop.f32.mrf.mxu0
    %1643 = vmatprep.mubr.f32.mxu0 0.0
    %1644 = vmatmul.mubr.f32.gmra.mxu0 %v1546
    %v1645 = vpop.f32.mrf.mxu0
    %v1646 = vadd.f32 %v1518, %v1645
    %v1647 = vpop.f32.mrf.mxu0
    %1648 = vmatprep.mubr.f32.mxu0 0.0
    %1649 = vmatmul.mubr.f32.gmra.mxu0 %v1549
    %v1650 = vpop.f32.mrf.mxu0
    %v1651 = vadd.f32 %v1523, %v1650
    %v1652 = vpop.f32.mrf.mxu0
    %1653 = vmatprep.mubr.f32.mxu0 0.0
    %1654 = vmatmul.mubr.f32.gmra.mxu0 %v1552
    %v1655 = vpop.f32.mrf.mxu0
    %v1656 = vadd.f32 %v1528, %v1655
    %v1657 = vpop.f32.mrf.mxu0
    %1658 = vdwg.mxu0
    %v1659 = vmax.f32 %v1621, 0.0
    %v1660 = vmax.f32 %v1626, 0.0
    %v1661 = vmax.f32 %v1631, 0.0
    %v1662 = vmax.f32 %v1636, 0.0
    %v1663 = vmax.f32 %v1641, 0.0
    %v1664 = vmax.f32 %v1646, 0.0
    %v1665 = vmax.f32 %v1651, 0.0
    %v1666 = vmax.f32 %v1656, 0.0
    %s1667 = scalar_lea.vmem %s3, 192
    %v1668 = vld [vmem:[%s1667] sm:$0xff]
    %v1669 = vld [vmem:[%s1667 + $0x8] sm:$0xff]
    %v1670 = vld [vmem:[%s1667 + $0x10] sm:$0xff]
    %v1671 = vld [vmem:[%s1667 + $0x18] sm:$0xff]
    %v1672 = vld [vmem:[%s1667 + $0x20] sm:$0xff]
    %v1673 = vld [vmem:[%s1667 + $0x28] sm:$0xff]
    %v1674 = vld [vmem:[%s1667 + $0x30] sm:$0xff]
    %v1675 = vld [vmem:[%s1667 + $0x38] sm:$0xff]
    %s1676 = scalar_lea.vmem %s4, 192
    %v1677 = vld [vmem:[%s1676] sm:$0xff]
    %v1678 = vld [vmem:[%s1676 + $0x8] sm:$0xff]
    %v1679 = vld [vmem:[%s1676 + $0x10] sm:$0xff]
    %v1680 = vld [vmem:[%s1676 + $0x18] sm:$0xff]
    %v1681 = vld [vmem:[%s1676 + $0x20] sm:$0xff]
    %v1682 = vld [vmem:[%s1676 + $0x28] sm:$0xff]
    %v1683 = vld [vmem:[%s1676 + $0x30] sm:$0xff]
    %v1684 = vld [vmem:[%s1676 + $0x38] sm:$0xff]
    %1686 = vset.pattern.permute.xlu0 0
    %1687 = vperm.xlu0 %1686, %v1677
    %v1688 = vpop.permute.xlu0 %1687
    %1691 = vset.pattern.permute.xlu0 0
    %1692 = vperm.xlu0 %1691, %v1678
    %v1693 = vpop.permute.xlu0 %1692
    %1696 = vset.pattern.permute.xlu0 0
    %1697 = vperm.xlu0 %1696, %v1679
    %v1698 = vpop.permute.xlu0 %1697
    %1701 = vset.pattern.permute.xlu0 0
    %1702 = vperm.xlu0 %1701, %v1680
    %v1703 = vpop.permute.xlu0 %1702
    %1706 = vset.pattern.permute.xlu0 0
    %1707 = vperm.xlu0 %1706, %v1681
    %v1708 = vpop.permute.xlu0 %1707
    %1711 = vset.pattern.permute.xlu0 0
    %1712 = vperm.xlu0 %1711, %v1682
    %v1713 = vpop.permute.xlu0 %1712
    %1716 = vset.pattern.permute.xlu0 0
    %1717 = vperm.xlu0 %1716, %v1683
    %v1718 = vpop.permute.xlu0 %1717
    %1721 = vset.pattern.permute.xlu0 0
    %1722 = vperm.xlu0 %1721, %v1684
    %v1723 = vpop.permute.xlu0 %1722
    %v1726 = vsel %vm1139, %v1668, 0
    %v1729 = vsel %vm1139, %v1669, 0
    %v1732 = vsel %vm1139, %v1670, 0
    %v1735 = vsel %vm1139, %v1671, 0
    %v1738 = vsel %vm1139, %v1672, 0
    %v1741 = vsel %vm1139, %v1673, 0
    %v1744 = vsel %vm1139, %v1674, 0
    %v1747 = vsel %vm1139, %v1675, 0
    %1749 = vmatprep.subr.mxu0 0.0
    %1750 = vmatpush1.msra.mxu0 0.0
    %1751 = vmatprep.subr.mxu0 0.0
    %1752 = vmatpush1.msra.mxu0 0.0
    %1753 = vmatprep.subr.mxu0 0.0
    %1754 = vmatpush1.msra.mxu0 0.0
    %1755 = vmatprep.subr.mxu0 0.0
    %1756 = vmatpush1.msra.mxu0 0.0
    %1757 = vmatprep.subr.mxu0 0.0
    %1758 = vmatpush1.msra.mxu0 0.0
    %1759 = vmatprep.subr.mxu0 0.0
    %1760 = vmatpush1.msra.mxu0 0.0
    %1761 = vmatprep.subr.mxu0 0.0
    %1762 = vmatpush1.msra.mxu0 0.0
    %1763 = vmatprep.subr.mxu0 0.0
    %1764 = vmatpush1.msra.mxu0 0.0
    %1765 = vmatprep.subr.mxu0 0.0
    %1766 = vmatpush1.msra.mxu0 %v1666
    %1767 = vmatprep.subr.mxu0 0.0
    %1768 = vmatpush1.msra.mxu0 %v1665
    %1769 = vmatprep.subr.mxu0 0.0
    %1770 = vmatpush1.msra.mxu0 %v1664
    %1771 = vmatprep.subr.mxu0 0.0
    %1772 = vmatpush1.msra.mxu0 %v1663
    %1773 = vmatprep.subr.mxu0 0.0
    %1774 = vmatpush1.msra.mxu0 %v1662
    %1775 = vmatprep.subr.mxu0 0.0
    %1776 = vmatpush1.msra.mxu0 %v1661
    %1777 = vmatprep.subr.mxu0 0.0
    %1778 = vmatpush1.msra.mxu0 %v1660
    %1779 = vmatprep.subr.mxu0 0.0
    %1780 = vmatpush1.msra.mxu0 %v1659
    %1781 = vmatprep.subr.mxu0 0.0
    %1782 = vmatpush2.msra.mxu0 0.0
    %1783 = vmatprep.subr.mxu0 0.0
    %1784 = vmatpush2.msra.mxu0 0.0
    %1785 = vmatprep.subr.mxu0 0.0
    %1786 = vmatpush2.msra.mxu0 0.0
    %1787 = vmatprep.subr.mxu0 0.0
    %1788 = vmatpush2.msra.mxu0 0.0
    %1789 = vmatprep.subr.mxu0 0.0
    %1790 = vmatpush2.msra.mxu0 0.0
    %1791 = vmatprep.subr.mxu0 0.0
    %1792 = vmatpush2.msra.mxu0 0.0
    %1793 = vmatprep.subr.mxu0 0.0
    %1794 = vmatpush2.msra.mxu0 0.0
    %1795 = vmatprep.subr.mxu0 0.0
    %1796 = vmatpush2.msra.mxu0 0.0
    %1797 = vmatprep.subr.mxu0 0.0
    %1798 = vmatpush2.msra.mxu0 0.0
    %1799 = vmatprep.subr.mxu0 0.0
    %1800 = vmatpush2.msra.mxu0 0.0
    %1801 = vmatprep.subr.mxu0 0.0
    %1802 = vmatpush2.msra.mxu0 0.0
    %1803 = vmatprep.subr.mxu0 0.0
    %1804 = vmatpush2.msra.mxu0 0.0
    %1805 = vmatprep.subr.mxu0 0.0
    %1806 = vmatpush2.msra.mxu0 0.0
    %1807 = vmatprep.subr.mxu0 0.0
    %1808 = vmatpush2.msra.mxu0 0.0
    %1809 = vmatprep.subr.mxu0 0.0
    %1810 = vmatpush2.msra.mxu0 0.0
    %1811 = vmatprep.subr.mxu0 0.0
    %1812 = vmatpush2.msra.mxu0 0.0
    %1813 = vmatprep.mubr.f32.mxu0 0.0
    %1814 = vmatmul.mubr.f32.gmra.mxu0 %v1726
    %v1815 = vpop.f32.mrf.mxu0
    %v1816 = vadd.f32 %v1688, %v1815
    %v1817 = vpop.f32.mrf.mxu0
    %1818 = vmatprep.mubr.f32.mxu0 0.0
    %1819 = vmatmul.mubr.f32.gmra.mxu0 %v1729
    %v1820 = vpop.f32.mrf.mxu0
    %v1821 = vadd.f32 %v1693, %v1820
    %v1822 = vpop.f32.mrf.mxu0
    %1823 = vmatprep.mubr.f32.mxu0 0.0
    %1824 = vmatmul.mubr.f32.gmra.mxu0 %v1732
    %v1825 = vpop.f32.mrf.mxu0
    %v1826 = vadd.f32 %v1698, %v1825
    %v1827 = vpop.f32.mrf.mxu0
    %1828 = vmatprep.mubr.f32.mxu0 0.0
    %1829 = vmatmul.mubr.f32.gmra.mxu0 %v1735
    %v1830 = vpop.f32.mrf.mxu0
    %v1831 = vadd.f32 %v1703, %v1830
    %v1832 = vpop.f32.mrf.mxu0
    %1833 = vmatprep.mubr.f32.mxu0 0.0
    %1834 = vmatmul.mubr.f32.gmra.mxu0 %v1738
    %v1835 = vpop.f32.mrf.mxu0
    %v1836 = vadd.f32 %v1708, %v1835
    %v1837 = vpop.f32.mrf.mxu0
    %1838 = vmatprep.mubr.f32.mxu0 0.0
    %1839 = vmatmul.mubr.f32.gmra.mxu0 %v1741
    %v1840 = vpop.f32.mrf.mxu0
    %v1841 = vadd.f32 %v1713, %v1840
    %v1842 = vpop.f32.mrf.mxu0
    %1843 = vmatprep.mubr.f32.mxu0 0.0
    %1844 = vmatmul.mubr.f32.gmra.mxu0 %v1744
    %v1845 = vpop.f32.mrf.mxu0
    %v1846 = vadd.f32 %v1718, %v1845
    %v1847 = vpop.f32.mrf.mxu0
    %1848 = vmatprep.mubr.f32.mxu0 0.0
    %1849 = vmatmul.mubr.f32.gmra.mxu0 %v1747
    %v1850 = vpop.f32.mrf.mxu0
    %v1851 = vadd.f32 %v1723, %v1850
    %v1852 = vpop.f32.mrf.mxu0
    %1853 = vdwg.mxu0
    %v1854 = vmax.f32 %v1816, 0.0
    %v1855 = vmax.f32 %v1821, 0.0
    %v1856 = vmax.f32 %v1826, 0.0
    %v1857 = vmax.f32 %v1831, 0.0
    %v1858 = vmax.f32 %v1836, 0.0
    %v1859 = vmax.f32 %v1841, 0.0
    %v1860 = vmax.f32 %v1846, 0.0
    %v1861 = vmax.f32 %v1851, 0.0
    %1863 = vset.pattern.permute.xlu0 0
    %1864 = vperm.xlu0 %1863, %v44
    %v1865 = vpop.permute.xlu0 %1864
    %v1868 = vsel %vm1139, %v43, 0
    %1870 = vmatprep.subr.mxu0 0.0
    %1871 = vmatpush1.msra.mxu0 0.0
    %1872 = vmatprep.subr.mxu0 0.0
    %1873 = vmatpush1.msra.mxu0 0.0
    %1874 = vmatprep.subr.mxu0 0.0
    %1875 = vmatpush1.msra.mxu0 0.0
    %1876 = vmatprep.subr.mxu0 0.0
    %1877 = vmatpush1.msra.mxu0 0.0
    %1878 = vmatprep.subr.mxu0 0.0
    %1879 = vmatpush1.msra.mxu0 0.0
    %1880 = vmatprep.subr.mxu0 0.0
    %1881 = vmatpush1.msra.mxu0 0.0
    %1882 = vmatprep.subr.mxu0 0.0
    %1883 = vmatpush1.msra.mxu0 0.0
    %1884 = vmatprep.subr.mxu0 0.0
    %1885 = vmatpush1.msra.mxu0 0.0
    %1886 = vmatprep.subr.mxu0 0.0
    %1887 = vmatpush1.msra.mxu0 %v1861
    %1888 = vmatprep.subr.mxu0 0.0
    %1889 = vmatpush1.msra.mxu0 %v1860
    %1890 = vmatprep.subr.mxu0 0.0
    %1891 = vmatpush1.msra.mxu0 %v1859
    %1892 = vmatprep.subr.mxu0 0.0
    %1893 = vmatpush1.msra.mxu0 %v1858
    %1894 = vmatprep.subr.mxu0 0.0
    %1895 = vmatpush1.msra.mxu0 %v1857
    %1896 = vmatprep.subr.mxu0 0.0
    %1897 = vmatpush1.msra.mxu0 %v1856
    %1898 = vmatprep.subr.mxu0 0.0
    %1899 = vmatpush1.msra.mxu0 %v1855
    %1900 = vmatprep.subr.mxu0 0.0
    %1901 = vmatpush1.msra.mxu0 %v1854
    %1902 = vmatprep.subr.mxu0 0.0
    %1903 = vmatpush2.msra.mxu0 0.0
    %1904 = vmatprep.subr.mxu0 0.0
    %1905 = vmatpush2.msra.mxu0 0.0
    %1906 = vmatprep.subr.mxu0 0.0
    %1907 = vmatpush2.msra.mxu0 0.0
    %1908 = vmatprep.subr.mxu0 0.0
    %1909 = vmatpush2.msra.mxu0 0.0
    %1910 = vmatprep.subr.mxu0 0.0
    %1911 = vmatpush2.msra.mxu0 0.0
    %1912 = vmatprep.subr.mxu0 0.0
    %1913 = vmatpush2.msra.mxu0 0.0
    %1914 = vmatprep.subr.mxu0 0.0
    %1915 = vmatpush2.msra.mxu0 0.0
    %1916 = vmatprep.subr.mxu0 0.0
    %1917 = vmatpush2.msra.mxu0 0.0
    %1918 = vmatprep.subr.mxu0 0.0
    %1919 = vmatpush2.msra.mxu0 0.0
    %1920 = vmatprep.subr.mxu0 0.0
    %1921 = vmatpush2.msra.mxu0 0.0
    %1922 = vmatprep.subr.mxu0 0.0
    %1923 = vmatpush2.msra.mxu0 0.0
    %1924 = vmatprep.subr.mxu0 0.0
    %1925 = vmatpush2.msra.mxu0 0.0
    %1926 = vmatprep.subr.mxu0 0.0
    %1927 = vmatpush2.msra.mxu0 0.0
    %1928 = vmatprep.subr.mxu0 0.0
    %1929 = vmatpush2.msra.mxu0 0.0
    %1930 = vmatprep.subr.mxu0 0.0
    %1931 = vmatpush2.msra.mxu0 0.0
    %1932 = vmatprep.subr.mxu0 0.0
    %1933 = vmatpush2.msra.mxu0 0.0
    %1934 = vmatprep.mubr.f32.mxu0 0.0
    %1935 = vmatmul.mubr.f32.gmra.mxu0 %v1868
    %v1936 = vpop.f32.mrf.mxu0
    %v1937 = vadd.f32 %v1865, %v1936
    %v1938 = vpop.f32.mrf.mxu0
    %1939 = vdwg.mxu0
    %v1940 = vand.u32 2147483647, %v46
    %vm1941 = vcmp.le.f32.partialorder %v1940, 0.7853982
    %vm1942 = vcmp.lt.s32.totalorder %v46, 0
    %v1943 = vand.u32 %v46, 2139095040
    %v1944 = vshrl.u32 %v1943, 23
    %v1945 = vsub.s32 %v1944, 127
    %v1946 = vand.u32 2147483647, %v46
    %v1947 = vand.u32 %v1946, 8388607
    %v1948 = vor.u32 %v1947, 8388608
    %v1949 = vsub.s32 0, %v1948
    %v1950 = vadd.s32 %v1945, 1
    %vm1951 = vcmp.gt.s32.totalorder %v1950, 0
    %v1952 = vsel %vm1951, %v1950, 0
    %v1953 = vshrl.u32 %v1952, 5
    %v1954 = vand.u32 %v1952, 31
    %v1955 = vsub.s32 32, %v1954
    %v1956 = vshrl.u32 683565275, %v1955
    %v1957 = vshll.u32 683565275, %v1954
    %v1958 = vshrl.u32 2475754826, %v1955
    %v1959 = vor.u32 %v1957, %v1958
    %v1960 = vshll.u32 2475754826, %v1954
    %v1961 = vshrl.u32 2131351028, %v1955
    %v1962 = vor.u32 %v1960, %v1961
    %v1963 = vshll.u32 2131351028, %v1954
    %v1964 = vshrl.u32 2102212464, %v1955
    %v1965 = vor.u32 %v1963, %v1964
    %v1966 = vshll.u32 2102212464, %v1954
    %v1967 = vshrl.u32 920167782, %v1955
    %v1968 = vor.u32 %v1966, %v1967
    %v1969 = vshll.u32 920167782, %v1954
    %v1970 = vshrl.u32 1326507024, %v1955
    %v1971 = vor.u32 %v1969, %v1970
    %vm1972 = vcmp.lt.s32.totalorder %v1953, 1
    %vm1973 = vcmp.lt.s32.totalorder %v1953, 2
    %vm1974 = vcmp.lt.s32.totalorder %v1953, 3
    %vm1975 = vcmp.lt.s32.totalorder %v1953, 4
    %v1976 = vsel %vm1972, %v1956, %v1959
    %v1977 = vsel %vm1975, %v1965, 2102212464
    %v1978 = vsel %vm1974, %v1962, %v1977
    %v1979 = vsel %vm1973, %v1976, %v1978
    %v1980 = vsel %vm1972, %v1959, %v1962
    %v1981 = vsel %vm1975, %v1968, 920167782
    %v1982 = vsel %vm1974, %v1965, %v1981
    %v1983 = vsel %vm1973, %v1980, %v1982
    %v1984 = vsel %vm1972, %v1962, %v1965
    %v1985 = vsel %vm1975, %v1971, 1326507024
    %v1986 = vsel %vm1974, %v1968, %v1985
    %v1987 = vsel %vm1973, %v1984, %v1986
    %v1988 = vshll.u32 %v1948, 8
    %v1989 = vmul.u32.u64.compose %v1988, %v1987
    %v1990 = vextract.low.u32 %v1989
    %v1991 = vextract.high.u32 %v1989
    %v1992 = vmul.u32.u64.compose %v1988, %v1983
    %v1993 = vextract.low.u32 %v1992
    %v1994 = vextract.high.u32 %v1992
    %v1995 = vmul.u32 %v1988, %v1979
    %v1996 = vadd.s32 %v1991, %v1993
    %vm1997 = vc.u32 %v1991, %v1993
    %v1998 = vadd.s32 %v1994, 1
    %v1999 = vsel %vm1997, %v1998, %v1994
    %v2000 = vadd.s32 %v1995, %v1999
    %v2001 = vadd.s32 %v2000, 536870912
    %v2002 = vshrl.u32 %v2001, 30
    %v2003 = vshll.u32 %v2002, 30
    %v2004 = vsub.s32 %v2000, %v2003
    %vm2005 = vcmp.lt.s32.totalorder %v2004, 0
    %v2006 = vsub.s32 0, %v2004
    %v2007 = vsel %vm2005, %v2006, %v2004
    %v2008 = vclz %v2007
    %v2009 = vsub.s32 %v2008, 2
    %vm2010 = vcmp.gt.s32.totalorder 0, %v2009
    %v2011 = vsel %vm2010, 0, %v2009
    %v2012 = vsub.s32 32, %v2011
    %v2013 = vshll.u32 %v2004, %v2011
    %v2014 = vshrl.u32 %v1996, %v2012
    %v2015 = vor.u32 %v2013, %v2014
    %v2016 = vsub.s32 4294967266, %v2011
    %v2017 = vadd.s32 %v2016, 127
    %v2018 = vshll.u32 %v2017, 23
    %v2019 = vor.u32 4788187, %v2018
    %v2020 = vand.u32 2147483647, %v2019
    %v2022 = vcvt.s32.f32 %v2015
    %v2023 = vmul.f32 %v2022, %v2020
    %v2024 = vxor.u32 %v2023, 2147483648
    %v2025 = vsel %vm1942, %v2024, %v2023
    %v2026 = vsub.s32 4, %v2002
    %v2027 = vsel %vm1942, %v2026, %v2002
    %v2028 = vsel %vm1941, %v46, %v2025
    %v2029 = vsel %vm1941, 0, %v2027
    %v2030 = vcosq.f32.pop %v2028
    %v2031 = vsinq.f32.pop %v2028
    %vm2032 = vweird.f32 %v46
    %v2033 = vand.u32 %v2029, 3
    %vm2034 = vcmp.lt.s32.totalorder %v2033, 2
    %vm2035 = vcmp.eq.s32.totalorder %v2033, 0
    %v2036 = vxor.u32 %v2031, 2147483648
    %v2037 = vsel %vm2035, %v2030, %v2036
    %vm2038 = vcmp.eq.s32.totalorder %v2033, 2
    %v2039 = vxor.u32 %v2030, 2147483648
    %v2040 = vsel %vm2038, %v2039, %v2031
    %v2041 = vsel %vm2034, %v2037, %v2040
    %v2042 = vsel %vm2032, nan, %v2041
    %v2043 = vand.u32 2147483647, %v46
    %vm2044 = vcmp.le.f32.partialorder %v2043, 0.7853982
    %vm2045 = vcmp.lt.s32.totalorder %v46, 0
    %v2046 = vand.u32 %v46, 2139095040
    %v2047 = vshrl.u32 %v2046, 23
    %v2048 = vsub.s32 %v2047, 127
    %v2049 = vand.u32 2147483647, %v46
    %v2050 = vand.u32 %v2049, 8388607
    %v2051 = vor.u32 %v2050, 8388608
    %v2052 = vsub.s32 0, %v2051
    %v2053 = vadd.s32 %v2048, 1
    %vm2054 = vcmp.gt.s32.totalorder %v2053, 0
    %v2055 = vsel %vm2054, %v2053, 0
    %v2056 = vshrl.u32 %v2055, 5
    %v2057 = vand.u32 %v2055, 31
    %v2058 = vsub.s32 32, %v2057
    %v2059 = vshrl.u32 683565275, %v2058
    %v2060 = vshll.u32 683565275, %v2057
    %v2061 = vshrl.u32 2475754826, %v2058
    %v2062 = vor.u32 %v2060, %v2061
    %v2063 = vshll.u32 2475754826, %v2057
    %v2064 = vshrl.u32 2131351028, %v2058
    %v2065 = vor.u32 %v2063, %v2064
    %v2066 = vshll.u32 2131351028, %v2057
    %v2067 = vshrl.u32 2102212464, %v2058
    %v2068 = vor.u32 %v2066, %v2067
    %v2069 = vshll.u32 2102212464, %v2057
    %v2070 = vshrl.u32 920167782, %v2058
    %v2071 = vor.u32 %v2069, %v2070
    %v2072 = vshll.u32 920167782, %v2057
    %v2073 = vshrl.u32 1326507024, %v2058
    %v2074 = vor.u32 %v2072, %v2073
    %vm2075 = vcmp.lt.s32.totalorder %v2056, 1
    %vm2076 = vcmp.lt.s32.totalorder %v2056, 2
    %vm2077 = vcmp.lt.s32.totalorder %v2056, 3
    %vm2078 = vcmp.lt.s32.totalorder %v2056, 4
    %v2079 = vsel %vm2075, %v2059, %v2062
    %v2080 = vsel %vm2078, %v2068, 2102212464
    %v2081 = vsel %vm2077, %v2065, %v2080
    %v2082 = vsel %vm2076, %v2079, %v2081
    %v2083 = vsel %vm2075, %v2062, %v2065
    %v2084 = vsel %vm2078, %v2071, 920167782
    %v2085 = vsel %vm2077, %v2068, %v2084
    %v2086 = vsel %vm2076, %v2083, %v2085
    %v2087 = vsel %vm2075, %v2065, %v2068
    %v2088 = vsel %vm2078, %v2074, 1326507024
    %v2089 = vsel %vm2077, %v2071, %v2088
    %v2090 = vsel %vm2076, %v2087, %v2089
    %v2091 = vshll.u32 %v2051, 8
    %v2092 = vmul.u32.u64.compose %v2091, %v2090
    %v2093 = vextract.low.u32 %v2092
    %v2094 = vextract.high.u32 %v2092
    %v2095 = vmul.u32.u64.compose %v2091, %v2086
    %v2096 = vextract.low.u32 %v2095
    %v2097 = vextract.high.u32 %v2095
    %v2098 = vmul.u32 %v2091, %v2082
    %v2099 = vadd.s32 %v2094, %v2096
    %vm2100 = vc.u32 %v2094, %v2096
    %v2101 = vadd.s32 %v2097, 1
    %v2102 = vsel %vm2100, %v2101, %v2097
    %v2103 = vadd.s32 %v2098, %v2102
    %v2104 = vadd.s32 %v2103, 536870912
    %v2105 = vshrl.u32 %v2104, 30
    %v2106 = vshll.u32 %v2105, 30
    %v2107 = vsub.s32 %v2103, %v2106
    %vm2108 = vcmp.lt.s32.totalorder %v2107, 0
    %v2109 = vsub.s32 0, %v2107
    %v2110 = vsel %vm2108, %v2109, %v2107
    %v2111 = vclz %v2110
    %v2112 = vsub.s32 %v2111, 2
    %vm2113 = vcmp.gt.s32.totalorder 0, %v2112
    %v2114 = vsel %vm2113, 0, %v2112
    %v2115 = vsub.s32 32, %v2114
    %v2116 = vshll.u32 %v2107, %v2114
    %v2117 = vshrl.u32 %v2099, %v2115
    %v2118 = vor.u32 %v2116, %v2117
    %v2119 = vsub.s32 4294967266, %v2114
    %v2120 = vadd.s32 %v2119, 127
    %v2121 = vshll.u32 %v2120, 23
    %v2122 = vor.u32 4788187, %v2121
    %v2123 = vand.u32 2147483647, %v2122
    %v2125 = vcvt.s32.f32 %v2118
    %v2126 = vmul.f32 %v2125, %v2123
    %v2127 = vxor.u32 %v2126, 2147483648
    %v2128 = vsel %vm2045, %v2127, %v2126
    %v2129 = vsub.s32 4, %v2105
    %v2130 = vsel %vm2045, %v2129, %v2105
    %v2131 = vsel %vm2044, %v46, %v2128
    %v2132 = vsel %vm2044, 0, %v2130
    %v2133 = vcosq.f32.pop %v2131
    %v2134 = vsinq.f32.pop %v2131
    %vm2135 = vweird.f32 %v46
    %v2136 = vadd.s32 %v2132, 3
    %v2137 = vand.u32 %v2136, 3
    %vm2138 = vcmp.lt.s32.totalorder %v2137, 2
    %vm2139 = vcmp.eq.s32.totalorder %v2137, 0
    %v2140 = vxor.u32 %v2134, 2147483648
    %v2141 = vsel %vm2139, %v2133, %v2140
    %vm2142 = vcmp.eq.s32.totalorder %v2137, 2
    %v2143 = vxor.u32 %v2133, 2147483648
    %v2144 = vsel %vm2142, %v2143, %v2134
    %v2145 = vsel %vm2138, %v2141, %v2144
    %v2146 = vsel %vm2135, nan, %v2145
    %v2147 = vmul.f32 %v46, 6.3496046
    %v2148 = vand.u32 2147483647, %v2147
    %vm2149 = vcmp.le.f32.partialorder %v2148, 0.7853982
    %vm2150 = vcmp.lt.s32.totalorder %v2147, 0
    %v2151 = vand.u32 %v2147, 2139095040
    %v2152 = vshrl.u32 %v2151, 23
    %v2153 = vsub.s32 %v2152, 127
    %v2154 = vand.u32 2147483647, %v2147
    %v2155 = vand.u32 %v2154, 8388607
    %v2156 = vor.u32 %v2155, 8388608
    %v2157 = vsub.s32 0, %v2156
    %v2158 = vadd.s32 %v2153, 1
    %vm2159 = vcmp.gt.s32.totalorder %v2158, 0
    %v2160 = vsel %vm2159, %v2158, 0
    %v2161 = vshrl.u32 %v2160, 5
    %v2162 = vand.u32 %v2160, 31
    %v2163 = vsub.s32 32, %v2162
    %v2164 = vshrl.u32 683565275, %v2163
    %v2165 = vshll.u32 683565275, %v2162
    %v2166 = vshrl.u32 2475754826, %v2163
    %v2167 = vor.u32 %v2165, %v2166
    %v2168 = vshll.u32 2475754826, %v2162
    %v2169 = vshrl.u32 2131351028, %v2163
    %v2170 = vor.u32 %v2168, %v2169
    %v2171 = vshll.u32 2131351028, %v2162
    %v2172 = vshrl.u32 2102212464, %v2163
    %v2173 = vor.u32 %v2171, %v2172
    %v2174 = vshll.u32 2102212464, %v2162
    %v2175 = vshrl.u32 920167782, %v2163
    %v2176 = vor.u32 %v2174, %v2175
    %v2177 = vshll.u32 920167782, %v2162
    %v2178 = vshrl.u32 1326507024, %v2163
    %v2179 = vor.u32 %v2177, %v2178
    %vm2180 = vcmp.lt.s32.totalorder %v2161, 1
    %vm2181 = vcmp.lt.s32.totalorder %v2161, 2
    %vm2182 = vcmp.lt.s32.totalorder %v2161, 3
    %vm2183 = vcmp.lt.s32.totalorder %v2161, 4
    %v2184 = vsel %vm2180, %v2164, %v2167
    %v2185 = vsel %vm2183, %v2173, 2102212464
    %v2186 = vsel %vm2182, %v2170, %v2185
    %v2187 = vsel %vm2181, %v2184, %v2186
    %v2188 = vsel %vm2180, %v2167, %v2170
    %v2189 = vsel %vm2183, %v2176, 920167782
    %v2190 = vsel %vm2182, %v2173, %v2189
    %v2191 = vsel %vm2181, %v2188, %v2190
    %v2192 = vsel %vm2180, %v2170, %v2173
    %v2193 = vsel %vm2183, %v2179, 1326507024
    %v2194 = vsel %vm2182, %v2176, %v2193
    %v2195 = vsel %vm2181, %v2192, %v2194
    %v2196 = vshll.u32 %v2156, 8
    %v2197 = vmul.u32.u64.compose %v2196, %v2195
    %v2198 = vextract.low.u32 %v2197
    %v2199 = vextract.high.u32 %v2197
    %v2200 = vmul.u32.u64.compose %v2196, %v2191
    %v2201 = vextract.low.u32 %v2200
    %v2202 = vextract.high.u32 %v2200
    %v2203 = vmul.u32 %v2196, %v2187
    %v2204 = vadd.s32 %v2199, %v2201
    %vm2205 = vc.u32 %v2199, %v2201
    %v2206 = vadd.s32 %v2202, 1
    %v2207 = vsel %vm2205, %v2206, %v2202
    %v2208 = vadd.s32 %v2203, %v2207
    %v2209 = vadd.s32 %v2208, 536870912
    %v2210 = vshrl.u32 %v2209, 30
    %v2211 = vshll.u32 %v2210, 30
    %v2212 = vsub.s32 %v2208, %v2211
    %vm2213 = vcmp.lt.s32.totalorder %v2212, 0
    %v2214 = vsub.s32 0, %v2212
    %v2215 = vsel %vm2213, %v2214, %v2212
    %v2216 = vclz %v2215
    %v2217 = vsub.s32 %v2216, 2
    %vm2218 = vcmp.gt.s32.totalorder 0, %v2217
    %v2219 = vsel %vm2218, 0, %v2217
    %v2220 = vsub.s32 32, %v2219
    %v2221 = vshll.u32 %v2212, %v2219
    %v2222 = vshrl.u32 %v2204, %v2220
    %v2223 = vor.u32 %v2221, %v2222
    %v2224 = vsub.s32 4294967266, %v2219
    %v2225 = vadd.s32 %v2224, 127
    %v2226 = vshll.u32 %v2225, 23
    %v2227 = vor.u32 4788187, %v2226
    %v2228 = vand.u32 2147483647, %v2227
    %v2230 = vcvt.s32.f32 %v2223
    %v2231 = vmul.f32 %v2230, %v2228
    %v2232 = vxor.u32 %v2231, 2147483648
    %v2233 = vsel %vm2150, %v2232, %v2231
    %v2234 = vsub.s32 4, %v2210
    %v2235 = vsel %vm2150, %v2234, %v2210
    %v2236 = vsel %vm2149, %v2147, %v2233
    %v2237 = vsel %vm2149, 0, %v2235
    %v2238 = vcosq.f32.pop %v2236
    %v2239 = vsinq.f32.pop %v2236
    %vm2240 = vweird.f32 %v2147
    %v2241 = vand.u32 %v2237, 3
    %vm2242 = vcmp.lt.s32.totalorder %v2241, 2
    %vm2243 = vcmp.eq.s32.totalorder %v2241, 0
    %v2244 = vxor.u32 %v2239, 2147483648
    %v2245 = vsel %vm2243, %v2238, %v2244
    %vm2246 = vcmp.eq.s32.totalorder %v2241, 2
    %v2247 = vxor.u32 %v2238, 2147483648
    %v2248 = vsel %vm2246, %v2247, %v2239
    %v2249 = vsel %vm2242, %v2245, %v2248
    %v2250 = vsel %vm2240, nan, %v2249
    %v2251 = vand.u32 2147483647, %v2147
    %vm2252 = vcmp.le.f32.partialorder %v2251, 0.7853982
    %vm2253 = vcmp.lt.s32.totalorder %v2147, 0
    %v2254 = vand.u32 %v2147, 2139095040
    %v2255 = vshrl.u32 %v2254, 23
    %v2256 = vsub.s32 %v2255, 127
    %v2257 = vand.u32 2147483647, %v2147
    %v2258 = vand.u32 %v2257, 8388607
    %v2259 = vor.u32 %v2258, 8388608
    %v2260 = vsub.s32 0, %v2259
    %v2261 = vadd.s32 %v2256, 1
    %vm2262 = vcmp.gt.s32.totalorder %v2261, 0
    %v2263 = vsel %vm2262, %v2261, 0
    %v2264 = vshrl.u32 %v2263, 5
    %v2265 = vand.u32 %v2263, 31
    %v2266 = vsub.s32 32, %v2265
    %v2267 = vshrl.u32 683565275, %v2266
    %v2268 = vshll.u32 683565275, %v2265
    %v2269 = vshrl.u32 2475754826, %v2266
    %v2270 = vor.u32 %v2268, %v2269
    %v2271 = vshll.u32 2475754826, %v2265
    %v2272 = vshrl.u32 2131351028, %v2266
    %v2273 = vor.u32 %v2271, %v2272
    %v2274 = vshll.u32 2131351028, %v2265
    %v2275 = vshrl.u32 2102212464, %v2266
    %v2276 = vor.u32 %v2274, %v2275
    %v2277 = vshll.u32 2102212464, %v2265
    %v2278 = vshrl.u32 920167782, %v2266
    %v2279 = vor.u32 %v2277, %v2278
    %v2280 = vshll.u32 920167782, %v2265
    %v2281 = vshrl.u32 1326507024, %v2266
    %v2282 = vor.u32 %v2280, %v2281
    %vm2283 = vcmp.lt.s32.totalorder %v2264, 1
    %vm2284 = vcmp.lt.s32.totalorder %v2264, 2
    %vm2285 = vcmp.lt.s32.totalorder %v2264, 3
    %vm2286 = vcmp.lt.s32.totalorder %v2264, 4
    %v2287 = vsel %vm2283, %v2267, %v2270
    %v2288 = vsel %vm2286, %v2276, 2102212464
    %v2289 = vsel %vm2285, %v2273, %v2288
    %v2290 = vsel %vm2284, %v2287, %v2289
    %v2291 = vsel %vm2283, %v2270, %v2273
    %v2292 = vsel %vm2286, %v2279, 920167782
    %v2293 = vsel %vm2285, %v2276, %v2292
    %v2294 = vsel %vm2284, %v2291, %v2293
    %v2295 = vsel %vm2283, %v2273, %v2276
    %v2296 = vsel %vm2286, %v2282, 1326507024
    %v2297 = vsel %vm2285, %v2279, %v2296
    %v2298 = vsel %vm2284, %v2295, %v2297
    %v2299 = vshll.u32 %v2259, 8
    %v2300 = vmul.u32.u64.compose %v2299, %v2298
    %v2301 = vextract.low.u32 %v2300
    %v2302 = vextract.high.u32 %v2300
    %v2303 = vmul.u32.u64.compose %v2299, %v2294
    %v2304 = vextract.low.u32 %v2303
    %v2305 = vextract.high.u32 %v2303
    %v2306 = vmul.u32 %v2299, %v2290
    %v2307 = vadd.s32 %v2302, %v2304
    %vm2308 = vc.u32 %v2302, %v2304
    %v2309 = vadd.s32 %v2305, 1
    %v2310 = vsel %vm2308, %v2309, %v2305
    %v2311 = vadd.s32 %v2306, %v2310
    %v2312 = vadd.s32 %v2311, 536870912
    %v2313 = vshrl.u32 %v2312, 30
    %v2314 = vshll.u32 %v2313, 30
    %v2315 = vsub.s32 %v2311, %v2314
    %vm2316 = vcmp.lt.s32.totalorder %v2315, 0
    %v2317 = vsub.s32 0, %v2315
    %v2318 = vsel %vm2316, %v2317, %v2315
    %v2319 = vclz %v2318
    %v2320 = vsub.s32 %v2319, 2
    %vm2321 = vcmp.gt.s32.totalorder 0, %v2320
    %v2322 = vsel %vm2321, 0, %v2320
    %v2323 = vsub.s32 32, %v2322
    %v2324 = vshll.u32 %v2315, %v2322
    %v2325 = vshrl.u32 %v2307, %v2323
    %v2326 = vor.u32 %v2324, %v2325
    %v2327 = vsub.s32 4294967266, %v2322
    %v2328 = vadd.s32 %v2327, 127
    %v2329 = vshll.u32 %v2328, 23
    %v2330 = vor.u32 4788187, %v2329
    %v2331 = vand.u32 2147483647, %v2330
    %v2333 = vcvt.s32.f32 %v2326
    %v2334 = vmul.f32 %v2333, %v2331
    %v2335 = vxor.u32 %v2334, 2147483648
    %v2336 = vsel %vm2253, %v2335, %v2334
    %v2337 = vsub.s32 4, %v2313
    %v2338 = vsel %vm2253, %v2337, %v2313
    %v2339 = vsel %vm2252, %v2147, %v2336
    %v2340 = vsel %vm2252, 0, %v2338
    %v2341 = vcosq.f32.pop %v2339
    %v2342 = vsinq.f32.pop %v2339
    %vm2343 = vweird.f32 %v2147
    %v2344 = vadd.s32 %v2340, 3
    %v2345 = vand.u32 %v2344, 3
    %vm2346 = vcmp.lt.s32.totalorder %v2345, 2
    %vm2347 = vcmp.eq.s32.totalorder %v2345, 0
    %v2348 = vxor.u32 %v2342, 2147483648
    %v2349 = vsel %vm2347, %v2341, %v2348
    %vm2350 = vcmp.eq.s32.totalorder %v2345, 2
    %v2351 = vxor.u32 %v2341, 2147483648
    %v2352 = vsel %vm2350, %v2351, %v2342
    %v2353 = vsel %vm2346, %v2349, %v2352
    %v2354 = vsel %vm2343, nan, %v2353
    %v2355 = vmul.f32 %v46, 40.31748
    %v2356 = vand.u32 2147483647, %v2355
    %vm2357 = vcmp.le.f32.partialorder %v2356, 0.7853982
    %vm2358 = vcmp.lt.s32.totalorder %v2355, 0
    %v2359 = vand.u32 %v2355, 2139095040
    %v2360 = vshrl.u32 %v2359, 23
    %v2361 = vsub.s32 %v2360, 127
    %v2362 = vand.u32 2147483647, %v2355
    %v2363 = vand.u32 %v2362, 8388607
    %v2364 = vor.u32 %v2363, 8388608
    %v2365 = vsub.s32 0, %v2364
    %v2366 = vadd.s32 %v2361, 1
    %vm2367 = vcmp.gt.s32.totalorder %v2366, 0
    %v2368 = vsel %vm2367, %v2366, 0
    %v2369 = vshrl.u32 %v2368, 5
    %v2370 = vand.u32 %v2368, 31
    %v2371 = vsub.s32 32, %v2370
    %v2372 = vshrl.u32 683565275, %v2371
    %v2373 = vshll.u32 683565275, %v2370
    %v2374 = vshrl.u32 2475754826, %v2371
    %v2375 = vor.u32 %v2373, %v2374
    %v2376 = vshll.u32 2475754826, %v2370
    %v2377 = vshrl.u32 2131351028, %v2371
    %v2378 = vor.u32 %v2376, %v2377
    %v2379 = vshll.u32 2131351028, %v2370
    %v2380 = vshrl.u32 2102212464, %v2371
    %v2381 = vor.u32 %v2379, %v2380
    %v2382 = vshll.u32 2102212464, %v2370
    %v2383 = vshrl.u32 920167782, %v2371
    %v2384 = vor.u32 %v2382, %v2383
    %v2385 = vshll.u32 920167782, %v2370
    %v2386 = vshrl.u32 1326507024, %v2371
    %v2387 = vor.u32 %v2385, %v2386
    %vm2388 = vcmp.lt.s32.totalorder %v2369, 1
    %vm2389 = vcmp.lt.s32.totalorder %v2369, 2
    %vm2390 = vcmp.lt.s32.totalorder %v2369, 3
    %vm2391 = vcmp.lt.s32.totalorder %v2369, 4
    %v2392 = vsel %vm2388, %v2372, %v2375
    %v2393 = vsel %vm2391, %v2381, 2102212464
    %v2394 = vsel %vm2390, %v2378, %v2393
    %v2395 = vsel %vm2389, %v2392, %v2394
    %v2396 = vsel %vm2388, %v2375, %v2378
    %v2397 = vsel %vm2391, %v2384, 920167782
    %v2398 = vsel %vm2390, %v2381, %v2397
    %v2399 = vsel %vm2389, %v2396, %v2398
    %v2400 = vsel %vm2388, %v2378, %v2381
    %v2401 = vsel %vm2391, %v2387, 1326507024
    %v2402 = vsel %vm2390, %v2384, %v2401
    %v2403 = vsel %vm2389, %v2400, %v2402
    %v2404 = vshll.u32 %v2364, 8
    %v2405 = vmul.u32.u64.compose %v2404, %v2403
    %v2406 = vextract.low.u32 %v2405
    %v2407 = vextract.high.u32 %v2405
    %v2408 = vmul.u32.u64.compose %v2404, %v2399
    %v2409 = vextract.low.u32 %v2408
    %v2410 = vextract.high.u32 %v2408
    %v2411 = vmul.u32 %v2404, %v2395
    %v2412 = vadd.s32 %v2407, %v2409
    %vm2413 = vc.u32 %v2407, %v2409
    %v2414 = vadd.s32 %v2410, 1
    %v2415 = vsel %vm2413, %v2414, %v2410
    %v2416 = vadd.s32 %v2411, %v2415
    %v2417 = vadd.s32 %v2416, 536870912
    %v2418 = vshrl.u32 %v2417, 30
    %v2419 = vshll.u32 %v2418, 30
    %v2420 = vsub.s32 %v2416, %v2419
    %vm2421 = vcmp.lt.s32.totalorder %v2420, 0
    %v2422 = vsub.s32 0, %v2420
    %v2423 = vsel %vm2421, %v2422, %v2420
    %v2424 = vclz %v2423
    %v2425 = vsub.s32 %v2424, 2
    %vm2426 = vcmp.gt.s32.totalorder 0, %v2425
    %v2427 = vsel %vm2426, 0, %v2425
    %v2428 = vsub.s32 32, %v2427
    %v2429 = vshll.u32 %v2420, %v2427
    %v2430 = vshrl.u32 %v2412, %v2428
    %v2431 = vor.u32 %v2429, %v2430
    %v2432 = vsub.s32 4294967266, %v2427
    %v2433 = vadd.s32 %v2432, 127
    %v2434 = vshll.u32 %v2433, 23
    %v2435 = vor.u32 4788187, %v2434
    %v2436 = vand.u32 2147483647, %v2435
    %v2438 = vcvt.s32.f32 %v2431
    %v2439 = vmul.f32 %v2438, %v2436
    %v2440 = vxor.u32 %v2439, 2147483648
    %v2441 = vsel %vm2358, %v2440, %v2439
    %v2442 = vsub.s32 4, %v2418
    %v2443 = vsel %vm2358, %v2442, %v2418
    %v2444 = vsel %vm2357, %v2355, %v2441
    %v2445 = vsel %vm2357, 0, %v2443
    %v2446 = vcosq.f32.pop %v2444
    %v2447 = vsinq.f32.pop %v2444
    %vm2448 = vweird.f32 %v2355
    %v2449 = vand.u32 %v2445, 3
    %vm2450 = vcmp.lt.s32.totalorder %v2449, 2
    %vm2451 = vcmp.eq.s32.totalorder %v2449, 0
    %v2452 = vxor.u32 %v2447, 2147483648
    %v2453 = vsel %vm2451, %v2446, %v2452
    %vm2454 = vcmp.eq.s32.totalorder %v2449, 2
    %v2455 = vxor.u32 %v2446, 2147483648
    %v2456 = vsel %vm2454, %v2455, %v2447
    %v2457 = vsel %vm2450, %v2453, %v2456
    %v2458 = vsel %vm2448, nan, %v2457
    %v2459 = vand.u32 2147483647, %v2355
    %vm2460 = vcmp.le.f32.partialorder %v2459, 0.7853982
    %vm2461 = vcmp.lt.s32.totalorder %v2355, 0
    %v2462 = vand.u32 %v2355, 2139095040
    %v2463 = vshrl.u32 %v2462, 23
    %v2464 = vsub.s32 %v2463, 127
    %v2465 = vand.u32 2147483647, %v2355
    %v2466 = vand.u32 %v2465, 8388607
    %v2467 = vor.u32 %v2466, 8388608
    %v2468 = vsub.s32 0, %v2467
    %v2469 = vadd.s32 %v2464, 1
    %vm2470 = vcmp.gt.s32.totalorder %v2469, 0
    %v2471 = vsel %vm2470, %v2469, 0
    %v2472 = vshrl.u32 %v2471, 5
    %v2473 = vand.u32 %v2471, 31
    %v2474 = vsub.s32 32, %v2473
    %v2475 = vshrl.u32 683565275, %v2474
    %v2476 = vshll.u32 683565275, %v2473
    %v2477 = vshrl.u32 2475754826, %v2474
    %v2478 = vor.u32 %v2476, %v2477
    %v2479 = vshll.u32 2475754826, %v2473
    %v2480 = vshrl.u32 2131351028, %v2474
    %v2481 = vor.u32 %v2479, %v2480
    %v2482 = vshll.u32 2131351028, %v2473
    %v2483 = vshrl.u32 2102212464, %v2474
    %v2484 = vor.u32 %v2482, %v2483
    %v2485 = vshll.u32 2102212464, %v2473
    %v2486 = vshrl.u32 920167782, %v2474
    %v2487 = vor.u32 %v2485, %v2486
    %v2488 = vshll.u32 920167782, %v2473
    %v2489 = vshrl.u32 1326507024, %v2474
    %v2490 = vor.u32 %v2488, %v2489
    %vm2491 = vcmp.lt.s32.totalorder %v2472, 1
    %vm2492 = vcmp.lt.s32.totalorder %v2472, 2
    %vm2493 = vcmp.lt.s32.totalorder %v2472, 3
    %vm2494 = vcmp.lt.s32.totalorder %v2472, 4
    %v2495 = vsel %vm2491, %v2475, %v2478
    %v2496 = vsel %vm2494, %v2484, 2102212464
    %v2497 = vsel %vm2493, %v2481, %v2496
    %v2498 = vsel %vm2492, %v2495, %v2497
    %v2499 = vsel %vm2491, %v2478, %v2481
    %v2500 = vsel %vm2494, %v2487, 920167782
    %v2501 = vsel %vm2493, %v2484, %v2500
    %v2502 = vsel %vm2492, %v2499, %v2501
    %v2503 = vsel %vm2491, %v2481, %v2484
    %v2504 = vsel %vm2494, %v2490, 1326507024
    %v2505 = vsel %vm2493, %v2487, %v2504
    %v2506 = vsel %vm2492, %v2503, %v2505
    %v2507 = vshll.u32 %v2467, 8
    %v2508 = vmul.u32.u64.compose %v2507, %v2506
    %v2509 = vextract.low.u32 %v2508
    %v2510 = vextract.high.u32 %v2508
    %v2511 = vmul.u32.u64.compose %v2507, %v2502
    %v2512 = vextract.low.u32 %v2511
    %v2513 = vextract.high.u32 %v2511
    %v2514 = vmul.u32 %v2507, %v2498
    %v2515 = vadd.s32 %v2510, %v2512
    %vm2516 = vc.u32 %v2510, %v2512
    %v2517 = vadd.s32 %v2513, 1
    %v2518 = vsel %vm2516, %v2517, %v2513
    %v2519 = vadd.s32 %v2514, %v2518
    %v2520 = vadd.s32 %v2519, 536870912
    %v2521 = vshrl.u32 %v2520, 30
    %v2522 = vshll.u32 %v2521, 30
    %v2523 = vsub.s32 %v2519, %v2522
    %vm2524 = vcmp.lt.s32.totalorder %v2523, 0
    %v2525 = vsub.s32 0, %v2523
    %v2526 = vsel %vm2524, %v2525, %v2523
    %v2527 = vclz %v2526
    %v2528 = vsub.s32 %v2527, 2
    %vm2529 = vcmp.gt.s32.totalorder 0, %v2528
    %v2530 = vsel %vm2529, 0, %v2528
    %v2531 = vsub.s32 32, %v2530
    %v2532 = vshll.u32 %v2523, %v2530
    %v2533 = vshrl.u32 %v2515, %v2531
    %v2534 = vor.u32 %v2532, %v2533
    %v2535 = vsub.s32 4294967266, %v2530
    %v2536 = vadd.s32 %v2535, 127
    %v2537 = vshll.u32 %v2536, 23
    %v2538 = vor.u32 4788187, %v2537
    %v2539 = vand.u32 2147483647, %v2538
    %v2541 = vcvt.s32.f32 %v2534
    %v2542 = vmul.f32 %v2541, %v2539
    %v2543 = vxor.u32 %v2542, 2147483648
    %v2544 = vsel %vm2461, %v2543, %v2542
    %v2545 = vsub.s32 4, %v2521
    %v2546 = vsel %vm2461, %v2545, %v2521
    %v2547 = vsel %vm2460, %v2355, %v2544
    %v2548 = vsel %vm2460, 0, %v2546
    %v2549 = vcosq.f32.pop %v2547
    %v2550 = vsinq.f32.pop %v2547
    %vm2551 = vweird.f32 %v2355
    %v2552 = vadd.s32 %v2548, 3
    %v2553 = vand.u32 %v2552, 3
    %vm2554 = vcmp.lt.s32.totalorder %v2553, 2
    %vm2555 = vcmp.eq.s32.totalorder %v2553, 0
    %v2556 = vxor.u32 %v2550, 2147483648
    %v2557 = vsel %vm2555, %v2549, %v2556
    %vm2558 = vcmp.eq.s32.totalorder %v2553, 2
    %v2559 = vxor.u32 %v2549, 2147483648
    %v2560 = vsel %vm2558, %v2559, %v2550
    %v2561 = vsel %vm2554, %v2557, %v2560
    %v2562 = vsel %vm2551, nan, %v2561
    %v2563 = vmul.f32 %v46, 256.0
    %v2564 = vand.u32 2147483647, %v2563
    %vm2565 = vcmp.le.f32.partialorder %v2564, 0.7853982
    %vm2566 = vcmp.lt.s32.totalorder %v2563, 0
    %v2567 = vand.u32 %v2563, 2139095040
    %v2568 = vshrl.u32 %v2567, 23
    %v2569 = vsub.s32 %v2568, 127
    %v2570 = vand.u32 2147483647, %v2563
    %v2571 = vand.u32 %v2570, 8388607
    %v2572 = vor.u32 %v2571, 8388608
    %v2573 = vsub.s32 0, %v2572
    %v2574 = vadd.s32 %v2569, 1
    %vm2575 = vcmp.gt.s32.totalorder %v2574, 0
    %v2576 = vsel %vm2575, %v2574, 0
    %v2577 = vshrl.u32 %v2576, 5
    %v2578 = vand.u32 %v2576, 31
    %v2579 = vsub.s32 32, %v2578
    %v2580 = vshrl.u32 683565275, %v2579
    %v2581 = vshll.u32 683565275, %v2578
    %v2582 = vshrl.u32 2475754826, %v2579
    %v2583 = vor.u32 %v2581, %v2582
    %v2584 = vshll.u32 2475754826, %v2578
    %v2585 = vshrl.u32 2131351028, %v2579
    %v2586 = vor.u32 %v2584, %v2585
    %v2587 = vshll.u32 2131351028, %v2578
    %v2588 = vshrl.u32 2102212464, %v2579
    %v2589 = vor.u32 %v2587, %v2588
    %v2590 = vshll.u32 2102212464, %v2578
    %v2591 = vshrl.u32 920167782, %v2579
    %v2592 = vor.u32 %v2590, %v2591
    %v2593 = vshll.u32 920167782, %v2578
    %v2594 = vshrl.u32 1326507024, %v2579
    %v2595 = vor.u32 %v2593, %v2594
    %vm2596 = vcmp.lt.s32.totalorder %v2577, 1
    %vm2597 = vcmp.lt.s32.totalorder %v2577, 2
    %vm2598 = vcmp.lt.s32.totalorder %v2577, 3
    %vm2599 = vcmp.lt.s32.totalorder %v2577, 4
    %v2600 = vsel %vm2596, %v2580, %v2583
    %v2601 = vsel %vm2599, %v2589, 2102212464
    %v2602 = vsel %vm2598, %v2586, %v2601
    %v2603 = vsel %vm2597, %v2600, %v2602
    %v2604 = vsel %vm2596, %v2583, %v2586
    %v2605 = vsel %vm2599, %v2592, 920167782
    %v2606 = vsel %vm2598, %v2589, %v2605
    %v2607 = vsel %vm2597, %v2604, %v2606
    %v2608 = vsel %vm2596, %v2586, %v2589
    %v2609 = vsel %vm2599, %v2595, 1326507024
    %v2610 = vsel %vm2598, %v2592, %v2609
    %v2611 = vsel %vm2597, %v2608, %v2610
    %v2612 = vshll.u32 %v2572, 8
    %v2613 = vmul.u32.u64.compose %v2612, %v2611
    %v2614 = vextract.low.u32 %v2613
    %v2615 = vextract.high.u32 %v2613
    %v2616 = vmul.u32.u64.compose %v2612, %v2607
    %v2617 = vextract.low.u32 %v2616
    %v2618 = vextract.high.u32 %v2616
    %v2619 = vmul.u32 %v2612, %v2603
    %v2620 = vadd.s32 %v2615, %v2617
    %vm2621 = vc.u32 %v2615, %v2617
    %v2622 = vadd.s32 %v2618, 1
    %v2623 = vsel %vm2621, %v2622, %v2618
    %v2624 = vadd.s32 %v2619, %v2623
    %v2625 = vadd.s32 %v2624, 536870912
    %v2626 = vshrl.u32 %v2625, 30
    %v2627 = vshll.u32 %v2626, 30
    %v2628 = vsub.s32 %v2624, %v2627
    %vm2629 = vcmp.lt.s32.totalorder %v2628, 0
    %v2630 = vsub.s32 0, %v2628
    %v2631 = vsel %vm2629, %v2630, %v2628
    %v2632 = vclz %v2631
    %v2633 = vsub.s32 %v2632, 2
    %vm2634 = vcmp.gt.s32.totalorder 0, %v2633
    %v2635 = vsel %vm2634, 0, %v2633
    %v2636 = vsub.s32 32, %v2635
    %v2637 = vshll.u32 %v2628, %v2635
    %v2638 = vshrl.u32 %v2620, %v2636
    %v2639 = vor.u32 %v2637, %v2638
    %v2640 = vsub.s32 4294967266, %v2635
    %v2641 = vadd.s32 %v2640, 127
    %v2642 = vshll.u32 %v2641, 23
    %v2643 = vor.u32 4788187, %v2642
    %v2644 = vand.u32 2147483647, %v2643
    %v2646 = vcvt.s32.f32 %v2639
    %v2647 = vmul.f32 %v2646, %v2644
    %v2648 = vxor.u32 %v2647, 2147483648
    %v2649 = vsel %vm2566, %v2648, %v2647
    %v2650 = vsub.s32 4, %v2626
    %v2651 = vsel %vm2566, %v2650, %v2626
    %v2652 = vsel %vm2565, %v2563, %v2649
    %v2653 = vsel %vm2565, 0, %v2651
    %v2654 = vcosq.f32.pop %v2652
    %v2655 = vsinq.f32.pop %v2652
    %vm2656 = vweird.f32 %v2563
    %v2657 = vand.u32 %v2653, 3
    %vm2658 = vcmp.lt.s32.totalorder %v2657, 2
    %vm2659 = vcmp.eq.s32.totalorder %v2657, 0
    %v2660 = vxor.u32 %v2655, 2147483648
    %v2661 = vsel %vm2659, %v2654, %v2660
    %vm2662 = vcmp.eq.s32.totalorder %v2657, 2
    %v2663 = vxor.u32 %v2654, 2147483648
    %v2664 = vsel %vm2662, %v2663, %v2655
    %v2665 = vsel %vm2658, %v2661, %v2664
    %v2666 = vsel %vm2656, nan, %v2665
    %v2667 = vand.u32 2147483647, %v2563
    %vm2668 = vcmp.le.f32.partialorder %v2667, 0.7853982
    %vm2669 = vcmp.lt.s32.totalorder %v2563, 0
    %v2670 = vand.u32 %v2563, 2139095040
    %v2671 = vshrl.u32 %v2670, 23
    %v2672 = vsub.s32 %v2671, 127
    %v2673 = vand.u32 2147483647, %v2563
    %v2674 = vand.u32 %v2673, 8388607
    %v2675 = vor.u32 %v2674, 8388608
    %v2676 = vsub.s32 0, %v2675
    %v2677 = vadd.s32 %v2672, 1
    %vm2678 = vcmp.gt.s32.totalorder %v2677, 0
    %v2679 = vsel %vm2678, %v2677, 0
    %v2680 = vshrl.u32 %v2679, 5
    %v2681 = vand.u32 %v2679, 31
    %v2682 = vsub.s32 32, %v2681
    %v2683 = vshrl.u32 683565275, %v2682
    %v2684 = vshll.u32 683565275, %v2681
    %v2685 = vshrl.u32 2475754826, %v2682
    %v2686 = vor.u32 %v2684, %v2685
    %v2687 = vshll.u32 2475754826, %v2681
    %v2688 = vshrl.u32 2131351028, %v2682
    %v2689 = vor.u32 %v2687, %v2688
    %v2690 = vshll.u32 2131351028, %v2681
    %v2691 = vshrl.u32 2102212464, %v2682
    %v2692 = vor.u32 %v2690, %v2691
    %v2693 = vshll.u32 2102212464, %v2681
    %v2694 = vshrl.u32 920167782, %v2682
    %v2695 = vor.u32 %v2693, %v2694
    %v2696 = vshll.u32 920167782, %v2681
    %v2697 = vshrl.u32 1326507024, %v2682
    %v2698 = vor.u32 %v2696, %v2697
    %vm2699 = vcmp.lt.s32.totalorder %v2680, 1
    %vm2700 = vcmp.lt.s32.totalorder %v2680, 2
    %vm2701 = vcmp.lt.s32.totalorder %v2680, 3
    %vm2702 = vcmp.lt.s32.totalorder %v2680, 4
    %v2703 = vsel %vm2699, %v2683, %v2686
    %v2704 = vsel %vm2702, %v2692, 2102212464
    %v2705 = vsel %vm2701, %v2689, %v2704
    %v2706 = vsel %vm2700, %v2703, %v2705
    %v2707 = vsel %vm2699, %v2686, %v2689
    %v2708 = vsel %vm2702, %v2695, 920167782
    %v2709 = vsel %vm2701, %v2692, %v2708
    %v2710 = vsel %vm2700, %v2707, %v2709
    %v2711 = vsel %vm2699, %v2689, %v2692
    %v2712 = vsel %vm2702, %v2698, 1326507024
    %v2713 = vsel %vm2701, %v2695, %v2712
    %v2714 = vsel %vm2700, %v2711, %v2713
    %v2715 = vshll.u32 %v2675, 8
    %v2716 = vmul.u32.u64.compose %v2715, %v2714
    %v2717 = vextract.low.u32 %v2716
    %v2718 = vextract.high.u32 %v2716
    %v2719 = vmul.u32.u64.compose %v2715, %v2710
    %v2720 = vextract.low.u32 %v2719
    %v2721 = vextract.high.u32 %v2719
    %v2722 = vmul.u32 %v2715, %v2706
    %v2723 = vadd.s32 %v2718, %v2720
    %vm2724 = vc.u32 %v2718, %v2720
    %v2725 = vadd.s32 %v2721, 1
    %v2726 = vsel %vm2724, %v2725, %v2721
    %v2727 = vadd.s32 %v2722, %v2726
    %v2728 = vadd.s32 %v2727, 536870912
    %v2729 = vshrl.u32 %v2728, 30
    %v2730 = vshll.u32 %v2729, 30
    %v2731 = vsub.s32 %v2727, %v2730
    %vm2732 = vcmp.lt.s32.totalorder %v2731, 0
    %v2733 = vsub.s32 0, %v2731
    %v2734 = vsel %vm2732, %v2733, %v2731
    %v2735 = vclz %v2734
    %v2736 = vsub.s32 %v2735, 2
    %vm2737 = vcmp.gt.s32.totalorder 0, %v2736
    %v2738 = vsel %vm2737, 0, %v2736
    %v2739 = vsub.s32 32, %v2738
    %v2740 = vshll.u32 %v2731, %v2738
    %v2741 = vshrl.u32 %v2723, %v2739
    %v2742 = vor.u32 %v2740, %v2741
    %v2743 = vsub.s32 4294967266, %v2738
    %v2744 = vadd.s32 %v2743, 127
    %v2745 = vshll.u32 %v2744, 23
    %v2746 = vor.u32 4788187, %v2745
    %v2747 = vand.u32 2147483647, %v2746
    %v2749 = vcvt.s32.f32 %v2742
    %v2750 = vmul.f32 %v2749, %v2747
    %v2751 = vxor.u32 %v2750, 2147483648
    %v2752 = vsel %vm2669, %v2751, %v2750
    %v2753 = vsub.s32 4, %v2729
    %v2754 = vsel %vm2669, %v2753, %v2729
    %v2755 = vsel %vm2668, %v2563, %v2752
    %v2756 = vsel %vm2668, 0, %v2754
    %v2757 = vcosq.f32.pop %v2755
    %v2758 = vsinq.f32.pop %v2755
    %vm2759 = vweird.f32 %v2563
    %v2760 = vadd.s32 %v2756, 3
    %v2761 = vand.u32 %v2760, 3
    %vm2762 = vcmp.lt.s32.totalorder %v2761, 2
    %vm2763 = vcmp.eq.s32.totalorder %v2761, 0
    %v2764 = vxor.u32 %v2758, 2147483648
    %v2765 = vsel %vm2763, %v2757, %v2764
    %vm2766 = vcmp.eq.s32.totalorder %v2761, 2
    %v2767 = vxor.u32 %v2757, 2147483648
    %v2768 = vsel %vm2766, %v2767, %v2758
    %v2769 = vsel %vm2762, %v2765, %v2768
    %v2770 = vsel %vm2759, nan, %v2769
    %v2772 = vrot.slane %v2250, 2
    %v2775 = vrot.slane %v2458, 4
    %v2778 = vrot.slane %v2666, 6
    %v2781 = vrot.slane %v2354, 2
    %v2784 = vrot.slane %v2562, 4
    %v2787 = vrot.slane %v2770, 6
    %v2789 = vsel %vm896, %v2042, %v2772
    %v2790 = vsel %vm898, %v2772, %v2775
    %v2791 = vsel %vm900, %v2775, %v2778
    %v2792 = vsel %vm896, %v2146, %v2781
    %v2793 = vsel %vm898, %v2781, %v2784
    %v2794 = vsel %vm900, %v2784, %v2787
    %2795 = vmatprep.subr.mxu0 0.0
    %2796 = vmatpush1.msra.mxu0 0.0
    %2797 = vmatprep.subr.mxu0 0.0
    %2798 = vmatpush1.msra.mxu0 0.0
    %2799 = vmatprep.subr.mxu0 0.0
    %2800 = vmatpush1.msra.mxu0 0.0
    %2801 = vmatprep.subr.mxu0 0.0
    %2802 = vmatpush1.msra.mxu0 0.0
    %2803 = vmatprep.subr.mxu0 0.0
    %2804 = vmatpush1.msra.mxu0 0.0
    %2805 = vmatprep.subr.mxu0 0.0
    %2806 = vmatpush1.msra.mxu0 0.0
    %2807 = vmatprep.subr.mxu0 0.0
    %2808 = vmatpush1.msra.mxu0 0.0
    %2809 = vmatprep.subr.mxu0 0.0
    %2810 = vmatpush1.msra.mxu0 0.0
    %2811 = vmatprep.subr.mxu0 0.0
    %2812 = vmatpush1.msra.mxu0 0.0
    %2813 = vmatprep.subr.mxu0 0.0
    %2814 = vmatpush1.msra.mxu0 0.0
    %2815 = vmatprep.subr.mxu0 0.0
    %2816 = vmatpush1.msra.mxu0 %v2794
    %2817 = vmatprep.subr.mxu0 0.0
    %2818 = vmatpush1.msra.mxu0 %v2793
    %2819 = vmatprep.subr.mxu0 0.0
    %2820 = vmatpush1.msra.mxu0 %v2792
    %2821 = vmatprep.subr.mxu0 0.0
    %2822 = vmatpush1.msra.mxu0 %v2791
    %2823 = vmatprep.subr.mxu0 0.0
    %2824 = vmatpush1.msra.mxu0 %v2790
    %2825 = vmatprep.subr.mxu0 0.0
    %2826 = vmatpush1.msra.mxu0 %v2789
    %2827 = vmatprep.subr.mxu0 0.0
    %2828 = vmatpush2.msra.mxu0 0.0
    %2829 = vmatprep.subr.mxu0 0.0
    %2830 = vmatpush2.msra.mxu0 0.0
    %2831 = vmatprep.subr.mxu0 0.0
    %2832 = vmatpush2.msra.mxu0 0.0
    %2833 = vmatprep.subr.mxu0 0.0
    %2834 = vmatpush2.msra.mxu0 0.0
    %2835 = vmatprep.subr.mxu0 0.0
    %2836 = vmatpush2.msra.mxu0 0.0
    %2837 = vmatprep.subr.mxu0 0.0
    %2838 = vmatpush2.msra.mxu0 0.0
    %2839 = vmatprep.subr.mxu0 0.0
    %2840 = vmatpush2.msra.mxu0 0.0
    %2841 = vmatprep.subr.mxu0 0.0
    %2842 = vmatpush2.msra.mxu0 0.0
    %2843 = vmatprep.subr.mxu0 0.0
    %2844 = vmatpush2.msra.mxu0 0.0
    %2845 = vmatprep.subr.mxu0 0.0
    %2846 = vmatpush2.msra.mxu0 0.0
    %2847 = vmatprep.subr.mxu0 0.0
    %2848 = vmatpush2.msra.mxu0 0.0
    %2849 = vmatprep.subr.mxu0 0.0
    %2850 = vmatpush2.msra.mxu0 0.0
    %2851 = vmatprep.subr.mxu0 0.0
    %2852 = vmatpush2.msra.mxu0 0.0
    %2853 = vmatprep.subr.mxu0 0.0
    %2854 = vmatpush2.msra.mxu0 0.0
    %2855 = vmatprep.subr.mxu0 0.0
    %2856 = vmatpush2.msra.mxu0 0.0
    %2857 = vmatprep.subr.mxu0 0.0
    %2858 = vmatpush2.msra.mxu0 0.0
    %2859 = vmatprep.mubr.f32.mxu0 0.0
    %2860 = vmatmul.mubr.f32.gmra.mxu0 %v947
    %v2861 = vpop.f32.mrf.mxu0
    %v2862 = vadd.f32 %v908, %v2861
    %v2863 = vpop.f32.mrf.mxu0
    %2864 = vmatprep.mubr.f32.mxu0 0.0
    %2865 = vmatmul.mubr.f32.gmra.mxu0 %v950
    %v2866 = vpop.f32.mrf.mxu0
    %v2867 = vadd.f32 %v913, %v2866
    %v2868 = vpop.f32.mrf.mxu0
    %2869 = vmatprep.mubr.f32.mxu0 0.0
    %2870 = vmatmul.mubr.f32.gmra.mxu0 %v953
    %v2871 = vpop.f32.mrf.mxu0
    %v2872 = vadd.f32 %v918, %v2871
    %v2873 = vpop.f32.mrf.mxu0
    %2874 = vmatprep.mubr.f32.mxu0 0.0
    %2875 = vmatmul.mubr.f32.gmra.mxu0 %v956
    %v2876 = vpop.f32.mrf.mxu0
    %v2877 = vadd.f32 %v923, %v2876
    %v2878 = vpop.f32.mrf.mxu0
    %2879 = vmatprep.mubr.f32.mxu0 0.0
    %2880 = vmatmul.mubr.f32.gmra.mxu0 %v959
    %v2881 = vpop.f32.mrf.mxu0
    %v2882 = vadd.f32 %v928, %v2881
    %v2883 = vpop.f32.mrf.mxu0
    %2884 = vmatprep.mubr.f32.mxu0 0.0
    %2885 = vmatmul.mubr.f32.gmra.mxu0 %v962
    %v2886 = vpop.f32.mrf.mxu0
    %v2887 = vadd.f32 %v933, %v2886
    %v2888 = vpop.f32.mrf.mxu0
    %2889 = vmatprep.mubr.f32.mxu0 0.0
    %2890 = vmatmul.mubr.f32.gmra.mxu0 %v965
    %v2891 = vpop.f32.mrf.mxu0
    %v2892 = vadd.f32 %v938, %v2891
    %v2893 = vpop.f32.mrf.mxu0
    %2894 = vmatprep.mubr.f32.mxu0 0.0
    %2895 = vmatmul.mubr.f32.gmra.mxu0 %v968
    %v2896 = vpop.f32.mrf.mxu0
    %v2897 = vadd.f32 %v943, %v2896
    %v2898 = vpop.f32.mrf.mxu0
    %2899 = vdwg.mxu0
    %v2900 = vmax.f32 %v2862, 0.0
    %v2901 = vmax.f32 %v2867, 0.0
    %v2902 = vmax.f32 %v2872, 0.0
    %v2903 = vmax.f32 %v2877, 0.0
    %v2904 = vmax.f32 %v2882, 0.0
    %v2905 = vmax.f32 %v2887, 0.0
    %v2906 = vmax.f32 %v2892, 0.0
    %v2907 = vmax.f32 %v2897, 0.0
    %2908 = vmatprep.subr.mxu0 0.0
    %2909 = vmatpush1.msra.mxu0 0.0
    %2910 = vmatprep.subr.mxu0 0.0
    %2911 = vmatpush1.msra.mxu0 0.0
    %2912 = vmatprep.subr.mxu0 0.0
    %2913 = vmatpush1.msra.mxu0 0.0
    %2914 = vmatprep.subr.mxu0 0.0
    %2915 = vmatpush1.msra.mxu0 0.0
    %2916 = vmatprep.subr.mxu0 0.0
    %2917 = vmatpush1.msra.mxu0 0.0
    %2918 = vmatprep.subr.mxu0 0.0
    %2919 = vmatpush1.msra.mxu0 0.0
    %2920 = vmatprep.subr.mxu0 0.0
    %2921 = vmatpush1.msra.mxu0 0.0
    %2922 = vmatprep.subr.mxu0 0.0
    %2923 = vmatpush1.msra.mxu0 0.0
    %2924 = vmatprep.subr.mxu0 0.0
    %2925 = vmatpush1.msra.mxu0 %v2907
    %2926 = vmatprep.subr.mxu0 0.0
    %2927 = vmatpush1.msra.mxu0 %v2906
    %2928 = vmatprep.subr.mxu0 0.0
    %2929 = vmatpush1.msra.mxu0 %v2905
    %2930 = vmatprep.subr.mxu0 0.0
    %2931 = vmatpush1.msra.mxu0 %v2904
    %2932 = vmatprep.subr.mxu0 0.0
    %2933 = vmatpush1.msra.mxu0 %v2903
    %2934 = vmatprep.subr.mxu0 0.0
    %2935 = vmatpush1.msra.mxu0 %v2902
    %2936 = vmatprep.subr.mxu0 0.0
    %2937 = vmatpush1.msra.mxu0 %v2901
    %2938 = vmatprep.subr.mxu0 0.0
    %2939 = vmatpush1.msra.mxu0 %v2900
    %2940 = vmatprep.subr.mxu0 0.0
    %2941 = vmatpush2.msra.mxu0 0.0
    %2942 = vmatprep.subr.mxu0 0.0
    %2943 = vmatpush2.msra.mxu0 0.0
    %2944 = vmatprep.subr.mxu0 0.0
    %2945 = vmatpush2.msra.mxu0 0.0
    %2946 = vmatprep.subr.mxu0 0.0
    %2947 = vmatpush2.msra.mxu0 0.0
    %2948 = vmatprep.subr.mxu0 0.0
    %2949 = vmatpush2.msra.mxu0 0.0
    %2950 = vmatprep.subr.mxu0 0.0
    %2951 = vmatpush2.msra.mxu0 0.0
    %2952 = vmatprep.subr.mxu0 0.0
    %2953 = vmatpush2.msra.mxu0 0.0
    %2954 = vmatprep.subr.mxu0 0.0
    %2955 = vmatpush2.msra.mxu0 0.0
    %2956 = vmatprep.subr.mxu0 0.0
    %2957 = vmatpush2.msra.mxu0 0.0
    %2958 = vmatprep.subr.mxu0 0.0
    %2959 = vmatpush2.msra.mxu0 0.0
    %2960 = vmatprep.subr.mxu0 0.0
    %2961 = vmatpush2.msra.mxu0 0.0
    %2962 = vmatprep.subr.mxu0 0.0
    %2963 = vmatpush2.msra.mxu0 0.0
    %2964 = vmatprep.subr.mxu0 0.0
    %2965 = vmatpush2.msra.mxu0 0.0
    %2966 = vmatprep.subr.mxu0 0.0
    %2967 = vmatpush2.msra.mxu0 0.0
    %2968 = vmatprep.subr.mxu0 0.0
    %2969 = vmatpush2.msra.mxu0 0.0
    %2970 = vmatprep.subr.mxu0 0.0
    %2971 = vmatpush2.msra.mxu0 0.0
    %2972 = vmatprep.mubr.f32.mxu0 0.0
    %2973 = vmatmul.mubr.f32.gmra.mxu0 %v1141
    %v2974 = vpop.f32.mrf.mxu0
    %v2975 = vadd.f32 %v1102, %v2974
    %v2976 = vpop.f32.mrf.mxu0
    %2977 = vmatprep.mubr.f32.mxu0 0.0
    %2978 = vmatmul.mubr.f32.gmra.mxu0 %v1144
    %v2979 = vpop.f32.mrf.mxu0
    %v2980 = vadd.f32 %v1107, %v2979
    %v2981 = vpop.f32.mrf.mxu0
    %2982 = vmatprep.mubr.f32.mxu0 0.0
    %2983 = vmatmul.mubr.f32.gmra.mxu0 %v1147
    %v2984 = vpop.f32.mrf.mxu0
    %v2985 = vadd.f32 %v1112, %v2984
    %v2986 = vpop.f32.mrf.mxu0
    %2987 = vmatprep.mubr.f32.mxu0 0.0
    %2988 = vmatmul.mubr.f32.gmra.mxu0 %v1150
    %v2989 = vpop.f32.mrf.mxu0
    %v2990 = vadd.f32 %v1117, %v2989
    %v2991 = vpop.f32.mrf.mxu0
    %2992 = vmatprep.mubr.f32.mxu0 0.0
    %2993 = vmatmul.mubr.f32.gmra.mxu0 %v1153
    %v2994 = vpop.f32.mrf.mxu0
    %v2995 = vadd.f32 %v1122, %v2994
    %v2996 = vpop.f32.mrf.mxu0
    %2997 = vmatprep.mubr.f32.mxu0 0.0
    %2998 = vmatmul.mubr.f32.gmra.mxu0 %v1156
    %v2999 = vpop.f32.mrf.mxu0
    %v3000 = vadd.f32 %v1127, %v2999
    %v3001 = vpop.f32.mrf.mxu0
    %3002 = vmatprep.mubr.f32.mxu0 0.0
    %3003 = vmatmul.mubr.f32.gmra.mxu0 %v1159
    %v3004 = vpop.f32.mrf.mxu0
    %v3005 = vadd.f32 %v1132, %v3004
    %v3006 = vpop.f32.mrf.mxu0
    %3007 = vmatprep.mubr.f32.mxu0 0.0
    %3008 = vmatmul.mubr.f32.gmra.mxu0 %v1162
    %v3009 = vpop.f32.mrf.mxu0
    %v3010 = vadd.f32 %v1137, %v3009
    %v3011 = vpop.f32.mrf.mxu0
    %3012 = vdwg.mxu0
    %v3013 = vmax.f32 %v2975, 0.0
    %v3014 = vmax.f32 %v2980, 0.0
    %v3015 = vmax.f32 %v2985, 0.0
    %v3016 = vmax.f32 %v2990, 0.0
    %v3017 = vmax.f32 %v2995, 0.0
    %v3018 = vmax.f32 %v3000, 0.0
    %v3019 = vmax.f32 %v3005, 0.0
    %v3020 = vmax.f32 %v3010, 0.0
    %3021 = vmatprep.subr.mxu0 0.0
    %3022 = vmatpush1.msra.mxu0 0.0
    %3023 = vmatprep.subr.mxu0 0.0
    %3024 = vmatpush1.msra.mxu0 0.0
    %3025 = vmatprep.subr.mxu0 0.0
    %3026 = vmatpush1.msra.mxu0 0.0
    %3027 = vmatprep.subr.mxu0 0.0
    %3028 = vmatpush1.msra.mxu0 0.0
    %3029 = vmatprep.subr.mxu0 0.0
    %3030 = vmatpush1.msra.mxu0 0.0
    %3031 = vmatprep.subr.mxu0 0.0
    %3032 = vmatpush1.msra.mxu0 0.0
    %3033 = vmatprep.subr.mxu0 0.0
    %3034 = vmatpush1.msra.mxu0 0.0
    %3035 = vmatprep.subr.mxu0 0.0
    %3036 = vmatpush1.msra.mxu0 0.0
    %3037 = vmatprep.subr.mxu0 0.0
    %3038 = vmatpush1.msra.mxu0 %v3020
    %3039 = vmatprep.subr.mxu0 0.0
    %3040 = vmatpush1.msra.mxu0 %v3019
    %3041 = vmatprep.subr.mxu0 0.0
    %3042 = vmatpush1.msra.mxu0 %v3018
    %3043 = vmatprep.subr.mxu0 0.0
    %3044 = vmatpush1.msra.mxu0 %v3017
    %3045 = vmatprep.subr.mxu0 0.0
    %3046 = vmatpush1.msra.mxu0 %v3016
    %3047 = vmatprep.subr.mxu0 0.0
    %3048 = vmatpush1.msra.mxu0 %v3015
    %3049 = vmatprep.subr.mxu0 0.0
    %3050 = vmatpush1.msra.mxu0 %v3014
    %3051 = vmatprep.subr.mxu0 0.0
    %3052 = vmatpush1.msra.mxu0 %v3013
    %3053 = vmatprep.subr.mxu0 0.0
    %3054 = vmatpush2.msra.mxu0 0.0
    %3055 = vmatprep.subr.mxu0 0.0
    %3056 = vmatpush2.msra.mxu0 0.0
    %3057 = vmatprep.subr.mxu0 0.0
    %3058 = vmatpush2.msra.mxu0 0.0
    %3059 = vmatprep.subr.mxu0 0.0
    %3060 = vmatpush2.msra.mxu0 0.0
    %3061 = vmatprep.subr.mxu0 0.0
    %3062 = vmatpush2.msra.mxu0 0.0
    %3063 = vmatprep.subr.mxu0 0.0
    %3064 = vmatpush2.msra.mxu0 0.0
    %3065 = vmatprep.subr.mxu0 0.0
    %3066 = vmatpush2.msra.mxu0 0.0
    %3067 = vmatprep.subr.mxu0 0.0
    %3068 = vmatpush2.msra.mxu0 0.0
    %3069 = vmatprep.subr.mxu0 0.0
    %3070 = vmatpush2.msra.mxu0 0.0
    %3071 = vmatprep.subr.mxu0 0.0
    %3072 = vmatpush2.msra.mxu0 0.0
    %3073 = vmatprep.subr.mxu0 0.0
    %3074 = vmatpush2.msra.mxu0 0.0
    %3075 = vmatprep.subr.mxu0 0.0
    %3076 = vmatpush2.msra.mxu0 0.0
    %3077 = vmatprep.subr.mxu0 0.0
    %3078 = vmatpush2.msra.mxu0 0.0
    %3079 = vmatprep.subr.mxu0 0.0
    %3080 = vmatpush2.msra.mxu0 0.0
    %3081 = vmatprep.subr.mxu0 0.0
    %3082 = vmatpush2.msra.mxu0 0.0
    %3083 = vmatprep.subr.mxu0 0.0
    %3084 = vmatpush2.msra.mxu0 0.0
    %3085 = vmatprep.mubr.f32.mxu0 0.0
    %3086 = vmatmul.mubr.f32.gmra.mxu0 %v1336
    %v3087 = vpop.f32.mrf.mxu0
    %v3088 = vadd.f32 %v1298, %v3087
    %v3089 = vpop.f32.mrf.mxu0
    %3090 = vmatprep.mubr.f32.mxu0 0.0
    %3091 = vmatmul.mubr.f32.gmra.mxu0 %v1339
    %v3092 = vpop.f32.mrf.mxu0
    %v3093 = vadd.f32 %v1303, %v3092
    %v3094 = vpop.f32.mrf.mxu0
    %3095 = vmatprep.mubr.f32.mxu0 0.0
    %3096 = vmatmul.mubr.f32.gmra.mxu0 %v1342
    %v3097 = vpop.f32.mrf.mxu0
    %v3098 = vadd.f32 %v1308, %v3097
    %v3099 = vpop.f32.mrf.mxu0
    %3100 = vmatprep.mubr.f32.mxu0 0.0
    %3101 = vmatmul.mubr.f32.gmra.mxu0 %v1345
    %v3102 = vpop.f32.mrf.mxu0
    %v3103 = vadd.f32 %v1313, %v3102
    %v3104 = vpop.f32.mrf.mxu0
    %3105 = vmatprep.mubr.f32.mxu0 0.0
    %3106 = vmatmul.mubr.f32.gmra.mxu0 %v1348
    %v3107 = vpop.f32.mrf.mxu0
    %v3108 = vadd.f32 %v1318, %v3107
    %v3109 = vpop.f32.mrf.mxu0
    %3110 = vmatprep.mubr.f32.mxu0 0.0
    %3111 = vmatmul.mubr.f32.gmra.mxu0 %v1351
    %v3112 = vpop.f32.mrf.mxu0
    %v3113 = vadd.f32 %v1323, %v3112
    %v3114 = vpop.f32.mrf.mxu0
    %3115 = vmatprep.mubr.f32.mxu0 0.0
    %3116 = vmatmul.mubr.f32.gmra.mxu0 %v1354
    %v3117 = vpop.f32.mrf.mxu0
    %v3118 = vadd.f32 %v1328, %v3117
    %v3119 = vpop.f32.mrf.mxu0
    %3120 = vmatprep.mubr.f32.mxu0 0.0
    %3121 = vmatmul.mubr.f32.gmra.mxu0 %v1357
    %v3122 = vpop.f32.mrf.mxu0
    %v3123 = vadd.f32 %v1333, %v3122
    %v3124 = vpop.f32.mrf.mxu0
    %3125 = vdwg.mxu0
    %v3126 = vmax.f32 %v3088, 0.0
    %v3127 = vmax.f32 %v3093, 0.0
    %v3128 = vmax.f32 %v3098, 0.0
    %v3129 = vmax.f32 %v3103, 0.0
    %v3130 = vmax.f32 %v3108, 0.0
    %v3131 = vmax.f32 %v3113, 0.0
    %v3132 = vmax.f32 %v3118, 0.0
    %v3133 = vmax.f32 %v3123, 0.0
    %3134 = vmatprep.subr.mxu0 0.0
    %3135 = vmatpush1.msra.mxu0 0.0
    %3136 = vmatprep.subr.mxu0 0.0
    %3137 = vmatpush1.msra.mxu0 0.0
    %3138 = vmatprep.subr.mxu0 0.0
    %3139 = vmatpush1.msra.mxu0 0.0
    %3140 = vmatprep.subr.mxu0 0.0
    %3141 = vmatpush1.msra.mxu0 0.0
    %3142 = vmatprep.subr.mxu0 0.0
    %3143 = vmatpush1.msra.mxu0 0.0
    %3144 = vmatprep.subr.mxu0 0.0
    %3145 = vmatpush1.msra.mxu0 0.0
    %3146 = vmatprep.subr.mxu0 0.0
    %3147 = vmatpush1.msra.mxu0 0.0
    %3148 = vmatprep.subr.mxu0 0.0
    %3149 = vmatpush1.msra.mxu0 0.0
    %3150 = vmatprep.subr.mxu0 0.0
    %3151 = vmatpush1.msra.mxu0 %v3133
    %3152 = vmatprep.subr.mxu0 0.0
    %3153 = vmatpush1.msra.mxu0 %v3132
    %3154 = vmatprep.subr.mxu0 0.0
    %3155 = vmatpush1.msra.mxu0 %v3131
    %3156 = vmatprep.subr.mxu0 0.0
    %3157 = vmatpush1.msra.mxu0 %v3130
    %3158 = vmatprep.subr.mxu0 0.0
    %3159 = vmatpush1.msra.mxu0 %v3129
    %3160 = vmatprep.subr.mxu0 0.0
    %3161 = vmatpush1.msra.mxu0 %v3128
    %3162 = vmatprep.subr.mxu0 0.0
    %3163 = vmatpush1.msra.mxu0 %v3127
    %3164 = vmatprep.subr.mxu0 0.0
    %3165 = vmatpush1.msra.mxu0 %v3126
    %3166 = vmatprep.subr.mxu0 0.0
    %3167 = vmatpush2.msra.mxu0 0.0
    %3168 = vmatprep.subr.mxu0 0.0
    %3169 = vmatpush2.msra.mxu0 0.0
    %3170 = vmatprep.subr.mxu0 0.0
    %3171 = vmatpush2.msra.mxu0 0.0
    %3172 = vmatprep.subr.mxu0 0.0
    %3173 = vmatpush2.msra.mxu0 0.0
    %3174 = vmatprep.subr.mxu0 0.0
    %3175 = vmatpush2.msra.mxu0 0.0
    %3176 = vmatprep.subr.mxu0 0.0
    %3177 = vmatpush2.msra.mxu0 0.0
    %3178 = vmatprep.subr.mxu0 0.0
    %3179 = vmatpush2.msra.mxu0 0.0
    %3180 = vmatprep.subr.mxu0 0.0
    %3181 = vmatpush2.msra.mxu0 0.0
    %3182 = vmatprep.subr.mxu0 0.0
    %3183 = vmatpush2.msra.mxu0 0.0
    %3184 = vmatprep.subr.mxu0 0.0
    %3185 = vmatpush2.msra.mxu0 0.0
    %3186 = vmatprep.subr.mxu0 0.0
    %3187 = vmatpush2.msra.mxu0 0.0
    %3188 = vmatprep.subr.mxu0 0.0
    %3189 = vmatpush2.msra.mxu0 0.0
    %3190 = vmatprep.subr.mxu0 0.0
    %3191 = vmatpush2.msra.mxu0 0.0
    %3192 = vmatprep.subr.mxu0 0.0
    %3193 = vmatpush2.msra.mxu0 0.0
    %3194 = vmatprep.subr.mxu0 0.0
    %3195 = vmatpush2.msra.mxu0 0.0
    %3196 = vmatprep.subr.mxu0 0.0
    %3197 = vmatpush2.msra.mxu0 0.0
    %3198 = vmatprep.mubr.f32.mxu0 0.0
    %3199 = vmatmul.mubr.f32.gmra.mxu0 %v1531
    %v3200 = vpop.f32.mrf.mxu0
    %v3201 = vadd.f32 %v1493, %v3200
    %v3202 = vpop.f32.mrf.mxu0
    %3203 = vmatprep.mubr.f32.mxu0 0.0
    %3204 = vmatmul.mubr.f32.gmra.mxu0 %v1534
    %v3205 = vpop.f32.mrf.mxu0
    %v3206 = vadd.f32 %v1498, %v3205
    %v3207 = vpop.f32.mrf.mxu0
    %3208 = vmatprep.mubr.f32.mxu0 0.0
    %3209 = vmatmul.mubr.f32.gmra.mxu0 %v1537
    %v3210 = vpop.f32.mrf.mxu0
    %v3211 = vadd.f32 %v1503, %v3210
    %v3212 = vpop.f32.mrf.mxu0
    %3213 = vmatprep.mubr.f32.mxu0 0.0
    %3214 = vmatmul.mubr.f32.gmra.mxu0 %v1540
    %v3215 = vpop.f32.mrf.mxu0
    %v3216 = vadd.f32 %v1508, %v3215
    %v3217 = vpop.f32.mrf.mxu0
    %3218 = vmatprep.mubr.f32.mxu0 0.0
    %3219 = vmatmul.mubr.f32.gmra.mxu0 %v1543
    %v3220 = vpop.f32.mrf.mxu0
    %v3221 = vadd.f32 %v1513, %v3220
    %v3222 = vpop.f32.mrf.mxu0
    %3223 = vmatprep.mubr.f32.mxu0 0.0
    %3224 = vmatmul.mubr.f32.gmra.mxu0 %v1546
    %v3225 = vpop.f32.mrf.mxu0
    %v3226 = vadd.f32 %v1518, %v3225
    %v3227 = vpop.f32.mrf.mxu0
    %3228 = vmatprep.mubr.f32.mxu0 0.0
    %3229 = vmatmul.mubr.f32.gmra.mxu0 %v1549
    %v3230 = vpop.f32.mrf.mxu0
    %v3231 = vadd.f32 %v1523, %v3230
    %v3232 = vpop.f32.mrf.mxu0
    %3233 = vmatprep.mubr.f32.mxu0 0.0
    %3234 = vmatmul.mubr.f32.gmra.mxu0 %v1552
    %v3235 = vpop.f32.mrf.mxu0
    %v3236 = vadd.f32 %v1528, %v3235
    %v3237 = vpop.f32.mrf.mxu0
    %3238 = vdwg.mxu0
    %v3239 = vmax.f32 %v3201, 0.0
    %v3240 = vmax.f32 %v3206, 0.0
    %v3241 = vmax.f32 %v3211, 0.0
    %v3242 = vmax.f32 %v3216, 0.0
    %v3243 = vmax.f32 %v3221, 0.0
    %v3244 = vmax.f32 %v3226, 0.0
    %v3245 = vmax.f32 %v3231, 0.0
    %v3246 = vmax.f32 %v3236, 0.0
    %3247 = vmatprep.subr.mxu0 0.0
    %3248 = vmatpush1.msra.mxu0 0.0
    %3249 = vmatprep.subr.mxu0 0.0
    %3250 = vmatpush1.msra.mxu0 0.0
    %3251 = vmatprep.subr.mxu0 0.0
    %3252 = vmatpush1.msra.mxu0 0.0
    %3253 = vmatprep.subr.mxu0 0.0
    %3254 = vmatpush1.msra.mxu0 0.0
    %3255 = vmatprep.subr.mxu0 0.0
    %3256 = vmatpush1.msra.mxu0 0.0
    %3257 = vmatprep.subr.mxu0 0.0
    %3258 = vmatpush1.msra.mxu0 0.0
    %3259 = vmatprep.subr.mxu0 0.0
    %3260 = vmatpush1.msra.mxu0 0.0
    %3261 = vmatprep.subr.mxu0 0.0
    %3262 = vmatpush1.msra.mxu0 0.0
    %3263 = vmatprep.subr.mxu0 0.0
    %3264 = vmatpush1.msra.mxu0 %v3246
    %3265 = vmatprep.subr.mxu0 0.0
    %3266 = vmatpush1.msra.mxu0 %v3245
    %3267 = vmatprep.subr.mxu0 0.0
    %3268 = vmatpush1.msra.mxu0 %v3244
    %3269 = vmatprep.subr.mxu0 0.0
    %3270 = vmatpush1.msra.mxu0 %v3243
    %3271 = vmatprep.subr.mxu0 0.0
    %3272 = vmatpush1.msra.mxu0 %v3242
    %3273 = vmatprep.subr.mxu0 0.0
    %3274 = vmatpush1.msra.mxu0 %v3241
    %3275 = vmatprep.subr.mxu0 0.0
    %3276 = vmatpush1.msra.mxu0 %v3240
    %3277 = vmatprep.subr.mxu0 0.0
    %3278 = vmatpush1.msra.mxu0 %v3239
    %3279 = vmatprep.subr.mxu0 0.0
    %3280 = vmatpush2.msra.mxu0 0.0
    %3281 = vmatprep.subr.mxu0 0.0
    %3282 = vmatpush2.msra.mxu0 0.0
    %3283 = vmatprep.subr.mxu0 0.0
    %3284 = vmatpush2.msra.mxu0 0.0
    %3285 = vmatprep.subr.mxu0 0.0
    %3286 = vmatpush2.msra.mxu0 0.0
    %3287 = vmatprep.subr.mxu0 0.0
    %3288 = vmatpush2.msra.mxu0 0.0
    %3289 = vmatprep.subr.mxu0 0.0
    %3290 = vmatpush2.msra.mxu0 0.0
    %3291 = vmatprep.subr.mxu0 0.0
    %3292 = vmatpush2.msra.mxu0 0.0
    %3293 = vmatprep.subr.mxu0 0.0
    %3294 = vmatpush2.msra.mxu0 0.0
    %3295 = vmatprep.subr.mxu0 0.0
    %3296 = vmatpush2.msra.mxu0 0.0
    %3297 = vmatprep.subr.mxu0 0.0
    %3298 = vmatpush2.msra.mxu0 0.0
    %3299 = vmatprep.subr.mxu0 0.0
    %3300 = vmatpush2.msra.mxu0 0.0
    %3301 = vmatprep.subr.mxu0 0.0
    %3302 = vmatpush2.msra.mxu0 0.0
    %3303 = vmatprep.subr.mxu0 0.0
    %3304 = vmatpush2.msra.mxu0 0.0
    %3305 = vmatprep.subr.mxu0 0.0
    %3306 = vmatpush2.msra.mxu0 0.0
    %3307 = vmatprep.subr.mxu0 0.0
    %3308 = vmatpush2.msra.mxu0 0.0
    %3309 = vmatprep.subr.mxu0 0.0
    %3310 = vmatpush2.msra.mxu0 0.0
    %3311 = vmatprep.mubr.f32.mxu0 0.0
    %3312 = vmatmul.mubr.f32.gmra.mxu0 %v1726
    %v3313 = vpop.f32.mrf.mxu0
    %v3314 = vadd.f32 %v1688, %v3313
    %v3315 = vpop.f32.mrf.mxu0
    %3316 = vmatprep.mubr.f32.mxu0 0.0
    %3317 = vmatmul.mubr.f32.gmra.mxu0 %v1729
    %v3318 = vpop.f32.mrf.mxu0
    %v3319 = vadd.f32 %v1693, %v3318
    %v3320 = vpop.f32.mrf.mxu0
    %3321 = vmatprep.mubr.f32.mxu0 0.0
    %3322 = vmatmul.mubr.f32.gmra.mxu0 %v1732
    %v3323 = vpop.f32.mrf.mxu0
    %v3324 = vadd.f32 %v1698, %v3323
    %v3325 = vpop.f32.mrf.mxu0
    %3326 = vmatprep.mubr.f32.mxu0 0.0
    %3327 = vmatmul.mubr.f32.gmra.mxu0 %v1735
    %v3328 = vpop.f32.mrf.mxu0
    %v3329 = vadd.f32 %v1703, %v3328
    %v3330 = vpop.f32.mrf.mxu0
    %3331 = vmatprep.mubr.f32.mxu0 0.0
    %3332 = vmatmul.mubr.f32.gmra.mxu0 %v1738
    %v3333 = vpop.f32.mrf.mxu0
    %v3334 = vadd.f32 %v1708, %v3333
    %v3335 = vpop.f32.mrf.mxu0
    %3336 = vmatprep.mubr.f32.mxu0 0.0
    %3337 = vmatmul.mubr.f32.gmra.mxu0 %v1741
    %v3338 = vpop.f32.mrf.mxu0
    %v3339 = vadd.f32 %v1713, %v3338
    %v3340 = vpop.f32.mrf.mxu0
    %3341 = vmatprep.mubr.f32.mxu0 0.0
    %3342 = vmatmul.mubr.f32.gmra.mxu0 %v1744
    %v3343 = vpop.f32.mrf.mxu0
    %v3344 = vadd.f32 %v1718, %v3343
    %v3345 = vpop.f32.mrf.mxu0
    %3346 = vmatprep.mubr.f32.mxu0 0.0
    %3347 = vmatmul.mubr.f32.gmra.mxu0 %v1747
    %v3348 = vpop.f32.mrf.mxu0
    %v3349 = vadd.f32 %v1723, %v3348
    %v3350 = vpop.f32.mrf.mxu0
    %3351 = vdwg.mxu0
    %v3352 = vmax.f32 %v3314, 0.0
    %v3353 = vmax.f32 %v3319, 0.0
    %v3354 = vmax.f32 %v3324, 0.0
    %v3355 = vmax.f32 %v3329, 0.0
    %v3356 = vmax.f32 %v3334, 0.0
    %v3357 = vmax.f32 %v3339, 0.0
    %v3358 = vmax.f32 %v3344, 0.0
    %v3359 = vmax.f32 %v3349, 0.0
    %3360 = vmatprep.subr.mxu0 0.0
    %3361 = vmatpush1.msra.mxu0 0.0
    %3362 = vmatprep.subr.mxu0 0.0
    %3363 = vmatpush1.msra.mxu0 0.0
    %3364 = vmatprep.subr.mxu0 0.0
    %3365 = vmatpush1.msra.mxu0 0.0
    %3366 = vmatprep.subr.mxu0 0.0
    %3367 = vmatpush1.msra.mxu0 0.0
    %3368 = vmatprep.subr.mxu0 0.0
    %3369 = vmatpush1.msra.mxu0 0.0
    %3370 = vmatprep.subr.mxu0 0.0
    %3371 = vmatpush1.msra.mxu0 0.0
    %3372 = vmatprep.subr.mxu0 0.0
    %3373 = vmatpush1.msra.mxu0 0.0
    %3374 = vmatprep.subr.mxu0 0.0
    %3375 = vmatpush1.msra.mxu0 0.0
    %3376 = vmatprep.subr.mxu0 0.0
    %3377 = vmatpush1.msra.mxu0 %v3359
    %3378 = vmatprep.subr.mxu0 0.0
    %3379 = vmatpush1.msra.mxu0 %v3358
    %3380 = vmatprep.subr.mxu0 0.0
    %3381 = vmatpush1.msra.mxu0 %v3357
    %3382 = vmatprep.subr.mxu0 0.0
    %3383 = vmatpush1.msra.mxu0 %v3356
    %3384 = vmatprep.subr.mxu0 0.0
    %3385 = vmatpush1.msra.mxu0 %v3355
    %3386 = vmatprep.subr.mxu0 0.0
    %3387 = vmatpush1.msra.mxu0 %v3354
    %3388 = vmatprep.subr.mxu0 0.0
    %3389 = vmatpush1.msra.mxu0 %v3353
    %3390 = vmatprep.subr.mxu0 0.0
    %3391 = vmatpush1.msra.mxu0 %v3352
    %3392 = vmatprep.subr.mxu0 0.0
    %3393 = vmatpush2.msra.mxu0 0.0
    %3394 = vmatprep.subr.mxu0 0.0
    %3395 = vmatpush2.msra.mxu0 0.0
    %3396 = vmatprep.subr.mxu0 0.0
    %3397 = vmatpush2.msra.mxu0 0.0
    %3398 = vmatprep.subr.mxu0 0.0
    %3399 = vmatpush2.msra.mxu0 0.0
    %3400 = vmatprep.subr.mxu0 0.0
    %3401 = vmatpush2.msra.mxu0 0.0
    %3402 = vmatprep.subr.mxu0 0.0
    %3403 = vmatpush2.msra.mxu0 0.0
    %3404 = vmatprep.subr.mxu0 0.0
    %3405 = vmatpush2.msra.mxu0 0.0
    %3406 = vmatprep.subr.mxu0 0.0
    %3407 = vmatpush2.msra.mxu0 0.0
    %3408 = vmatprep.subr.mxu0 0.0
    %3409 = vmatpush2.msra.mxu0 0.0
    %3410 = vmatprep.subr.mxu0 0.0
    %3411 = vmatpush2.msra.mxu0 0.0
    %3412 = vmatprep.subr.mxu0 0.0
    %3413 = vmatpush2.msra.mxu0 0.0
    %3414 = vmatprep.subr.mxu0 0.0
    %3415 = vmatpush2.msra.mxu0 0.0
    %3416 = vmatprep.subr.mxu0 0.0
    %3417 = vmatpush2.msra.mxu0 0.0
    %3418 = vmatprep.subr.mxu0 0.0
    %3419 = vmatpush2.msra.mxu0 0.0
    %3420 = vmatprep.subr.mxu0 0.0
    %3421 = vmatpush2.msra.mxu0 0.0
    %3422 = vmatprep.subr.mxu0 0.0
    %3423 = vmatpush2.msra.mxu0 0.0
    %3424 = vmatprep.mubr.f32.mxu0 0.0
    %3425 = vmatmul.mubr.f32.gmra.mxu0 %v1868
    %v3426 = vpop.f32.mrf.mxu0
    %v3427 = vadd.f32 %v1865, %v3426
    %v3428 = vpop.f32.mrf.mxu0
    %3429 = vdwg.mxu0
    %3430 = vst [vmem:[#allocation2] sm:$0xff] %v1937
    %3431 = vst [vmem:[#allocation2 + $0x8] sm:$0xff] %v3427
    // Predicated region
    $region30: #{tpu_custom_call.1} parent=1 // pred_check
      _
    $region31: #{tpu_custom_call.1} parent=1 // pred_check_branch
      %3433 = sbr.rel (0) target = $region33
    $region32: #{tpu_custom_call.1} parent=1 // pred_region
      %s3435 = ssub.s32 256, 256
      %3436 = vsyncadd [#allocation3], %s3435
      %s3438 = sshll.u32 [#allocation2], 4
      %s3439 = int_to_ptr.vmem [resolvable:$true] %s3438
      %3441 = dma.vmem_to_hbm [thread:$0]  %s3439, 256, %s7, [#allocation3]
    $region33: #{tpu_custom_call.1} parent=1 // pred_fallthru
      _
    // Predicated region
    $region34: #{tpu_custom_call.1} parent=1 // pred_check
      _
    $region35: #{tpu_custom_call.1} parent=1 // pred_check_branch
      %3443 = sbr.rel (0) target = $region37
    $region36: #{tpu_custom_call.1} parent=1 // pred_region
      %3444 = dma.done [#allocation3], 256
    $region37: #{tpu_custom_call.1} parent=1 // pred_fallthru
      _
    %3445 = vsyncpa [#allocation3], 1

</llo_original>
